<compile_context>
chip_gen: v6e
topology: v6e:2x2x1
jax: 0.10.0
libtpu: 0.0.40
codegen_flags: <defaults>
</compile_context>

<pallas_src>
import math

import jax
import jax.numpy as jnp
from jax.experimental import pallas as pl
from jax.experimental.pallas import tpu as pltpu

LANE = 128


def _round_up(x, m=LANE):
    return (x + m - 1) // m * m


def _packed_layout(segs):
    """segs: [(name, width)] -> ({name: (offset, width)}, total_width).
    Every segment starts at a 128-lane-aligned offset (zero padding between)."""
    off, cur = {}, 0
    for name, width in segs:
        off[name] = (cur, width)
        cur += _round_up(width)
    return off, cur


def _lrelu(x):
    # torch.nn.LeakyReLU default negative_slope = 0.01
    return jnp.where(x >= 0, x, 0.01 * x)


def _layernorm(x, w, b, eps=1e-5):
    mu = jnp.mean(x, axis=-1, keepdims=True)
    var = jnp.mean((x - mu) ** 2, axis=-1, keepdims=True)
    return (x - mu) * jax.lax.rsqrt(var + eps) * w + b


def _make_layouts(input_A, input_B, emb):
    qk_pad = _round_up(emb)
    qkv_off, qkv_total = _packed_layout([("q", emb), ("k", emb), ("v", emb)])
    wt_off, wt_total = _packed_layout(
        [("qkv", qkv_total), ("attn_out", emb), ("ff1", 256), ("dec4", 300)])
    w562_off, w562_total = _packed_layout([("dec5", 500), ("dec62", input_B)])
    dec5_pad = _round_up(500)          # 512: padded width of the layer5 segment
    o1w = _round_up(input_A)           # padded width of the out1 head
    o2w = _round_up(input_B)           # padded width of the out2 head
    bias_off, bias_total = _packed_layout([
        ("enc1", 1024), ("enc2", 512), ("enc3", 256), ("enc4", emb),
        ("qkv", qkv_total), ("attn_out", emb), ("ff1", 256), ("ff2", emb),
        ("ln1_w", emb), ("ln1_b", emb), ("ln2_w", emb), ("ln2_b", emb),
        ("dec4", 300), ("dec5_62", w562_total), ("dec61", input_A),
    ])
    return dict(qkv=(qkv_off, qkv_total), wt=(wt_off, wt_total),
                w562=(w562_off, w562_total), bias=(bias_off, bias_total),
                qk_pad=qk_pad, dec5_pad=dec5_pad, o1w=o1w, o2w=o2w,
                out_total=o1w + o2w)


def _make_kernel(input_A, input_B, emb, layouts):
    f32, bf16 = jnp.float32, jnp.bfloat16
    qkv_off, _ = layouts["qkv"]
    wt_off, _ = layouts["wt"]
    bias_off, _ = layouts["bias"]
    qk_pad = layouts["qk_pad"]
    dec5_pad = layouts["dec5_pad"]
    o1w = layouts["o1w"]
    o2w = layouts["o2w"]

    def kernel(x_ref, we1_ref, we2_ref, we3_ref, we4_ref, wt_ref, wl2_ref,
               w562_ref, w61_ref, bias_ref, out_ref):

        def b(name, width=None):
            off, w = bias_off[name]
            if width is not None:
                w = width              # read the zero pad up to the next segment
            return bias_ref[:, off:off + w]              # (1, w) f32

        def wt(name):
            off, width = wt_off[name]
            return wt_ref[:, off:off + width]            # (emb, width) bf16

        def mm(x, w):
            # bf16 x bf16 on the MXU, f32 accumulation.
            return jnp.dot(x.astype(bf16), w, preferred_element_type=f32)

        x = x_ref[...]                                   # (N, A+B) f32

        # ---- encoder1 & encoder2, fused via block-diagonal weights ----
        h = _lrelu(mm(x, we1_ref[...]) + b("enc1"))      # (N, 1024) = [e1 | e2]
        h = _lrelu(mm(h, we2_ref[...]) + b("enc2"))      # (N, 512)
        h = _lrelu(mm(h, we3_ref[...]) + b("enc3"))      # (N, 256)
        z = mm(h, we4_ref[...]) + b("enc4")              # (N, emb) = cat(h1, h2)

        # ---- TransformerEncoderLayer: nhead=1, post-norm, relu FF ----
        # 1/sqrt(emb) score scale is folded into the q weight/bias at pack time.
        qkv = mm(z, wt("qkv")) + b("qkv")                # (N, 3 * qk_pad)
        qo = qkv_off["q"][0]
        ko = qkv_off["k"][0]
        vo = qkv_off["v"][0]
        # Full 128-lane aligned q/k slices: pad columns are zero in weight and
        # bias, so the q.k contraction is numerically identical.
        q = qkv[:, qo:qo + qk_pad].astype(bf16)          # (N, qk_pad)
        k = qkv[:, ko:ko + qk_pad].astype(bf16)          # (N, qk_pad)
        # v / attn_out kept at true emb width (padding them would force a
        # separate 128-row attn_out slab and a slice back to emb anyway).
        v = qkv[:, vo:vo + emb].astype(bf16)             # (N, emb)
        scores = jax.lax.dot_general(q, k, (((1,), (1,)), ((), ())),
                                     preferred_element_type=f32)   # (N, N)
        m = jnp.max(scores, axis=-1, keepdims=True)
        p = jnp.exp(scores - m)
        attn = p * pl.reciprocal(jnp.sum(p, axis=-1, keepdims=True), approx=True)
        sa = jnp.dot(attn.astype(bf16), v, preferred_element_type=f32)
        sa = mm(sa, wt("attn_out")) + b("attn_out")
        # TODO(synk): TransformerEncoderLayer dropouts (p=0.1) applied as eval-mode identity.
        # LayerNorm stays on the true emb-wide view (do NOT pad this dim).
        y = _layernorm(z + sa, b("ln1_w"), b("ln1_b"))
        ff = jnp.maximum(mm(y, wt("ff1")) + b("ff1"), 0.0)
        ff = mm(ff, wl2_ref[...]) + b("ff2")
        y = _layernorm(y + ff, b("ln2_w"), b("ln2_b"))

        # ---- decoder ----
        hdec = jnp.maximum(mm(y, wt("dec4")) + b("dec4"), 0.0)
        # TODO(synk): F.dropout(p=0.5, training=True) is stochastic; applied as identity.
        t = mm(hdec, w562_ref[...]) + b("dec5_62")       # (N, 640) = [l5|0 | l62|0]
        # layer5 path consumed as the full 512-wide padded segment (pad cols are
        # zero; w61 has zero pad rows), layer6_2 path as the full 128-wide segment.
        o1 = jnp.maximum(t[:, 0:dec5_pad], 0.0)          # (N, 512)
        out1_pad = mm(o1, w61_ref[...]) + b("dec61", o1w)  # (N, o1w)
        out2_pad = t[:, dec5_pad:dec5_pad + o2w]           # (N, o2w)

        # Two aligned, full-128-lane, unmasked stores cover the whole out_ref.
        out_ref[:, 0:o1w] = out1_pad
        out_ref[:, o1w:o1w + o2w] = out2_pad

    return kernel


def make_network_forward(input_A, input_B, emb):
    layouts = _make_layouts(input_A, input_B, emb)
    kernel = _make_kernel(input_A, input_B, emb, layouts)
    _, qkv_total = layouts["qkv"]
    _, w562_total = layouts["w562"]
    qk_pad = layouts["qk_pad"]
    dec5_pad = layouts["dec5_pad"]
    o1w = layouts["o1w"]
    out_total = layouts["out_total"]
    vmem = pl.BlockSpec(memory_space=pltpu.MemorySpace.VMEM)
    operand_names = ["we1", "we2", "we3", "we4", "wt", "wl2", "w562", "w61", "bias"]

    @jax.jit
    def forward(x1, x2, packed):
        n = x1.shape[0]
        # Wrapper-side layout plumbing (outside the kernel): concat the two views.
        x = jnp.concatenate([x1.astype(jnp.float32), x2.astype(jnp.float32)], axis=1)
        operands = [x] + [packed[name] for name in operand_names]

        # Advisory cost estimate so XLA can overlap this small custom call.
        per_row = [(input_A + input_B, 1024), (1024, 512), (512, 256), (256, emb),
                   (emb, qkv_total), (emb, emb), (emb, 256), (256, emb),
                   (emb, 300), (300, w562_total), (dec5_pad, o1w)]
        flops = 2 * n * sum(ki * mo for ki, mo in per_row) + 2 * n * n * (qk_pad + emb)
        bytes_accessed = sum(int(a.size) * a.dtype.itemsize for a in operands)
        bytes_accessed += n * out_total * 4
        cost = pl.CostEstimate(flops=int(flops), transcendentals=int(n * n + 4 * n),
                               bytes_accessed=int(bytes_accessed))

        out = pl.pallas_call(
            kernel,
            out_shape=jax.ShapeDtypeStruct((n, out_total), jnp.float32),
            in_specs=[vmem] * len(operands),
            out_specs=vmem,
            cost_estimate=cost,
        )(*operands)
        return (out[:, 0:input_A], out[:, o1w:o1w + input_B])

    return forward


def init_params(key, input_A, input_B, emb):
    """PyTorch nn.Linear-style init (U(+-1/sqrt(fan_in))). Weights are (in, out)."""
    keys = iter(jax.random.split(key, 64))

    def linear(fan_in, fan_out):
        kw, kb = next(keys), next(keys)
        lim = 1.0 / math.sqrt(fan_in)
        w = jax.random.uniform(kw, (fan_in, fan_out), jnp.float32, -lim, lim)
        bb = jax.random.uniform(kb, (fan_out,), jnp.float32, -lim, lim)
        return w, bb

    half = emb // 2
    p = {}
    p["e1"] = [linear(fi, fo) for fi, fo in
               [(input_A, 512), (512, 256), (256, 128), (128, half)]]
    p["e2"] = [linear(fi, fo) for fi, fo in
               [(input_B, 512), (512, 256), (256, 128), (128, half)]]
    p["q"], p["k"], p["v"], p["o"] = (linear(emb, emb) for _ in range(4))
    p["ff1"] = linear(emb, 256)
    p["ff2"] = linear(256, emb)
    p["ln1"] = (jnp.ones((emb,), jnp.float32), jnp.zeros((emb,), jnp.float32))
    p["ln2"] = (jnp.ones((emb,), jnp.float32), jnp.zeros((emb,), jnp.float32))
    p["l4"] = linear(emb, 300)
    p["l5"] = linear(300, 500)
    p["l61"] = linear(500, input_A)
    p["l62"] = linear(300, input_B)
    return p


def pack_params(p, input_A, input_B, emb):
    """Pack PyTorch-layout params into the kernel's 9 bf16 slabs + 1 f32 slab."""
    bf16 = jnp.bfloat16
    layouts = _make_layouts(input_A, input_B, emb)
    qkv_off, qkv_total = layouts["qkv"]
    wt_off, wt_total = layouts["wt"]
    w562_off, w562_total = layouts["w562"]
    bias_off, bias_total = layouts["bias"]
    dec5_pad = layouts["dec5_pad"]
    o1w = layouts["o1w"]

    def blockdiag(wa, wb):
        ra, ca = wa.shape
        rb, cb = wb.shape
        out = jnp.zeros((ra + rb, ca + cb), jnp.float32)
        return out.at[:ra, :ca].set(wa).at[ra:, ca:].set(wb)

    def place_cols(total, pieces):
        rows = pieces[0][1].shape[0]
        out = jnp.zeros((rows, total), jnp.float32)
        for off, arr in pieces:
            out = out.at[:, off:off + arr.shape[1]].set(arr)
        return out

    def place_vec(total, pieces):
        out = jnp.zeros((total,), jnp.float32)
        for off, arr in pieces:
            out = out.at[off:off + arr.shape[0]].set(arr)
        return out

    e1w = [w for w, _ in p["e1"]]
    e1b = [bb for _, bb in p["e1"]]
    e2w = [w for w, _ in p["e2"]]
    e2b = [bb for _, bb in p["e2"]]

    scale = 1.0 / math.sqrt(emb)   # fold attention 1/sqrt(E) into q offline

    packed = {
        "we1": blockdiag(e1w[0], e2w[0]).astype(bf16),   # (A+B, 1024)
        "we2": blockdiag(e1w[1], e2w[1]).astype(bf16),   # (1024, 512)
        "we3": blockdiag(e1w[2], e2w[2]).astype(bf16),   # (512, 256)
        "we4": blockdiag(e1w[3], e2w[3]).astype(bf16),   # (256, emb)
        "wl2": p["ff2"][0].astype(bf16),                 # (256, emb)
    }

    # layer6_1 weight zero-padded to a full lane-dense head: (512, round_up(A)).
    w61p = jnp.zeros((dec5_pad, o1w), jnp.float32)
    w61p = w61p.at[:500, :input_A].set(p["l61"][0])
    packed["w61"] = w61p.astype(bf16)

    wqkv = place_cols(qkv_total, [(qkv_off["q"][0], p["q"][0] * scale),
                                  (qkv_off["k"][0], p["k"][0]),
                                  (qkv_off["v"][0], p["v"][0])])
    packed["wt"] = place_cols(
        wt_total, [(wt_off["qkv"][0], wqkv),
                   (wt_off["attn_out"][0], p["o"][0]),
                   (wt_off["ff1"][0], p["ff1"][0]),
                   (wt_off["dec4"][0], p["l4"][0])]).astype(bf16)

    packed["w562"] = place_cols(
        w562_total, [(w562_off["dec5"][0], p["l5"][0]),
                     (w562_off["dec62"][0], p["l62"][0])]).astype(bf16)

    bqkv = place_vec(qkv_total, [(qkv_off["q"][0], p["q"][1] * scale),
                                 (qkv_off["k"][0], p["k"][1]),
                                 (qkv_off["v"][0], p["v"][1])])
    b562 = place_vec(w562_total, [(w562_off["dec5"][0], p["l5"][1]),
                                  (w562_off["dec62"][0], p["l62"][1])])
    bias_pieces = [
        ("enc1", jnp.concatenate([e1b[0], e2b[0]])),
        ("enc2", jnp.concatenate([e1b[1], e2b[1]])),
        ("enc3", jnp.concatenate([e1b[2], e2b[2]])),
        ("enc4", jnp.concatenate([e1b[3], e2b[3]])),
        ("qkv", bqkv),
        ("attn_out", p["o"][1]),
        ("ff1", p["ff1"][1]),
        ("ff2", p["ff2"][1]),
        ("ln1_w", p["ln1"][0]), ("ln1_b", p["ln1"][1]),
        ("ln2_w", p["ln2"][0]), ("ln2_b", p["ln2"][1]),
        ("dec4", p["l4"][1]),
        ("dec5_62", b562),
        ("dec61", p["l61"][1]),      # pad lanes up to o1w stay zero
    ]
    packed["bias"] = place_vec(
        bias_total,
        [(bias_off[name][0], arr) for name, arr in bias_pieces],
    ).reshape(1, bias_total)
    return packed


if __name__ == "__main__":
    key = jax.random.PRNGKey(0)
    N, INPUT_A, INPUT_B, EMB = 64, 20, 24, 32
    kx1, kx2, kp = jax.random.split(key, 3)
    x1 = jax.random.normal(kx1, (N, INPUT_A), jnp.float32)
    x2 = jax.random.normal(kx2, (N, INPUT_B), jnp.float32)

    raw_params = init_params(kp, INPUT_A, INPUT_B, EMB)
    packed = pack_params(raw_params, INPUT_A, INPUT_B, EMB)
    forward = make_network_forward(INPUT_A, INPUT_B, EMB)

    out1, out2 = forward(x1, x2, packed)
    jax.block_until_ready((out1, out2))
    assert out1.shape == (N, INPUT_A) and out2.shape == (N, INPUT_B)
    assert out1.dtype == jnp.float32 and out2.dtype == jnp.float32
    assert bool(jnp.all(jnp.isfinite(out1))) and bool(jnp.all(jnp.isfinite(out2)))
    print("KERNEL_OK")
</pallas_src>

<mosaic_0001>
module attributes {stable_mosaic.version = 11 : i64} {
  func.func @kernel(%arg0: memref<64x44xf32, #tpu.memory_space<vmem>>, %arg1: memref<44x1024xbf16, #tpu.memory_space<vmem>>, %arg2: memref<1024x512xbf16, #tpu.memory_space<vmem>>, %arg3: memref<512x256xbf16, #tpu.memory_space<vmem>>, %arg4: memref<256x32xbf16, #tpu.memory_space<vmem>>, %arg5: memref<32x1152xbf16, #tpu.memory_space<vmem>>, %arg6: memref<256x32xbf16, #tpu.memory_space<vmem>>, %arg7: memref<300x640xbf16, #tpu.memory_space<vmem>>, %arg8: memref<512x128xbf16, #tpu.memory_space<vmem>>, %arg9: memref<1x4480xf32, #tpu.memory_space<vmem>>, %arg10: memref<64x256xf32, #tpu.memory_space<vmem>>) attributes {dimension_semantics = [], scalar_prefetch = 0 : i64, scratch_operands = 0 : i64, tpu.core_type = #tpu.core_type<tc>} {
    %c0 = arith.constant 0 : index
    %c0_0 = arith.constant 0 : index
    %0 = vector.load %arg0[%c0, %c0_0] : memref<64x44xf32, #tpu.memory_space<vmem>>, vector<64x44xf32>
    %c0_1 = arith.constant 0 : index
    %c0_2 = arith.constant 0 : index
    %1 = vector.load %arg1[%c0_1, %c0_2] : memref<44x1024xbf16, #tpu.memory_space<vmem>>, vector<44x1024xbf16>
    %2 = arith.truncf %0 : vector<64x44xf32> to vector<64x44xbf16>
    %cst = arith.constant dense<0.000000e+00> : vector<64x1024xf32>
    %3 = tpu.matmul %2, %1, %cst {dimension_numbers = #tpu.dot_dimension_numbers<[1], [0], [0], [1], [0, 0, 1, 1], [], []>} : vector<64x44xbf16>, vector<44x1024xbf16>, vector<64x1024xf32> -> vector<64x1024xf32>
    %c0_3 = arith.constant 0 : index
    %c0_4 = arith.constant 0 : index
    %4 = vector.load %arg9[%c0_3, %c0_4] : memref<1x4480xf32, #tpu.memory_space<vmem>>, vector<1x1024xf32>
    %5 = vector.broadcast %4 : vector<1x1024xf32> to vector<64x1024xf32>
    %6 = arith.addf %3, %5 : vector<64x1024xf32>
    %cst_5 = arith.constant 0.000000e+00 : f32
    %7 = vector.broadcast %cst_5 : f32 to vector<64x1024xf32>
    %8 = arith.cmpf oge, %6, %7 : vector<64x1024xf32>
    %cst_6 = arith.constant 0.00999999977 : f32
    %9 = vector.broadcast %cst_6 : f32 to vector<64x1024xf32>
    %10 = arith.mulf %9, %6 : vector<64x1024xf32>
    %11 = arith.select %8, %6, %10 : vector<64x1024xi1>, vector<64x1024xf32>
    %c0_7 = arith.constant 0 : index
    %c0_8 = arith.constant 0 : index
    %12 = vector.load %arg2[%c0_7, %c0_8] : memref<1024x512xbf16, #tpu.memory_space<vmem>>, vector<1024x512xbf16>
    %13 = arith.truncf %11 : vector<64x1024xf32> to vector<64x1024xbf16>
    %cst_9 = arith.constant dense<0.000000e+00> : vector<64x512xf32>
    %14 = tpu.matmul %13, %12, %cst_9 {dimension_numbers = #tpu.dot_dimension_numbers<[1], [0], [0], [1], [0, 0, 1, 1], [], []>} : vector<64x1024xbf16>, vector<1024x512xbf16>, vector<64x512xf32> -> vector<64x512xf32>
    %c0_10 = arith.constant 0 : index
    %c1024 = arith.constant 1024 : index
    %15 = vector.load %arg9[%c0_10, %c1024] : memref<1x4480xf32, #tpu.memory_space<vmem>>, vector<1x512xf32>
    %16 = vector.broadcast %15 : vector<1x512xf32> to vector<64x512xf32>
    %17 = arith.addf %14, %16 : vector<64x512xf32>
    %cst_11 = arith.constant 0.000000e+00 : f32
    %18 = vector.broadcast %cst_11 : f32 to vector<64x512xf32>
    %19 = arith.cmpf oge, %17, %18 : vector<64x512xf32>
    %cst_12 = arith.constant 0.00999999977 : f32
    %20 = vector.broadcast %cst_12 : f32 to vector<64x512xf32>
    %21 = arith.mulf %20, %17 : vector<64x512xf32>
    %22 = arith.select %19, %17, %21 : vector<64x512xi1>, vector<64x512xf32>
    %c0_13 = arith.constant 0 : index
    %c0_14 = arith.constant 0 : index
    %23 = vector.load %arg3[%c0_13, %c0_14] : memref<512x256xbf16, #tpu.memory_space<vmem>>, vector<512x256xbf16>
    %24 = arith.truncf %22 : vector<64x512xf32> to vector<64x512xbf16>
    %cst_15 = arith.constant dense<0.000000e+00> : vector<64x256xf32>
    %25 = tpu.matmul %24, %23, %cst_15 {dimension_numbers = #tpu.dot_dimension_numbers<[1], [0], [0], [1], [0, 0, 1, 1], [], []>} : vector<64x512xbf16>, vector<512x256xbf16>, vector<64x256xf32> -> vector<64x256xf32>
    %c0_16 = arith.constant 0 : index
    %c1536 = arith.constant 1536 : index
    %26 = vector.load %arg9[%c0_16, %c1536] : memref<1x4480xf32, #tpu.memory_space<vmem>>, vector<1x256xf32>
    %27 = vector.broadcast %26 : vector<1x256xf32> to vector<64x256xf32>
    %28 = arith.addf %25, %27 : vector<64x256xf32>
    %cst_17 = arith.constant 0.000000e+00 : f32
    %29 = vector.broadcast %cst_17 : f32 to vector<64x256xf32>
    %30 = arith.cmpf oge, %28, %29 : vector<64x256xf32>
    %cst_18 = arith.constant 0.00999999977 : f32
    %31 = vector.broadcast %cst_18 : f32 to vector<64x256xf32>
    %32 = arith.mulf %31, %28 : vector<64x256xf32>
    %33 = arith.select %30, %28, %32 : vector<64x256xi1>, vector<64x256xf32>
    %c0_19 = arith.constant 0 : index
    %c0_20 = arith.constant 0 : index
    %34 = vector.load %arg4[%c0_19, %c0_20] : memref<256x32xbf16, #tpu.memory_space<vmem>>, vector<256x32xbf16>
    %35 = arith.truncf %33 : vector<64x256xf32> to vector<64x256xbf16>
    %cst_21 = arith.constant dense<0.000000e+00> : vector<64x32xf32>
    %36 = tpu.matmul %35, %34, %cst_21 {dimension_numbers = #tpu.dot_dimension_numbers<[1], [0], [0], [1], [0, 0, 1, 1], [], []>} : vector<64x256xbf16>, vector<256x32xbf16>, vector<64x32xf32> -> vector<64x32xf32>
    %c0_22 = arith.constant 0 : index
    %c1792 = arith.constant 1792 : index
    %37 = vector.load %arg9[%c0_22, %c1792] : memref<1x4480xf32, #tpu.memory_space<vmem>>, vector<1x32xf32>
    %38 = vector.broadcast %37 : vector<1x32xf32> to vector<64x32xf32>
    %39 = arith.addf %36, %38 : vector<64x32xf32>
    %c0_23 = arith.constant 0 : index
    %c0_24 = arith.constant 0 : index
    %40 = vector.load %arg5[%c0_23, %c0_24] : memref<32x1152xbf16, #tpu.memory_space<vmem>>, vector<32x384xbf16>
    %41 = arith.truncf %39 : vector<64x32xf32> to vector<64x32xbf16>
    %cst_25 = arith.constant dense<0.000000e+00> : vector<64x384xf32>
    %42 = tpu.matmul %41, %40, %cst_25 {dimension_numbers = #tpu.dot_dimension_numbers<[1], [0], [0], [1], [0, 0, 1, 1], [], []>} : vector<64x32xbf16>, vector<32x384xbf16>, vector<64x384xf32> -> vector<64x384xf32>
    %c0_26 = arith.constant 0 : index
    %c1920 = arith.constant 1920 : index
    %43 = vector.load %arg9[%c0_26, %c1920] : memref<1x4480xf32, #tpu.memory_space<vmem>>, vector<1x384xf32>
    %44 = vector.broadcast %43 : vector<1x384xf32> to vector<64x384xf32>
    %45 = arith.addf %42, %44 : vector<64x384xf32>
    %46 = vector.extract_strided_slice %45 {offsets = [0, 0], sizes = [64, 128], strides = [1, 1]} : vector<64x384xf32> to vector<64x128xf32>
    %47 = arith.truncf %46 : vector<64x128xf32> to vector<64x128xbf16>
    %48 = vector.extract_strided_slice %45 {offsets = [0, 128], sizes = [64, 128], strides = [1, 1]} : vector<64x384xf32> to vector<64x128xf32>
    %49 = arith.truncf %48 : vector<64x128xf32> to vector<64x128xbf16>
    %50 = vector.extract_strided_slice %45 {offsets = [0, 256], sizes = [64, 32], strides = [1, 1]} : vector<64x384xf32> to vector<64x32xf32>
    %51 = arith.truncf %50 : vector<64x32xf32> to vector<64x32xbf16>
    %cst_27 = arith.constant dense<0.000000e+00> : vector<64x64xf32>
    %52 = tpu.matmul %47, %49, %cst_27 {dimension_numbers = #tpu.dot_dimension_numbers<[1], [1], [0], [0], [0, 0, 1, 0], [], []>} : vector<64x128xbf16>, vector<64x128xbf16>, vector<64x64xf32> -> vector<64x64xf32>
    %cst_28 = arith.constant dense<0xFF800000> : vector<64xf32>
    %53 = vector.multi_reduction <maximumf>, %52, %cst_28 [1] : vector<64x64xf32> to vector<64xf32>
    %54 = vector.shape_cast %53 : vector<64xf32> to vector<64x1xf32>
    %55 = vector.broadcast %54 : vector<64x1xf32> to vector<64x64xf32>
    %56 = arith.subf %52, %55 : vector<64x64xf32>
    %57 = math.exp %56 : vector<64x64xf32>
    %cst_29 = arith.constant dense<0.000000e+00> : vector<64xf32>
    %58 = vector.multi_reduction <add>, %57, %cst_29 [1] : vector<64x64xf32> to vector<64xf32>
    %59 = vector.shape_cast %58 : vector<64xf32> to vector<64x1xf32>
    %60 = tpu.reciprocal %59 {approx = true} : vector<64x1xf32> -> vector<64x1xf32>
    %61 = vector.broadcast %60 : vector<64x1xf32> to vector<64x64xf32>
    %62 = arith.mulf %57, %61 : vector<64x64xf32>
    %63 = arith.truncf %62 : vector<64x64xf32> to vector<64x64xbf16>
    %cst_30 = arith.constant dense<0.000000e+00> : vector<64x32xf32>
    %64 = tpu.matmul %63, %51, %cst_30 {dimension_numbers = #tpu.dot_dimension_numbers<[1], [0], [0], [1], [0, 0, 1, 1], [], []>} : vector<64x64xbf16>, vector<64x32xbf16>, vector<64x32xf32> -> vector<64x32xf32>
    %c0_31 = arith.constant 0 : index
    %c384 = arith.constant 384 : index
    %65 = vector.load %arg5[%c0_31, %c384] : memref<32x1152xbf16, #tpu.memory_space<vmem>>, vector<32x32xbf16>
    %66 = arith.truncf %64 : vector<64x32xf32> to vector<64x32xbf16>
    %cst_32 = arith.constant dense<0.000000e+00> : vector<64x32xf32>
    %67 = tpu.matmul %66, %65, %cst_32 {dimension_numbers = #tpu.dot_dimension_numbers<[1], [0], [0], [1], [0, 0, 1, 1], [], []>} : vector<64x32xbf16>, vector<32x32xbf16>, vector<64x32xf32> -> vector<64x32xf32>
    %c0_33 = arith.constant 0 : index
    %c2304 = arith.constant 2304 : index
    %68 = vector.load %arg9[%c0_33, %c2304] : memref<1x4480xf32, #tpu.memory_space<vmem>>, vector<1x32xf32>
    %69 = vector.broadcast %68 : vector<1x32xf32> to vector<64x32xf32>
    %70 = arith.addf %67, %69 : vector<64x32xf32>
    %71 = arith.addf %39, %70 : vector<64x32xf32>
    %c0_34 = arith.constant 0 : index
    %c2816 = arith.constant 2816 : index
    %72 = vector.load %arg9[%c0_34, %c2816] : memref<1x4480xf32, #tpu.memory_space<vmem>>, vector<1x32xf32>
    %c0_35 = arith.constant 0 : index
    %c2944 = arith.constant 2944 : index
    %73 = vector.load %arg9[%c0_35, %c2944] : memref<1x4480xf32, #tpu.memory_space<vmem>>, vector<1x32xf32>
    %cst_36 = arith.constant dense<0.000000e+00> : vector<64xf32>
    %74 = vector.multi_reduction <add>, %71, %cst_36 [1] : vector<64x32xf32> to vector<64xf32>
    %75 = vector.shape_cast %74 : vector<64xf32> to vector<64x1xf32>
    %cst_37 = arith.constant 3.200000e+01 : f32
    %76 = vector.broadcast %cst_37 : f32 to vector<64x1xf32>
    %77 = arith.divf %75, %76 : vector<64x1xf32>
    %78 = vector.broadcast %77 : vector<64x1xf32> to vector<64x32xf32>
    %79 = arith.subf %71, %78 : vector<64x32xf32>
    %80 = arith.mulf %79, %79 : vector<64x32xf32>
    %cst_38 = arith.constant dense<0.000000e+00> : vector<64xf32>
    %81 = vector.multi_reduction <add>, %80, %cst_38 [1] : vector<64x32xf32> to vector<64xf32>
    %82 = vector.shape_cast %81 : vector<64xf32> to vector<64x1xf32>
    %cst_39 = arith.constant 3.200000e+01 : f32
    %83 = vector.broadcast %cst_39 : f32 to vector<64x1xf32>
    %84 = arith.divf %82, %83 : vector<64x1xf32>
    %85 = vector.broadcast %77 : vector<64x1xf32> to vector<64x32xf32>
    %86 = arith.subf %71, %85 : vector<64x32xf32>
    %cst_40 = arith.constant 9.99999974E-6 : f32
    %87 = vector.broadcast %cst_40 : f32 to vector<64x1xf32>
    %88 = arith.addf %84, %87 : vector<64x1xf32>
    %89 = math.rsqrt %88 : vector<64x1xf32>
    %90 = vector.broadcast %89 : vector<64x1xf32> to vector<64x32xf32>
    %91 = arith.mulf %86, %90 : vector<64x32xf32>
    %92 = vector.broadcast %72 : vector<1x32xf32> to vector<64x32xf32>
    %93 = arith.mulf %91, %92 : vector<64x32xf32>
    %94 = vector.broadcast %73 : vector<1x32xf32> to vector<64x32xf32>
    %95 = arith.addf %93, %94 : vector<64x32xf32>
    %c0_41 = arith.constant 0 : index
    %c512 = arith.constant 512 : index
    %96 = vector.load %arg5[%c0_41, %c512] : memref<32x1152xbf16, #tpu.memory_space<vmem>>, vector<32x256xbf16>
    %97 = arith.truncf %95 : vector<64x32xf32> to vector<64x32xbf16>
    %cst_42 = arith.constant dense<0.000000e+00> : vector<64x256xf32>
    %98 = tpu.matmul %97, %96, %cst_42 {dimension_numbers = #tpu.dot_dimension_numbers<[1], [0], [0], [1], [0, 0, 1, 1], [], []>} : vector<64x32xbf16>, vector<32x256xbf16>, vector<64x256xf32> -> vector<64x256xf32>
    %c0_43 = arith.constant 0 : index
    %c2432 = arith.constant 2432 : index
    %99 = vector.load %arg9[%c0_43, %c2432] : memref<1x4480xf32, #tpu.memory_space<vmem>>, vector<1x256xf32>
    %100 = vector.broadcast %99 : vector<1x256xf32> to vector<64x256xf32>
    %101 = arith.addf %98, %100 : vector<64x256xf32>
    %cst_44 = arith.constant 0.000000e+00 : f32
    %102 = vector.broadcast %cst_44 : f32 to vector<64x256xf32>
    %103 = arith.maximumf %101, %102 : vector<64x256xf32>
    %c0_45 = arith.constant 0 : index
    %c0_46 = arith.constant 0 : index
    %104 = vector.load %arg6[%c0_45, %c0_46] : memref<256x32xbf16, #tpu.memory_space<vmem>>, vector<256x32xbf16>
    %105 = arith.truncf %103 : vector<64x256xf32> to vector<64x256xbf16>
    %cst_47 = arith.constant dense<0.000000e+00> : vector<64x32xf32>
    %106 = tpu.matmul %105, %104, %cst_47 {dimension_numbers = #tpu.dot_dimension_numbers<[1], [0], [0], [1], [0, 0, 1, 1], [], []>} : vector<64x256xbf16>, vector<256x32xbf16>, vector<64x32xf32> -> vector<64x32xf32>
    %c0_48 = arith.constant 0 : index
    %c2688 = arith.constant 2688 : index
    %107 = vector.load %arg9[%c0_48, %c2688] : memref<1x4480xf32, #tpu.memory_space<vmem>>, vector<1x32xf32>
    %108 = vector.broadcast %107 : vector<1x32xf32> to vector<64x32xf32>
    %109 = arith.addf %106, %108 : vector<64x32xf32>
    %110 = arith.addf %95, %109 : vector<64x32xf32>
    %c0_49 = arith.constant 0 : index
    %c3072 = arith.constant 3072 : index
    %111 = vector.load %arg9[%c0_49, %c3072] : memref<1x4480xf32, #tpu.memory_space<vmem>>, vector<1x32xf32>
    %c0_50 = arith.constant 0 : index
    %c3200 = arith.constant 3200 : index
    %112 = vector.load %arg9[%c0_50, %c3200] : memref<1x4480xf32, #tpu.memory_space<vmem>>, vector<1x32xf32>
    %cst_51 = arith.constant dense<0.000000e+00> : vector<64xf32>
    %113 = vector.multi_reduction <add>, %110, %cst_51 [1] : vector<64x32xf32> to vector<64xf32>
    %114 = vector.shape_cast %113 : vector<64xf32> to vector<64x1xf32>
    %cst_52 = arith.constant 3.200000e+01 : f32
    %115 = vector.broadcast %cst_52 : f32 to vector<64x1xf32>
    %116 = arith.divf %114, %115 : vector<64x1xf32>
    %117 = vector.broadcast %116 : vector<64x1xf32> to vector<64x32xf32>
    %118 = arith.subf %110, %117 : vector<64x32xf32>
    %119 = arith.mulf %118, %118 : vector<64x32xf32>
    %cst_53 = arith.constant dense<0.000000e+00> : vector<64xf32>
    %120 = vector.multi_reduction <add>, %119, %cst_53 [1] : vector<64x32xf32> to vector<64xf32>
    %121 = vector.shape_cast %120 : vector<64xf32> to vector<64x1xf32>
    %cst_54 = arith.constant 3.200000e+01 : f32
    %122 = vector.broadcast %cst_54 : f32 to vector<64x1xf32>
    %123 = arith.divf %121, %122 : vector<64x1xf32>
    %124 = vector.broadcast %116 : vector<64x1xf32> to vector<64x32xf32>
    %125 = arith.subf %110, %124 : vector<64x32xf32>
    %cst_55 = arith.constant 9.99999974E-6 : f32
    %126 = vector.broadcast %cst_55 : f32 to vector<64x1xf32>
    %127 = arith.addf %123, %126 : vector<64x1xf32>
    %128 = math.rsqrt %127 : vector<64x1xf32>
    %129 = vector.broadcast %128 : vector<64x1xf32> to vector<64x32xf32>
    %130 = arith.mulf %125, %129 : vector<64x32xf32>
    %131 = vector.broadcast %111 : vector<1x32xf32> to vector<64x32xf32>
    %132 = arith.mulf %130, %131 : vector<64x32xf32>
    %133 = vector.broadcast %112 : vector<1x32xf32> to vector<64x32xf32>
    %134 = arith.addf %132, %133 : vector<64x32xf32>
    %c0_56 = arith.constant 0 : index
    %c768 = arith.constant 768 : index
    %135 = vector.load %arg5[%c0_56, %c768] : memref<32x1152xbf16, #tpu.memory_space<vmem>>, vector<32x300xbf16>
    %136 = arith.truncf %134 : vector<64x32xf32> to vector<64x32xbf16>
    %cst_57 = arith.constant dense<0.000000e+00> : vector<64x300xf32>
    %137 = tpu.matmul %136, %135, %cst_57 {dimension_numbers = #tpu.dot_dimension_numbers<[1], [0], [0], [1], [0, 0, 1, 1], [], []>} : vector<64x32xbf16>, vector<32x300xbf16>, vector<64x300xf32> -> vector<64x300xf32>
    %c0_58 = arith.constant 0 : index
    %c3328 = arith.constant 3328 : index
    %138 = vector.load %arg9[%c0_58, %c3328] : memref<1x4480xf32, #tpu.memory_space<vmem>>, vector<1x300xf32>
    %139 = vector.broadcast %138 : vector<1x300xf32> to vector<64x300xf32>
    %140 = arith.addf %137, %139 : vector<64x300xf32>
    %cst_59 = arith.constant 0.000000e+00 : f32
    %141 = vector.broadcast %cst_59 : f32 to vector<64x300xf32>
    %142 = arith.maximumf %140, %141 : vector<64x300xf32>
    %c0_60 = arith.constant 0 : index
    %c0_61 = arith.constant 0 : index
    %143 = vector.load %arg7[%c0_60, %c0_61] : memref<300x640xbf16, #tpu.memory_space<vmem>>, vector<300x640xbf16>
    %144 = arith.truncf %142 : vector<64x300xf32> to vector<64x300xbf16>
    %cst_62 = arith.constant dense<0.000000e+00> : vector<64x640xf32>
    %145 = tpu.matmul %144, %143, %cst_62 {dimension_numbers = #tpu.dot_dimension_numbers<[1], [0], [0], [1], [0, 0, 1, 1], [], []>} : vector<64x300xbf16>, vector<300x640xbf16>, vector<64x640xf32> -> vector<64x640xf32>
    %c0_63 = arith.constant 0 : index
    %c3712 = arith.constant 3712 : index
    %146 = vector.load %arg9[%c0_63, %c3712] : memref<1x4480xf32, #tpu.memory_space<vmem>>, vector<1x640xf32>
    %147 = vector.broadcast %146 : vector<1x640xf32> to vector<64x640xf32>
    %148 = arith.addf %145, %147 : vector<64x640xf32>
    %149 = vector.extract_strided_slice %148 {offsets = [0, 0], sizes = [64, 512], strides = [1, 1]} : vector<64x640xf32> to vector<64x512xf32>
    %cst_64 = arith.constant 0.000000e+00 : f32
    %150 = vector.broadcast %cst_64 : f32 to vector<64x512xf32>
    %151 = arith.maximumf %149, %150 : vector<64x512xf32>
    %c0_65 = arith.constant 0 : index
    %c0_66 = arith.constant 0 : index
    %152 = vector.load %arg8[%c0_65, %c0_66] : memref<512x128xbf16, #tpu.memory_space<vmem>>, vector<512x128xbf16>
    %153 = arith.truncf %151 : vector<64x512xf32> to vector<64x512xbf16>
    %cst_67 = arith.constant dense<0.000000e+00> : vector<64x128xf32>
    %154 = tpu.matmul %153, %152, %cst_67 {dimension_numbers = #tpu.dot_dimension_numbers<[1], [0], [0], [1], [0, 0, 1, 1], [], []>} : vector<64x512xbf16>, vector<512x128xbf16>, vector<64x128xf32> -> vector<64x128xf32>
    %c0_68 = arith.constant 0 : index
    %c4352 = arith.constant 4352 : index
    %155 = vector.load %arg9[%c0_68, %c4352] : memref<1x4480xf32, #tpu.memory_space<vmem>>, vector<1x128xf32>
    %156 = vector.broadcast %155 : vector<1x128xf32> to vector<64x128xf32>
    %157 = arith.addf %154, %156 : vector<64x128xf32>
    %158 = vector.extract_strided_slice %148 {offsets = [0, 512], sizes = [64, 128], strides = [1, 1]} : vector<64x640xf32> to vector<64x128xf32>
    %c0_69 = arith.constant 0 : index
    %c0_70 = arith.constant 0 : index
    %159 = vector.load %arg10[%c0_69, %c0_70] : memref<64x256xf32, #tpu.memory_space<vmem>>, vector<64x128xf32>
    tpu.vector_store %arg10[%c0_69, %c0_70], %157 {strides = array<i32>} : memref<64x256xf32, #tpu.memory_space<vmem>>, vector<64x128xf32>,
    %c0_71 = arith.constant 0 : index
    %c128 = arith.constant 128 : index
    %160 = vector.load %arg10[%c0_71, %c128] : memref<64x256xf32, #tpu.memory_space<vmem>>, vector<64x128xf32>
    tpu.vector_store %arg10[%c0_71, %c128], %158 {strides = array<i32>} : memref<64x256xf32, #tpu.memory_space<vmem>>, vector<64x128xf32>,
    return
  }
}

</mosaic_0001>

<llo_original>
// kernel: forward.1
$region0: #{forward.1}
  #allocation0 [shape = 'u32[]', space=smem, size = 0x4, offset = 0x4, fixed_abs, tag = 'smem constant byte address 0x4 - core index']
  #allocation1 [shape = 'u32[144,128]{1,0:T(1,128)}', space=vmem, size = 0x12000, scoped, tag = 'internal scratch']
  %s0 = inlined_call_operand.vmem [shape: f32[64,44], index: 0, kind: input, shape index: {}]
  %s1 = inlined_call_operand.hbm [shape: bf16[44,1024], index: 1, kind: input, shape index: {}]
  %s2 = inlined_call_operand.hbm [shape: bf16[1024,512], index: 2, kind: input, shape index: {}]
  %s3 = inlined_call_operand.vmem [shape: bf16[512,256], index: 3, kind: input, shape index: {}]
  %s4 = inlined_call_operand.vmem [shape: bf16[256,32], index: 4, kind: input, shape index: {}]
  %s5 = inlined_call_operand.vmem [shape: bf16[32,1152], index: 5, kind: input, shape index: {}]
  %s6 = inlined_call_operand.vmem [shape: bf16[256,32], index: 6, kind: input, shape index: {}]
  %s7 = inlined_call_operand.hbm [shape: bf16[300,640], index: 7, kind: input, shape index: {}]
  %s8 = inlined_call_operand.hbm [shape: bf16[512,128], index: 8, kind: input, shape index: {}]
  %s9 = inlined_call_operand.vmem [shape: f32[1,4480], index: 9, kind: input, shape index: {}]
  %s10 = inlined_call_operand.vmem [shape: f32[64,256], index: 10, kind: output, shape index: {}]
  %s11 = sld [smem:[#allocation0]]
  $region66: #{forward.1} parent=0
    _
  %s13 = ssub.s32 1, %s11
  %s14 = scalar_select 0, %s13, %s11
  $region1: #{forward.1} parent=0
    #allocation2 [shape = 'u8[98304]{0}', space=vmem, size = 0x18000, scoped, tag = 'input window, operand 1, single buffered']
    #allocation3 [shape = 's32[1]{0}', space=sflag, size = 0x4, scoped, tag = 'scoped memory for forward.1']
    #allocation4 [shape = 'u8[1048576]{0}', space=vmem, size = 0x100000, scoped, tag = 'input window, operand 2, single buffered']
    #allocation5 [shape = 's32[1]{0}', space=sflag, size = 0x4, scoped, tag = 'scoped memory for forward.1']
    #allocation6 [shape = 'u8[389120]{0}', space=vmem, size = 0x5f000, scoped, tag = 'input window, operand 7, single buffered']
    #allocation7 [shape = 'u8[131072]{0}', space=vmem, size = 0x20000, scoped, tag = 'input window, operand 8, single buffered']
    #allocation8 [shape = 's32[1]{0}', space=sflag, size = 0x4, scoped, tag = 'scoped memory for forward.1']
    %15 = vsyncpa [#allocation3], 0
    %16 = vsyncpa [#allocation5], 0
    %17 = vsyncpa [#allocation8], 0
    // Predicated region
    $region2: #{forward.1} parent=1 // pred_check
      _
    $region3: #{forward.1} parent=1 // pred_check_branch
      %19 = sbr.rel (0) target = $region5
    $region4: #{forward.1} parent=1 // pred_region
      _
    $region5: #{forward.1} parent=1 // pred_fallthru
      _
    // Predicated region
    $region6: #{forward.1} parent=1 // pred_check
      _
    $region7: #{forward.1} parent=1 // pred_check_branch
      %21 = sbr.rel (0) target = $region9
    $region8: #{forward.1} parent=1 // pred_region
      %s23 = ssub.s32 3072, 3072
      %24 = vsyncadd [#allocation3], %s23
      %s25 = sshll.u32 [#allocation2], 4
      %s26 = int_to_ptr.vmem [resolvable:$true] %s25
      %31 = dma.hbm_to_vmem [thread:$0]  %s1, 3072, %s26, [#allocation3], 512, 512, 32
    $region9: #{forward.1} parent=1 // pred_fallthru
      _
    // Predicated region
    $region10: #{forward.1} parent=1 // pred_check
      _
    $region11: #{forward.1} parent=1 // pred_check_branch
      %33 = sbr.rel (0) target = $region13
    $region12: #{forward.1} parent=1 // pred_region
      %s35 = ssub.s32 32768, 32768
      %36 = vsyncadd [#allocation5], %s35
      %s37 = sshll.u32 [#allocation4], 4
      %s38 = int_to_ptr.vmem [resolvable:$true] %s37
      %43 = dma.hbm_to_vmem [thread:$0]  %s2, 32768, %s38, [#allocation5], 256, 256, 16
    $region13: #{forward.1} parent=1 // pred_fallthru
      _
    // Predicated region
    $region14: #{forward.1} parent=1 // pred_check
      _
    $region15: #{forward.1} parent=1 // pred_check_branch
      %45 = sbr.rel (0) target = $region17
    $region16: #{forward.1} parent=1 // pred_region
      _
    $region17: #{forward.1} parent=1 // pred_fallthru
      _
    // Predicated region
    $region18: #{forward.1} parent=1 // pred_check
      _
    $region19: #{forward.1} parent=1 // pred_check_branch
      %47 = sbr.rel (0) target = $region21
    $region20: #{forward.1} parent=1 // pred_region
      _
    $region21: #{forward.1} parent=1 // pred_fallthru
      _
    // Predicated region
    $region22: #{forward.1} parent=1 // pred_check
      _
    $region23: #{forward.1} parent=1 // pred_check_branch
      %49 = sbr.rel (0) target = $region25
    $region24: #{forward.1} parent=1 // pred_region
      _
    $region25: #{forward.1} parent=1 // pred_fallthru
      _
    // Predicated region
    $region26: #{forward.1} parent=1 // pred_check
      _
    $region27: #{forward.1} parent=1 // pred_check_branch
      %51 = sbr.rel (0) target = $region29
    $region28: #{forward.1} parent=1 // pred_region
      _
    $region29: #{forward.1} parent=1 // pred_fallthru
      _
    // Predicated region
    $region30: #{forward.1} parent=1 // pred_check
      _
    $region31: #{forward.1} parent=1 // pred_check_branch
      %53 = sbr.rel (0) target = $region33
    $region32: #{forward.1} parent=1 // pred_region
      %s55 = ssub.s32 12160, 12160
      %56 = vsyncadd [#allocation5], %s55
      %s57 = sshll.u32 [#allocation6], 4
      %s58 = int_to_ptr.vmem [resolvable:$true] %s57
      %63 = dma.hbm_to_vmem [thread:$0]  %s7, 12160, %s58, [#allocation5], 320, 320, 20
    $region33: #{forward.1} parent=1 // pred_fallthru
      _
    // Predicated region
    $region34: #{forward.1} parent=1 // pred_check
      _
    $region35: #{forward.1} parent=1 // pred_check_branch
      %65 = sbr.rel (0) target = $region37
    $region36: #{forward.1} parent=1 // pred_region
      %s67 = ssub.s32 4096, 4096
      %68 = vsyncadd [#allocation8], %s67
      %s69 = sshll.u32 [#allocation7], 4
      %s70 = int_to_ptr.vmem [resolvable:$true] %s69
      %75 = dma.hbm_to_vmem [thread:$0]  %s8, 4096, %s70, [#allocation8], 64, 64, 4
    $region37: #{forward.1} parent=1 // pred_fallthru
      _
    // Predicated region
    $region38: #{forward.1} parent=1 // pred_check
      _
    $region39: #{forward.1} parent=1 // pred_check_branch
      %77 = sbr.rel (0) target = $region41
    $region40: #{forward.1} parent=1 // pred_region
      _
    $region41: #{forward.1} parent=1 // pred_fallthru
      _
    // Predicated region
    $region42: #{forward.1} parent=1 // pred_check
      _
    $region43: #{forward.1} parent=1 // pred_check_branch
      %79 = sbr.rel (0) target = $region45
    $region44: #{forward.1} parent=1 // pred_region
      %80 = dma.done [#allocation3], 3072
    $region45: #{forward.1} parent=1 // pred_fallthru
      _
    // Predicated region
    $region46: #{forward.1} parent=1 // pred_check
      _
    $region47: #{forward.1} parent=1 // pred_check_branch
      %82 = sbr.rel (0) target = $region49
    $region48: #{forward.1} parent=1 // pred_region
      %83 = dma.done [#allocation5], 32768
    $region49: #{forward.1} parent=1 // pred_fallthru
      _
    // Predicated region
    $region50: #{forward.1} parent=1 // pred_check
      _
    $region51: #{forward.1} parent=1 // pred_check_branch
      %85 = sbr.rel (0) target = $region53
    $region52: #{forward.1} parent=1 // pred_region
      %86 = dma.done [#allocation5], 12160
    $region53: #{forward.1} parent=1 // pred_fallthru
      _
    // Predicated region
    $region54: #{forward.1} parent=1 // pred_check
      _
    $region55: #{forward.1} parent=1 // pred_check_branch
      %88 = sbr.rel (0) target = $region57
    $region56: #{forward.1} parent=1 // pred_region
      %89 = dma.done [#allocation8], 4096
    $region57: #{forward.1} parent=1 // pred_fallthru
      _
    %v91 = vld [vmem:[%s0] sm:$0xff]
    %v92 = vld [vmem:[%s0 + $0x8] sm:$0xff]
    %v93 = vld [vmem:[%s0 + $0x10] sm:$0xff]
    %v94 = vld [vmem:[%s0 + $0x18] sm:$0xff]
    %v95 = vld [vmem:[%s0 + $0x20] sm:$0xff]
    %v96 = vld [vmem:[%s0 + $0x28] sm:$0xff]
    %v97 = vld [vmem:[%s0 + $0x30] sm:$0xff]
    %v98 = vld [vmem:[%s0 + $0x38] sm:$0xff]
    %v99 = vld [vmem:[#allocation2] sm:$0xff]
    %v100 = vld [vmem:[#allocation2 + $0x8] sm:$0xff]
    %v101 = vld [vmem:[#allocation2 + $0x10] sm:$0xff]
    %v102 = vld [vmem:[#allocation2 + $0x18] sm:$0xff]
    %v103 = vld [vmem:[#allocation2 + $0x20] sm:$0xff]
    %v104 = vld [vmem:[#allocation2 + $0x28] sm:$0xff]
    %v105 = vld [vmem:[#allocation2 + $0x30] sm:$0xff]
    %v106 = vld [vmem:[#allocation2 + $0x38] sm:$0xff]
    %v107 = vld [vmem:[#allocation2 + $0x40] sm:$0xff]
    %v108 = vld [vmem:[#allocation2 + $0x48] sm:$0xff]
    %v109 = vld [vmem:[#allocation2 + $0x50] sm:$0xff]
    %v110 = vld [vmem:[#allocation2 + $0x58] sm:$0xff]
    %v111 = vld [vmem:[#allocation2 + $0x60] sm:$0xff]
    %v112 = vld [vmem:[#allocation2 + $0x68] sm:$0xff]
    %v113 = vld [vmem:[#allocation2 + $0x70] sm:$0xff]
    %v114 = vld [vmem:[#allocation2 + $0x78] sm:$0xff]
    %v115 = vld [vmem:[#allocation2 + $0x80] sm:$0xff]
    %v116 = vld [vmem:[#allocation2 + $0x88] sm:$0xff]
    %v117 = vld [vmem:[#allocation2 + $0x90] sm:$0xff]
    %v118 = vld [vmem:[#allocation2 + $0x98] sm:$0xff]
    %v119 = vld [vmem:[#allocation2 + $0xa0] sm:$0x33]
    %v120 = vld [vmem:[#allocation2 + $0xa8] sm:$0x33]
    %v121 = vld [vmem:[#allocation2 + $0xb0] sm:$0x33]
    %v122 = vld [vmem:[#allocation2 + $0xb8] sm:$0x33]
    %v123 = vpack.c.bf16 %v92, %v91
    %v124 = vpack.c.bf16 %v94, %v93
    %v125 = vpack.c.bf16 %v96, %v95
    %v126 = vpack.c.bf16 %v98, %v97
    %v127 = vld [vmem:[%s9] sm:$0xff]
    %v129 = vlaneseq
    %v130 = vshrl.u32 %v129, 7
    %v131 = vsub.s32 0, %v130
    %v132 = vrot.slane %v127, %v131
    %v133 = vlaneseq
    %v134 = vshrl.u32 %v133, 7
    %v135 = vsub.s32 1, %v134
    %v136 = vrot.slane %v127, %v135
    %v137 = vlaneseq
    %v138 = vshrl.u32 %v137, 7
    %v139 = vsub.s32 2, %v138
    %v140 = vrot.slane %v127, %v139
    %v141 = vlaneseq
    %v142 = vshrl.u32 %v141, 7
    %v143 = vsub.s32 3, %v142
    %v144 = vrot.slane %v127, %v143
    %v145 = vlaneseq
    %v146 = vshrl.u32 %v145, 7
    %v147 = vsub.s32 4, %v146
    %v148 = vrot.slane %v127, %v147
    %v149 = vlaneseq
    %v150 = vshrl.u32 %v149, 7
    %v151 = vsub.s32 5, %v150
    %v152 = vrot.slane %v127, %v151
    %v153 = vlaneseq
    %v154 = vshrl.u32 %v153, 7
    %v155 = vsub.s32 6, %v154
    %v156 = vrot.slane %v127, %v155
    %v157 = vlaneseq
    %v158 = vshrl.u32 %v157, 7
    %v159 = vsub.s32 7, %v158
    %v160 = vrot.slane %v127, %v159
    %v193 = vunpack.c.l.b16 %v99
    %v194 = vunpack.c.h.b16 %v99
    %v195 = vunpack.c.l.b16 %v100
    %v196 = vunpack.c.h.b16 %v100
    %v197 = vunpack.c.l.b16 %v101
    %v198 = vunpack.c.h.b16 %v101
    %v199 = vunpack.c.l.b16 %v102
    %v200 = vunpack.c.h.b16 %v102
    %v201 = vunpack.c.l.b16 %v103
    %v202 = vunpack.c.h.b16 %v103
    %v203 = vunpack.c.l.b16 %v104
    %v204 = vunpack.c.h.b16 %v104
    %v205 = vunpack.c.l.b16 %v105
    %v206 = vunpack.c.h.b16 %v105
    %v207 = vunpack.c.l.b16 %v106
    %v208 = vunpack.c.h.b16 %v106
    %v209 = vunpack.c.l.b16 %v107
    %v210 = vunpack.c.h.b16 %v107
    %v211 = vunpack.c.l.b16 %v108
    %v212 = vunpack.c.h.b16 %v108
    %v213 = vunpack.c.l.b16 %v109
    %v214 = vunpack.c.h.b16 %v109
    %v215 = vunpack.c.l.b16 %v110
    %v216 = vunpack.c.h.b16 %v110
    %v217 = vunpack.c.l.b16 %v111
    %v218 = vunpack.c.h.b16 %v111
    %v219 = vunpack.c.l.b16 %v112
    %v220 = vunpack.c.h.b16 %v112
    %v221 = vunpack.c.l.b16 %v113
    %v222 = vunpack.c.h.b16 %v113
    %v223 = vunpack.c.l.b16 %v114
    %v224 = vunpack.c.h.b16 %v114
    %v225 = vunpack.c.l.b16 %v115
    %v226 = vunpack.c.h.b16 %v115
    %v227 = vunpack.c.l.b16 %v116
    %v228 = vunpack.c.h.b16 %v116
    %v229 = vunpack.c.l.b16 %v117
    %v230 = vunpack.c.h.b16 %v117
    %v231 = vunpack.c.l.b16 %v118
    %v232 = vunpack.c.h.b16 %v118
    %v233 = vunpack.c.l.b16 %v119
    %v234 = vunpack.c.h.b16 %v119
    %v235 = vunpack.c.l.b16 %v120
    %v236 = vunpack.c.h.b16 %v120
    %v237 = vunpack.c.l.b16 %v121
    %v238 = vunpack.c.h.b16 %v121
    %v239 = vunpack.c.l.b16 %v122
    %v240 = vunpack.c.h.b16 %v122
    %v241 = vpack.c.b16 %v201, %v193
    %v242 = vpack.c.b16 %v202, %v194
    %v243 = vpack.c.b16 %v203, %v195
    %v244 = vpack.c.b16 %v204, %v196
    %v245 = vpack.c.b16 %v205, %v197
    %v246 = vpack.c.b16 %v206, %v198
    %v247 = vpack.c.b16 %v207, %v199
    %v248 = vpack.c.b16 %v208, %v200
    %v249 = vpack.c.b16 %v217, %v209
    %v250 = vpack.c.b16 %v218, %v210
    %v251 = vpack.c.b16 %v219, %v211
    %v252 = vpack.c.b16 %v220, %v212
    %v253 = vpack.c.b16 %v221, %v213
    %v254 = vpack.c.b16 %v222, %v214
    %v255 = vpack.c.b16 %v223, %v215
    %v256 = vpack.c.b16 %v224, %v216
    %v257 = vpack.c.b16 %v233, %v225
    %v258 = vpack.c.b16 %v234, %v226
    %v259 = vpack.c.b16 %v235, %v227
    %v260 = vpack.c.b16 %v236, %v228
    %v261 = vpack.c.b16 %v237, %v229
    %v262 = vpack.c.b16 %v238, %v230
    %v263 = vpack.c.b16 %v239, %v231
    %v264 = vpack.c.b16 %v240, %v232
    %vm281 = vcmask 359424
    %v283 = vsel %vm281, %v123, 0
    %v286 = vsel %vm281, %v124, 0
    %v289 = vsel %vm281, %v125, 0
    %v292 = vsel %vm281, %v126, 0
    %vm294 = vcmask 1045504
    %v296 = vsel %vm294, %v257, 0
    %v299 = vsel %vm294, %v258, 0
    %v302 = vsel %vm294, %v259, 0
    %v305 = vsel %vm294, %v260, 0
    %v308 = vsel %vm294, %v261, 0
    %v311 = vsel %vm294, %v262, 0
    %v314 = vsel %vm294, %v263, 0
    %v317 = vsel %vm294, %v264, 0
    %319 = vmatprep.subr.bf16.mxu0 0
    %320 = vmatpush1.bf16.msra.mxu0 0
    %321 = vmatprep.subr.bf16.mxu0 0
    %322 = vmatpush1.bf16.msra.mxu0 0
    %323 = vmatprep.subr.bf16.mxu0 0
    %324 = vmatpush1.bf16.msra.mxu0 0
    %325 = vmatprep.subr.bf16.mxu0 0
    %326 = vmatpush1.bf16.msra.mxu0 0
    %327 = vmatprep.subr.bf16.mxu0 0
    %328 = vmatpush1.bf16.msra.mxu0 0
    %329 = vmatprep.subr.bf16.mxu0 %v299
    %330 = vmatpush1.bf16.msra.mxu0 %v296
    %331 = vmatprep.subr.bf16.mxu0 %v250
    %332 = vmatpush1.bf16.msra.mxu0 %v249
    %333 = vmatprep.subr.bf16.mxu0 %v242
    %334 = vmatpush1.bf16.msra.mxu0 %v241
    %335 = vmatprep.subr.bf16.mxu0 0
    %336 = vmatpush2.bf16.msra.mxu0 0
    %337 = vmatprep.subr.bf16.mxu0 0
    %338 = vmatpush2.bf16.msra.mxu0 0
    %339 = vmatprep.subr.bf16.mxu0 0
    %340 = vmatpush2.bf16.msra.mxu0 0
    %341 = vmatprep.subr.bf16.mxu0 0
    %342 = vmatpush2.bf16.msra.mxu0 0
    %343 = vmatprep.subr.bf16.mxu0 0
    %344 = vmatpush2.bf16.msra.mxu0 0
    %345 = vmatprep.subr.bf16.mxu0 0
    %346 = vmatpush2.bf16.msra.mxu0 0
    %347 = vmatprep.subr.bf16.mxu0 0
    %348 = vmatpush2.bf16.msra.mxu0 0
    %349 = vmatprep.subr.bf16.mxu0 0
    %350 = vmatpush2.bf16.msra.mxu0 0
    %351 = vmatprep.mubr.bf16.mxu0 0
    %352 = vmatmul.mubr.bf16.gmra.mxu0 %v283
    %v353 = vpop.f32.mrf.mxu0
    %v354 = vadd.f32 %v132, %v353
    %v355 = vpop.f32.mrf.mxu0
    %v356 = vadd.f32 %v136, %v355
    %v357 = vpop.f32.mrf.mxu0
    %v358 = vadd.f32 %v132, %v357
    %v359 = vpop.f32.mrf.mxu0
    %v360 = vadd.f32 %v136, %v359
    %361 = vmatprep.mubr.bf16.mxu0 0
    %362 = vmatmul.mubr.bf16.gmra.mxu0 %v286
    %v363 = vpop.f32.mrf.mxu0
    %v364 = vadd.f32 %v132, %v363
    %v365 = vpop.f32.mrf.mxu0
    %v366 = vadd.f32 %v136, %v365
    %v367 = vpop.f32.mrf.mxu0
    %v368 = vadd.f32 %v132, %v367
    %v369 = vpop.f32.mrf.mxu0
    %v370 = vadd.f32 %v136, %v369
    %371 = vmatprep.mubr.bf16.mxu0 0
    %372 = vmatmul.mubr.bf16.gmra.mxu0 %v289
    %v373 = vpop.f32.mrf.mxu0
    %v374 = vadd.f32 %v132, %v373
    %v375 = vpop.f32.mrf.mxu0
    %v376 = vadd.f32 %v136, %v375
    %v377 = vpop.f32.mrf.mxu0
    %v378 = vadd.f32 %v132, %v377
    %v379 = vpop.f32.mrf.mxu0
    %v380 = vadd.f32 %v136, %v379
    %381 = vmatprep.mubr.bf16.mxu0 0
    %382 = vmatmul.mubr.bf16.gmra.mxu0 %v292
    %v383 = vpop.f32.mrf.mxu0
    %v384 = vadd.f32 %v132, %v383
    %v385 = vpop.f32.mrf.mxu0
    %v386 = vadd.f32 %v136, %v385
    %v387 = vpop.f32.mrf.mxu0
    %v388 = vadd.f32 %v132, %v387
    %v389 = vpop.f32.mrf.mxu0
    %v390 = vadd.f32 %v136, %v389
    %391 = vdwg.mxu0
    %392 = vmatprep.subr.bf16.mxu0 0
    %393 = vmatpush1.bf16.msra.mxu0 0
    %394 = vmatprep.subr.bf16.mxu0 0
    %395 = vmatpush1.bf16.msra.mxu0 0
    %396 = vmatprep.subr.bf16.mxu0 0
    %397 = vmatpush1.bf16.msra.mxu0 0
    %398 = vmatprep.subr.bf16.mxu0 0
    %399 = vmatpush1.bf16.msra.mxu0 0
    %400 = vmatprep.subr.bf16.mxu0 0
    %401 = vmatpush1.bf16.msra.mxu0 0
    %402 = vmatprep.subr.bf16.mxu0 %v305
    %403 = vmatpush1.bf16.msra.mxu0 %v302
    %404 = vmatprep.subr.bf16.mxu0 %v252
    %405 = vmatpush1.bf16.msra.mxu0 %v251
    %406 = vmatprep.subr.bf16.mxu0 %v244
    %407 = vmatpush1.bf16.msra.mxu0 %v243
    %408 = vmatprep.subr.bf16.mxu0 0
    %409 = vmatpush2.bf16.msra.mxu0 0
    %410 = vmatprep.subr.bf16.mxu0 0
    %411 = vmatpush2.bf16.msra.mxu0 0
    %412 = vmatprep.subr.bf16.mxu0 0
    %413 = vmatpush2.bf16.msra.mxu0 0
    %414 = vmatprep.subr.bf16.mxu0 0
    %415 = vmatpush2.bf16.msra.mxu0 0
    %416 = vmatprep.subr.bf16.mxu0 0
    %417 = vmatpush2.bf16.msra.mxu0 0
    %418 = vmatprep.subr.bf16.mxu0 0
    %419 = vmatpush2.bf16.msra.mxu0 0
    %420 = vmatprep.subr.bf16.mxu0 0
    %421 = vmatpush2.bf16.msra.mxu0 0
    %422 = vmatprep.subr.bf16.mxu0 0
    %423 = vmatpush2.bf16.msra.mxu0 0
    %424 = vmatprep.mubr.bf16.mxu0 0
    %425 = vmatmul.mubr.bf16.gmra.mxu0 %v283
    %v426 = vpop.f32.mrf.mxu0
    %v427 = vadd.f32 %v140, %v426
    %v428 = vpop.f32.mrf.mxu0
    %v429 = vadd.f32 %v144, %v428
    %v430 = vpop.f32.mrf.mxu0
    %v431 = vadd.f32 %v140, %v430
    %v432 = vpop.f32.mrf.mxu0
    %v433 = vadd.f32 %v144, %v432
    %434 = vmatprep.mubr.bf16.mxu0 0
    %435 = vmatmul.mubr.bf16.gmra.mxu0 %v286
    %v436 = vpop.f32.mrf.mxu0
    %v437 = vadd.f32 %v140, %v436
    %v438 = vpop.f32.mrf.mxu0
    %v439 = vadd.f32 %v144, %v438
    %v440 = vpop.f32.mrf.mxu0
    %v441 = vadd.f32 %v140, %v440
    %v442 = vpop.f32.mrf.mxu0
    %v443 = vadd.f32 %v144, %v442
    %444 = vmatprep.mubr.bf16.mxu0 0
    %445 = vmatmul.mubr.bf16.gmra.mxu0 %v289
    %v446 = vpop.f32.mrf.mxu0
    %v447 = vadd.f32 %v140, %v446
    %v448 = vpop.f32.mrf.mxu0
    %v449 = vadd.f32 %v144, %v448
    %v450 = vpop.f32.mrf.mxu0
    %v451 = vadd.f32 %v140, %v450
    %v452 = vpop.f32.mrf.mxu0
    %v453 = vadd.f32 %v144, %v452
    %454 = vmatprep.mubr.bf16.mxu0 0
    %455 = vmatmul.mubr.bf16.gmra.mxu0 %v292
    %v456 = vpop.f32.mrf.mxu0
    %v457 = vadd.f32 %v140, %v456
    %v458 = vpop.f32.mrf.mxu0
    %v459 = vadd.f32 %v144, %v458
    %v460 = vpop.f32.mrf.mxu0
    %v461 = vadd.f32 %v140, %v460
    %v462 = vpop.f32.mrf.mxu0
    %v463 = vadd.f32 %v144, %v462
    %464 = vdwg.mxu0
    %465 = vmatprep.subr.bf16.mxu0 0
    %466 = vmatpush1.bf16.msra.mxu0 0
    %467 = vmatprep.subr.bf16.mxu0 0
    %468 = vmatpush1.bf16.msra.mxu0 0
    %469 = vmatprep.subr.bf16.mxu0 0
    %470 = vmatpush1.bf16.msra.mxu0 0
    %471 = vmatprep.subr.bf16.mxu0 0
    %472 = vmatpush1.bf16.msra.mxu0 0
    %473 = vmatprep.subr.bf16.mxu0 0
    %474 = vmatpush1.bf16.msra.mxu0 0
    %475 = vmatprep.subr.bf16.mxu0 %v311
    %476 = vmatpush1.bf16.msra.mxu0 %v308
    %477 = vmatprep.subr.bf16.mxu0 %v254
    %478 = vmatpush1.bf16.msra.mxu0 %v253
    %479 = vmatprep.subr.bf16.mxu0 %v246
    %480 = vmatpush1.bf16.msra.mxu0 %v245
    %481 = vmatprep.subr.bf16.mxu0 0
    %482 = vmatpush2.bf16.msra.mxu0 0
    %483 = vmatprep.subr.bf16.mxu0 0
    %484 = vmatpush2.bf16.msra.mxu0 0
    %485 = vmatprep.subr.bf16.mxu0 0
    %486 = vmatpush2.bf16.msra.mxu0 0
    %487 = vmatprep.subr.bf16.mxu0 0
    %488 = vmatpush2.bf16.msra.mxu0 0
    %489 = vmatprep.subr.bf16.mxu0 0
    %490 = vmatpush2.bf16.msra.mxu0 0
    %491 = vmatprep.subr.bf16.mxu0 0
    %492 = vmatpush2.bf16.msra.mxu0 0
    %493 = vmatprep.subr.bf16.mxu0 0
    %494 = vmatpush2.bf16.msra.mxu0 0
    %495 = vmatprep.subr.bf16.mxu0 0
    %496 = vmatpush2.bf16.msra.mxu0 0
    %497 = vmatprep.mubr.bf16.mxu0 0
    %498 = vmatmul.mubr.bf16.gmra.mxu0 %v283
    %v499 = vpop.f32.mrf.mxu0
    %v500 = vadd.f32 %v148, %v499
    %v501 = vpop.f32.mrf.mxu0
    %v502 = vadd.f32 %v152, %v501
    %v503 = vpop.f32.mrf.mxu0
    %v504 = vadd.f32 %v148, %v503
    %v505 = vpop.f32.mrf.mxu0
    %v506 = vadd.f32 %v152, %v505
    %507 = vmatprep.mubr.bf16.mxu0 0
    %508 = vmatmul.mubr.bf16.gmra.mxu0 %v286
    %v509 = vpop.f32.mrf.mxu0
    %v510 = vadd.f32 %v148, %v509
    %v511 = vpop.f32.mrf.mxu0
    %v512 = vadd.f32 %v152, %v511
    %v513 = vpop.f32.mrf.mxu0
    %v514 = vadd.f32 %v148, %v513
    %v515 = vpop.f32.mrf.mxu0
    %v516 = vadd.f32 %v152, %v515
    %517 = vmatprep.mubr.bf16.mxu0 0
    %518 = vmatmul.mubr.bf16.gmra.mxu0 %v289
    %v519 = vpop.f32.mrf.mxu0
    %v520 = vadd.f32 %v148, %v519
    %v521 = vpop.f32.mrf.mxu0
    %v522 = vadd.f32 %v152, %v521
    %v523 = vpop.f32.mrf.mxu0
    %v524 = vadd.f32 %v148, %v523
    %v525 = vpop.f32.mrf.mxu0
    %v526 = vadd.f32 %v152, %v525
    %527 = vmatprep.mubr.bf16.mxu0 0
    %528 = vmatmul.mubr.bf16.gmra.mxu0 %v292
    %v529 = vpop.f32.mrf.mxu0
    %v530 = vadd.f32 %v148, %v529
    %v531 = vpop.f32.mrf.mxu0
    %v532 = vadd.f32 %v152, %v531
    %v533 = vpop.f32.mrf.mxu0
    %v534 = vadd.f32 %v148, %v533
    %v535 = vpop.f32.mrf.mxu0
    %v536 = vadd.f32 %v152, %v535
    %537 = vdwg.mxu0
    %538 = vmatprep.subr.bf16.mxu0 0
    %539 = vmatpush1.bf16.msra.mxu0 0
    %540 = vmatprep.subr.bf16.mxu0 0
    %541 = vmatpush1.bf16.msra.mxu0 0
    %542 = vmatprep.subr.bf16.mxu0 0
    %543 = vmatpush1.bf16.msra.mxu0 0
    %544 = vmatprep.subr.bf16.mxu0 0
    %545 = vmatpush1.bf16.msra.mxu0 0
    %546 = vmatprep.subr.bf16.mxu0 0
    %547 = vmatpush1.bf16.msra.mxu0 0
    %548 = vmatprep.subr.bf16.mxu0 %v317
    %549 = vmatpush1.bf16.msra.mxu0 %v314
    %550 = vmatprep.subr.bf16.mxu0 %v256
    %551 = vmatpush1.bf16.msra.mxu0 %v255
    %552 = vmatprep.subr.bf16.mxu0 %v248
    %553 = vmatpush1.bf16.msra.mxu0 %v247
    %554 = vmatprep.subr.bf16.mxu0 0
    %555 = vmatpush2.bf16.msra.mxu0 0
    %556 = vmatprep.subr.bf16.mxu0 0
    %557 = vmatpush2.bf16.msra.mxu0 0
    %558 = vmatprep.subr.bf16.mxu0 0
    %559 = vmatpush2.bf16.msra.mxu0 0
    %560 = vmatprep.subr.bf16.mxu0 0
    %561 = vmatpush2.bf16.msra.mxu0 0
    %562 = vmatprep.subr.bf16.mxu0 0
    %563 = vmatpush2.bf16.msra.mxu0 0
    %564 = vmatprep.subr.bf16.mxu0 0
    %565 = vmatpush2.bf16.msra.mxu0 0
    %566 = vmatprep.subr.bf16.mxu0 0
    %567 = vmatpush2.bf16.msra.mxu0 0
    %568 = vmatprep.subr.bf16.mxu0 0
    %569 = vmatpush2.bf16.msra.mxu0 0
    %570 = vmatprep.mubr.bf16.mxu0 0
    %571 = vmatmul.mubr.bf16.gmra.mxu0 %v283
    %v572 = vpop.f32.mrf.mxu0
    %v573 = vadd.f32 %v156, %v572
    %v574 = vpop.f32.mrf.mxu0
    %v575 = vadd.f32 %v160, %v574
    %v576 = vpop.f32.mrf.mxu0
    %v577 = vadd.f32 %v156, %v576
    %v578 = vpop.f32.mrf.mxu0
    %v579 = vadd.f32 %v160, %v578
    %580 = vmatprep.mubr.bf16.mxu0 0
    %581 = vmatmul.mubr.bf16.gmra.mxu0 %v286
    %v582 = vpop.f32.mrf.mxu0
    %v583 = vadd.f32 %v156, %v582
    %v584 = vpop.f32.mrf.mxu0
    %v585 = vadd.f32 %v160, %v584
    %v586 = vpop.f32.mrf.mxu0
    %v587 = vadd.f32 %v156, %v586
    %v588 = vpop.f32.mrf.mxu0
    %v589 = vadd.f32 %v160, %v588
    %590 = vmatprep.mubr.bf16.mxu0 0
    %591 = vmatmul.mubr.bf16.gmra.mxu0 %v289
    %v592 = vpop.f32.mrf.mxu0
    %v593 = vadd.f32 %v156, %v592
    %v594 = vpop.f32.mrf.mxu0
    %v595 = vadd.f32 %v160, %v594
    %v596 = vpop.f32.mrf.mxu0
    %v597 = vadd.f32 %v156, %v596
    %v598 = vpop.f32.mrf.mxu0
    %v599 = vadd.f32 %v160, %v598
    %600 = vmatprep.mubr.bf16.mxu0 0
    %601 = vmatmul.mubr.bf16.gmra.mxu0 %v292
    %v602 = vpop.f32.mrf.mxu0
    %v603 = vadd.f32 %v156, %v602
    %v604 = vpop.f32.mrf.mxu0
    %v605 = vadd.f32 %v160, %v604
    %v606 = vpop.f32.mrf.mxu0
    %v607 = vadd.f32 %v156, %v606
    %v608 = vpop.f32.mrf.mxu0
    %v609 = vadd.f32 %v160, %v608
    %610 = vdwg.mxu0
    %vm611 = vcmp.ge.f32.partialorder %v354, 0.0
    %vm612 = vcmp.ge.f32.partialorder %v356, 0.0
    %vm613 = vcmp.ge.f32.partialorder %v427, 0.0
    %vm614 = vcmp.ge.f32.partialorder %v429, 0.0
    %vm615 = vcmp.ge.f32.partialorder %v500, 0.0
    %vm616 = vcmp.ge.f32.partialorder %v502, 0.0
    %vm617 = vcmp.ge.f32.partialorder %v573, 0.0
    %vm618 = vcmp.ge.f32.partialorder %v575, 0.0
    %vm619 = vcmp.ge.f32.partialorder %v358, 0.0
    %vm620 = vcmp.ge.f32.partialorder %v360, 0.0
    %vm621 = vcmp.ge.f32.partialorder %v431, 0.0
    %vm622 = vcmp.ge.f32.partialorder %v433, 0.0
    %vm623 = vcmp.ge.f32.partialorder %v504, 0.0
    %vm624 = vcmp.ge.f32.partialorder %v506, 0.0
    %vm625 = vcmp.ge.f32.partialorder %v577, 0.0
    %vm626 = vcmp.ge.f32.partialorder %v579, 0.0
    %vm627 = vcmp.ge.f32.partialorder %v364, 0.0
    %vm628 = vcmp.ge.f32.partialorder %v366, 0.0
    %vm629 = vcmp.ge.f32.partialorder %v437, 0.0
    %vm630 = vcmp.ge.f32.partialorder %v439, 0.0
    %vm631 = vcmp.ge.f32.partialorder %v510, 0.0
    %vm632 = vcmp.ge.f32.partialorder %v512, 0.0
    %vm633 = vcmp.ge.f32.partialorder %v583, 0.0
    %vm634 = vcmp.ge.f32.partialorder %v585, 0.0
    %vm635 = vcmp.ge.f32.partialorder %v368, 0.0
    %vm636 = vcmp.ge.f32.partialorder %v370, 0.0
    %vm637 = vcmp.ge.f32.partialorder %v441, 0.0
    %vm638 = vcmp.ge.f32.partialorder %v443, 0.0
    %vm639 = vcmp.ge.f32.partialorder %v514, 0.0
    %vm640 = vcmp.ge.f32.partialorder %v516, 0.0
    %vm641 = vcmp.ge.f32.partialorder %v587, 0.0
    %vm642 = vcmp.ge.f32.partialorder %v589, 0.0
    %vm643 = vcmp.ge.f32.partialorder %v374, 0.0
    %vm644 = vcmp.ge.f32.partialorder %v376, 0.0
    %vm645 = vcmp.ge.f32.partialorder %v447, 0.0
    %vm646 = vcmp.ge.f32.partialorder %v449, 0.0
    %vm647 = vcmp.ge.f32.partialorder %v520, 0.0
    %vm648 = vcmp.ge.f32.partialorder %v522, 0.0
    %vm649 = vcmp.ge.f32.partialorder %v593, 0.0
    %vm650 = vcmp.ge.f32.partialorder %v595, 0.0
    %vm651 = vcmp.ge.f32.partialorder %v378, 0.0
    %vm652 = vcmp.ge.f32.partialorder %v380, 0.0
    %vm653 = vcmp.ge.f32.partialorder %v451, 0.0
    %vm654 = vcmp.ge.f32.partialorder %v453, 0.0
    %vm655 = vcmp.ge.f32.partialorder %v524, 0.0
    %vm656 = vcmp.ge.f32.partialorder %v526, 0.0
    %vm657 = vcmp.ge.f32.partialorder %v597, 0.0
    %vm658 = vcmp.ge.f32.partialorder %v599, 0.0
    %vm659 = vcmp.ge.f32.partialorder %v384, 0.0
    %vm660 = vcmp.ge.f32.partialorder %v386, 0.0
    %vm661 = vcmp.ge.f32.partialorder %v457, 0.0
    %vm662 = vcmp.ge.f32.partialorder %v459, 0.0
    %vm663 = vcmp.ge.f32.partialorder %v530, 0.0
    %vm664 = vcmp.ge.f32.partialorder %v532, 0.0
    %vm665 = vcmp.ge.f32.partialorder %v603, 0.0
    %vm666 = vcmp.ge.f32.partialorder %v605, 0.0
    %vm667 = vcmp.ge.f32.partialorder %v388, 0.0
    %vm668 = vcmp.ge.f32.partialorder %v390, 0.0
    %vm669 = vcmp.ge.f32.partialorder %v461, 0.0
    %vm670 = vcmp.ge.f32.partialorder %v463, 0.0
    %vm671 = vcmp.ge.f32.partialorder %v534, 0.0
    %vm672 = vcmp.ge.f32.partialorder %v536, 0.0
    %vm673 = vcmp.ge.f32.partialorder %v607, 0.0
    %vm674 = vcmp.ge.f32.partialorder %v609, 0.0
    %v675 = vmul.f32 %v354, 0.01
    %v676 = vmul.f32 %v356, 0.01
    %v677 = vmul.f32 %v427, 0.01
    %v678 = vmul.f32 %v429, 0.01
    %v679 = vmul.f32 %v500, 0.01
    %v680 = vmul.f32 %v502, 0.01
    %v681 = vmul.f32 %v573, 0.01
    %v682 = vmul.f32 %v575, 0.01
    %v683 = vmul.f32 %v358, 0.01
    %v684 = vmul.f32 %v360, 0.01
    %v685 = vmul.f32 %v431, 0.01
    %v686 = vmul.f32 %v433, 0.01
    %v687 = vmul.f32 %v504, 0.01
    %v688 = vmul.f32 %v506, 0.01
    %v689 = vmul.f32 %v577, 0.01
    %v690 = vmul.f32 %v579, 0.01
    %v691 = vmul.f32 %v364, 0.01
    %v692 = vmul.f32 %v366, 0.01
    %v693 = vmul.f32 %v437, 0.01
    %v694 = vmul.f32 %v439, 0.01
    %v695 = vmul.f32 %v510, 0.01
    %v696 = vmul.f32 %v512, 0.01
    %v697 = vmul.f32 %v583, 0.01
    %v698 = vmul.f32 %v585, 0.01
    %v699 = vmul.f32 %v368, 0.01
    %v700 = vmul.f32 %v370, 0.01
    %v701 = vmul.f32 %v441, 0.01
    %v702 = vmul.f32 %v443, 0.01
    %v703 = vmul.f32 %v514, 0.01
    %v704 = vmul.f32 %v516, 0.01
    %v705 = vmul.f32 %v587, 0.01
    %v706 = vmul.f32 %v589, 0.01
    %v707 = vmul.f32 %v374, 0.01
    %v708 = vmul.f32 %v376, 0.01
    %v709 = vmul.f32 %v447, 0.01
    %v710 = vmul.f32 %v449, 0.01
    %v711 = vmul.f32 %v520, 0.01
    %v712 = vmul.f32 %v522, 0.01
    %v713 = vmul.f32 %v593, 0.01
    %v714 = vmul.f32 %v595, 0.01
    %v715 = vmul.f32 %v378, 0.01
    %v716 = vmul.f32 %v380, 0.01
    %v717 = vmul.f32 %v451, 0.01
    %v718 = vmul.f32 %v453, 0.01
    %v719 = vmul.f32 %v524, 0.01
    %v720 = vmul.f32 %v526, 0.01
    %v721 = vmul.f32 %v597, 0.01
    %v722 = vmul.f32 %v599, 0.01
    %v723 = vmul.f32 %v384, 0.01
    %v724 = vmul.f32 %v386, 0.01
    %v725 = vmul.f32 %v457, 0.01
    %v726 = vmul.f32 %v459, 0.01
    %v727 = vmul.f32 %v530, 0.01
    %v728 = vmul.f32 %v532, 0.01
    %v729 = vmul.f32 %v603, 0.01
    %v730 = vmul.f32 %v605, 0.01
    %v731 = vmul.f32 %v388, 0.01
    %v732 = vmul.f32 %v390, 0.01
    %v733 = vmul.f32 %v461, 0.01
    %v734 = vmul.f32 %v463, 0.01
    %v735 = vmul.f32 %v534, 0.01
    %v736 = vmul.f32 %v536, 0.01
    %v737 = vmul.f32 %v607, 0.01
    %v738 = vmul.f32 %v609, 0.01
    %v739 = vsel %vm611, %v354, %v675
    %v740 = vsel %vm612, %v356, %v676
    %v741 = vsel %vm613, %v427, %v677
    %v742 = vsel %vm614, %v429, %v678
    %v743 = vsel %vm615, %v500, %v679
    %v744 = vsel %vm616, %v502, %v680
    %v745 = vsel %vm617, %v573, %v681
    %v746 = vsel %vm618, %v575, %v682
    %v747 = vsel %vm619, %v358, %v683
    %v748 = vsel %vm620, %v360, %v684
    %v749 = vsel %vm621, %v431, %v685
    %v750 = vsel %vm622, %v433, %v686
    %v751 = vsel %vm623, %v504, %v687
    %v752 = vsel %vm624, %v506, %v688
    %v753 = vsel %vm625, %v577, %v689
    %v754 = vsel %vm626, %v579, %v690
    %v755 = vsel %vm627, %v364, %v691
    %v756 = vsel %vm628, %v366, %v692
    %v757 = vsel %vm629, %v437, %v693
    %v758 = vsel %vm630, %v439, %v694
    %v759 = vsel %vm631, %v510, %v695
    %v760 = vsel %vm632, %v512, %v696
    %v761 = vsel %vm633, %v583, %v697
    %v762 = vsel %vm634, %v585, %v698
    %v763 = vsel %vm635, %v368, %v699
    %v764 = vsel %vm636, %v370, %v700
    %v765 = vsel %vm637, %v441, %v701
    %v766 = vsel %vm638, %v443, %v702
    %v767 = vsel %vm639, %v514, %v703
    %v768 = vsel %vm640, %v516, %v704
    %v769 = vsel %vm641, %v587, %v705
    %v770 = vsel %vm642, %v589, %v706
    %v771 = vsel %vm643, %v374, %v707
    %v772 = vsel %vm644, %v376, %v708
    %v773 = vsel %vm645, %v447, %v709
    %v774 = vsel %vm646, %v449, %v710
    %v775 = vsel %vm647, %v520, %v711
    %v776 = vsel %vm648, %v522, %v712
    %v777 = vsel %vm649, %v593, %v713
    %v778 = vsel %vm650, %v595, %v714
    %v779 = vsel %vm651, %v378, %v715
    %v780 = vsel %vm652, %v380, %v716
    %v781 = vsel %vm653, %v451, %v717
    %v782 = vsel %vm654, %v453, %v718
    %v783 = vsel %vm655, %v524, %v719
    %v784 = vsel %vm656, %v526, %v720
    %v785 = vsel %vm657, %v597, %v721
    %v786 = vsel %vm658, %v599, %v722
    %v787 = vsel %vm659, %v384, %v723
    %v788 = vsel %vm660, %v386, %v724
    %v789 = vsel %vm661, %v457, %v725
    %v790 = vsel %vm662, %v459, %v726
    %v791 = vsel %vm663, %v530, %v727
    %v792 = vsel %vm664, %v532, %v728
    %v793 = vsel %vm665, %v603, %v729
    %v794 = vsel %vm666, %v605, %v730
    %v795 = vsel %vm667, %v388, %v731
    %v796 = vsel %vm668, %v390, %v732
    %v797 = vsel %vm669, %v461, %v733
    %v798 = vsel %vm670, %v463, %v734
    %v799 = vsel %vm671, %v534, %v735
    %v800 = vsel %vm672, %v536, %v736
    %v801 = vsel %vm673, %v607, %v737
    %v802 = vsel %vm674, %v609, %v738
    %v803 = vld [vmem:[#allocation4] sm:$0xff]
    %v804 = vld [vmem:[#allocation4 + $0x8] sm:$0xff]
    %v805 = vld [vmem:[#allocation4 + $0x10] sm:$0xff]
    %v806 = vld [vmem:[#allocation4 + $0x18] sm:$0xff]
    %v807 = vld [vmem:[#allocation4 + $0x20] sm:$0xff]
    %v808 = vld [vmem:[#allocation4 + $0x28] sm:$0xff]
    %v809 = vld [vmem:[#allocation4 + $0x30] sm:$0xff]
    %v810 = vld [vmem:[#allocation4 + $0x38] sm:$0xff]
    %v811 = vld [vmem:[#allocation4 + $0x40] sm:$0xff]
    %v812 = vld [vmem:[#allocation4 + $0x48] sm:$0xff]
    %v813 = vld [vmem:[#allocation4 + $0x50] sm:$0xff]
    %v814 = vld [vmem:[#allocation4 + $0x58] sm:$0xff]
    %v815 = vld [vmem:[#allocation4 + $0x60] sm:$0xff]
    %v816 = vld [vmem:[#allocation4 + $0x68] sm:$0xff]
    %v817 = vld [vmem:[#allocation4 + $0x70] sm:$0xff]
    %v818 = vld [vmem:[#allocation4 + $0x78] sm:$0xff]
    %v819 = vld [vmem:[#allocation4 + $0x80] sm:$0xff]
    %v820 = vld [vmem:[#allocation4 + $0x88] sm:$0xff]
    %v821 = vld [vmem:[#allocation4 + $0x90] sm:$0xff]
    %v822 = vld [vmem:[#allocation4 + $0x98] sm:$0xff]
    %v823 = vld [vmem:[#allocation4 + $0xa0] sm:$0xff]
    %v824 = vld [vmem:[#allocation4 + $0xa8] sm:$0xff]
    %v825 = vld [vmem:[#allocation4 + $0xb0] sm:$0xff]
    %v826 = vld [vmem:[#allocation4 + $0xb8] sm:$0xff]
    %v827 = vld [vmem:[#allocation4 + $0xc0] sm:$0xff]
    %v828 = vld [vmem:[#allocation4 + $0xc8] sm:$0xff]
    %v829 = vld [vmem:[#allocation4 + $0xd0] sm:$0xff]
    %v830 = vld [vmem:[#allocation4 + $0xd8] sm:$0xff]
    %v831 = vld [vmem:[#allocation4 + $0xe0] sm:$0xff]
    %v832 = vld [vmem:[#allocation4 + $0xe8] sm:$0xff]
    %v833 = vld [vmem:[#allocation4 + $0xf0] sm:$0xff]
    %v834 = vld [vmem:[#allocation4 + $0xf8] sm:$0xff]
    %v835 = vld [vmem:[#allocation4 + $0x100] sm:$0xff]
    %v836 = vld [vmem:[#allocation4 + $0x108] sm:$0xff]
    %v837 = vld [vmem:[#allocation4 + $0x110] sm:$0xff]
    %v838 = vld [vmem:[#allocation4 + $0x118] sm:$0xff]
    %v839 = vld [vmem:[#allocation4 + $0x120] sm:$0xff]
    %v840 = vld [vmem:[#allocation4 + $0x128] sm:$0xff]
    %v841 = vld [vmem:[#allocation4 + $0x130] sm:$0xff]
    %v842 = vld [vmem:[#allocation4 + $0x138] sm:$0xff]
    %v843 = vld [vmem:[#allocation4 + $0x140] sm:$0xff]
    %v844 = vld [vmem:[#allocation4 + $0x148] sm:$0xff]
    %v845 = vld [vmem:[#allocation4 + $0x150] sm:$0xff]
    %v846 = vld [vmem:[#allocation4 + $0x158] sm:$0xff]
    %v847 = vld [vmem:[#allocation4 + $0x160] sm:$0xff]
    %v848 = vld [vmem:[#allocation4 + $0x168] sm:$0xff]
    %v849 = vld [vmem:[#allocation4 + $0x170] sm:$0xff]
    %v850 = vld [vmem:[#allocation4 + $0x178] sm:$0xff]
    %v851 = vld [vmem:[#allocation4 + $0x180] sm:$0xff]
    %v852 = vld [vmem:[#allocation4 + $0x188] sm:$0xff]
    %v853 = vld [vmem:[#allocation4 + $0x190] sm:$0xff]
    %v854 = vld [vmem:[#allocation4 + $0x198] sm:$0xff]
    %v855 = vld [vmem:[#allocation4 + $0x1a0] sm:$0xff]
    %v856 = vld [vmem:[#allocation4 + $0x1a8] sm:$0xff]
    %v857 = vld [vmem:[#allocation4 + $0x1b0] sm:$0xff]
    %v858 = vld [vmem:[#allocation4 + $0x1b8] sm:$0xff]
    %v859 = vld [vmem:[#allocation4 + $0x1c0] sm:$0xff]
    %v860 = vld [vmem:[#allocation4 + $0x1c8] sm:$0xff]
    %v861 = vld [vmem:[#allocation4 + $0x1d0] sm:$0xff]
    %v862 = vld [vmem:[#allocation4 + $0x1d8] sm:$0xff]
    %v863 = vld [vmem:[#allocation4 + $0x1e0] sm:$0xff]
    %v864 = vld [vmem:[#allocation4 + $0x1e8] sm:$0xff]
    %v865 = vld [vmem:[#allocation4 + $0x1f0] sm:$0xff]
    %v866 = vld [vmem:[#allocation4 + $0x1f8] sm:$0xff]
    %v867 = vld [vmem:[#allocation4 + $0x200] sm:$0xff]
    %v868 = vld [vmem:[#allocation4 + $0x208] sm:$0xff]
    %v869 = vld [vmem:[#allocation4 + $0x210] sm:$0xff]
    %v870 = vld [vmem:[#allocation4 + $0x218] sm:$0xff]
    %v871 = vld [vmem:[#allocation4 + $0x220] sm:$0xff]
    %v872 = vld [vmem:[#allocation4 + $0x228] sm:$0xff]
    %v873 = vld [vmem:[#allocation4 + $0x230] sm:$0xff]
    %v874 = vld [vmem:[#allocation4 + $0x238] sm:$0xff]
    %v875 = vld [vmem:[#allocation4 + $0x240] sm:$0xff]
    %v876 = vld [vmem:[#allocation4 + $0x248] sm:$0xff]
    %v877 = vld [vmem:[#allocation4 + $0x250] sm:$0xff]
    %v878 = vld [vmem:[#allocation4 + $0x258] sm:$0xff]
    %v879 = vld [vmem:[#allocation4 + $0x260] sm:$0xff]
    %v880 = vld [vmem:[#allocation4 + $0x268] sm:$0xff]
    %v881 = vld [vmem:[#allocation4 + $0x270] sm:$0xff]
    %v882 = vld [vmem:[#allocation4 + $0x278] sm:$0xff]
    %v883 = vld [vmem:[#allocation4 + $0x280] sm:$0xff]
    %v884 = vld [vmem:[#allocation4 + $0x288] sm:$0xff]
    %v885 = vld [vmem:[#allocation4 + $0x290] sm:$0xff]
    %v886 = vld [vmem:[#allocation4 + $0x298] sm:$0xff]
    %v887 = vld [vmem:[#allocation4 + $0x2a0] sm:$0xff]
    %v888 = vld [vmem:[#allocation4 + $0x2a8] sm:$0xff]
    %v889 = vld [vmem:[#allocation4 + $0x2b0] sm:$0xff]
    %v890 = vld [vmem:[#allocation4 + $0x2b8] sm:$0xff]
    %v891 = vld [vmem:[#allocation4 + $0x2c0] sm:$0xff]
    %v892 = vld [vmem:[#allocation4 + $0x2c8] sm:$0xff]
    %v893 = vld [vmem:[#allocation4 + $0x2d0] sm:$0xff]
    %v894 = vld [vmem:[#allocation4 + $0x2d8] sm:$0xff]
    %v895 = vld [vmem:[#allocation4 + $0x2e0] sm:$0xff]
    %v896 = vld [vmem:[#allocation4 + $0x2e8] sm:$0xff]
    %v897 = vld [vmem:[#allocation4 + $0x2f0] sm:$0xff]
    %v898 = vld [vmem:[#allocation4 + $0x2f8] sm:$0xff]
    %v899 = vld [vmem:[#allocation4 + $0x300] sm:$0xff]
    %v900 = vld [vmem:[#allocation4 + $0x308] sm:$0xff]
    %v901 = vld [vmem:[#allocation4 + $0x310] sm:$0xff]
    %v902 = vld [vmem:[#allocation4 + $0x318] sm:$0xff]
    %v903 = vld [vmem:[#allocation4 + $0x320] sm:$0xff]
    %v904 = vld [vmem:[#allocation4 + $0x328] sm:$0xff]
    %v905 = vld [vmem:[#allocation4 + $0x330] sm:$0xff]
    %v906 = vld [vmem:[#allocation4 + $0x338] sm:$0xff]
    %v907 = vld [vmem:[#allocation4 + $0x340] sm:$0xff]
    %v908 = vld [vmem:[#allocation4 + $0x348] sm:$0xff]
    %v909 = vld [vmem:[#allocation4 + $0x350] sm:$0xff]
    %v910 = vld [vmem:[#allocation4 + $0x358] sm:$0xff]
    %v911 = vld [vmem:[#allocation4 + $0x360] sm:$0xff]
    %v912 = vld [vmem:[#allocation4 + $0x368] sm:$0xff]
    %v913 = vld [vmem:[#allocation4 + $0x370] sm:$0xff]
    %v914 = vld [vmem:[#allocation4 + $0x378] sm:$0xff]
    %v915 = vld [vmem:[#allocation4 + $0x380] sm:$0xff]
    %v916 = vld [vmem:[#allocation4 + $0x388] sm:$0xff]
    %v917 = vld [vmem:[#allocation4 + $0x390] sm:$0xff]
    %v918 = vld [vmem:[#allocation4 + $0x398] sm:$0xff]
    %v919 = vld [vmem:[#allocation4 + $0x3a0] sm:$0xff]
    %v920 = vld [vmem:[#allocation4 + $0x3a8] sm:$0xff]
    %v921 = vld [vmem:[#allocation4 + $0x3b0] sm:$0xff]
    %v922 = vld [vmem:[#allocation4 + $0x3b8] sm:$0xff]
    %v923 = vld [vmem:[#allocation4 + $0x3c0] sm:$0xff]
    %v924 = vld [vmem:[#allocation4 + $0x3c8] sm:$0xff]
    %v925 = vld [vmem:[#allocation4 + $0x3d0] sm:$0xff]
    %v926 = vld [vmem:[#allocation4 + $0x3d8] sm:$0xff]
    %v927 = vld [vmem:[#allocation4 + $0x3e0] sm:$0xff]
    %v928 = vld [vmem:[#allocation4 + $0x3e8] sm:$0xff]
    %v929 = vld [vmem:[#allocation4 + $0x3f0] sm:$0xff]
    %v930 = vld [vmem:[#allocation4 + $0x3f8] sm:$0xff]
    %v931 = vld [vmem:[#allocation4 + $0x400] sm:$0xff]
    %v932 = vld [vmem:[#allocation4 + $0x408] sm:$0xff]
    %v933 = vld [vmem:[#allocation4 + $0x410] sm:$0xff]
    %v934 = vld [vmem:[#allocation4 + $0x418] sm:$0xff]
    %v935 = vld [vmem:[#allocation4 + $0x420] sm:$0xff]
    %v936 = vld [vmem:[#allocation4 + $0x428] sm:$0xff]
    %v937 = vld [vmem:[#allocation4 + $0x430] sm:$0xff]
    %v938 = vld [vmem:[#allocation4 + $0x438] sm:$0xff]
    %v939 = vld [vmem:[#allocation4 + $0x440] sm:$0xff]
    %v940 = vld [vmem:[#allocation4 + $0x448] sm:$0xff]
    %v941 = vld [vmem:[#allocation4 + $0x450] sm:$0xff]
    %v942 = vld [vmem:[#allocation4 + $0x458] sm:$0xff]
    %v943 = vld [vmem:[#allocation4 + $0x460] sm:$0xff]
    %v944 = vld [vmem:[#allocation4 + $0x468] sm:$0xff]
    %v945 = vld [vmem:[#allocation4 + $0x470] sm:$0xff]
    %v946 = vld [vmem:[#allocation4 + $0x478] sm:$0xff]
    %v947 = vld [vmem:[#allocation4 + $0x480] sm:$0xff]
    %v948 = vld [vmem:[#allocation4 + $0x488] sm:$0xff]
    %v949 = vld [vmem:[#allocation4 + $0x490] sm:$0xff]
    %v950 = vld [vmem:[#allocation4 + $0x498] sm:$0xff]
    %v951 = vld [vmem:[#allocation4 + $0x4a0] sm:$0xff]
    %v952 = vld [vmem:[#allocation4 + $0x4a8] sm:$0xff]
    %v953 = vld [vmem:[#allocation4 + $0x4b0] sm:$0xff]
    %v954 = vld [vmem:[#allocation4 + $0x4b8] sm:$0xff]
    %v955 = vld [vmem:[#allocation4 + $0x4c0] sm:$0xff]
    %v956 = vld [vmem:[#allocation4 + $0x4c8] sm:$0xff]
    %v957 = vld [vmem:[#allocation4 + $0x4d0] sm:$0xff]
    %v958 = vld [vmem:[#allocation4 + $0x4d8] sm:$0xff]
    %v959 = vld [vmem:[#allocation4 + $0x4e0] sm:$0xff]
    %v960 = vld [vmem:[#allocation4 + $0x4e8] sm:$0xff]
    %v961 = vld [vmem:[#allocation4 + $0x4f0] sm:$0xff]
    %v962 = vld [vmem:[#allocation4 + $0x4f8] sm:$0xff]
    %v963 = vld [vmem:[#allocation4 + $0x500] sm:$0xff]
    %v964 = vld [vmem:[#allocation4 + $0x508] sm:$0xff]
    %v965 = vld [vmem:[#allocation4 + $0x510] sm:$0xff]
    %v966 = vld [vmem:[#allocation4 + $0x518] sm:$0xff]
    %v967 = vld [vmem:[#allocation4 + $0x520] sm:$0xff]
    %v968 = vld [vmem:[#allocation4 + $0x528] sm:$0xff]
    %v969 = vld [vmem:[#allocation4 + $0x530] sm:$0xff]
    %v970 = vld [vmem:[#allocation4 + $0x538] sm:$0xff]
    %v971 = vld [vmem:[#allocation4 + $0x540] sm:$0xff]
    %v972 = vld [vmem:[#allocation4 + $0x548] sm:$0xff]
    %v973 = vld [vmem:[#allocation4 + $0x550] sm:$0xff]
    %v974 = vld [vmem:[#allocation4 + $0x558] sm:$0xff]
    %v975 = vld [vmem:[#allocation4 + $0x560] sm:$0xff]
    %v976 = vld [vmem:[#allocation4 + $0x568] sm:$0xff]
    %v977 = vld [vmem:[#allocation4 + $0x570] sm:$0xff]
    %v978 = vld [vmem:[#allocation4 + $0x578] sm:$0xff]
    %v979 = vld [vmem:[#allocation4 + $0x580] sm:$0xff]
    %v980 = vld [vmem:[#allocation4 + $0x588] sm:$0xff]
    %v981 = vld [vmem:[#allocation4 + $0x590] sm:$0xff]
    %v982 = vld [vmem:[#allocation4 + $0x598] sm:$0xff]
    %v983 = vld [vmem:[#allocation4 + $0x5a0] sm:$0xff]
    %v984 = vld [vmem:[#allocation4 + $0x5a8] sm:$0xff]
    %v985 = vld [vmem:[#allocation4 + $0x5b0] sm:$0xff]
    %v986 = vld [vmem:[#allocation4 + $0x5b8] sm:$0xff]
    %v987 = vld [vmem:[#allocation4 + $0x5c0] sm:$0xff]
    %v988 = vld [vmem:[#allocation4 + $0x5c8] sm:$0xff]
    %v989 = vld [vmem:[#allocation4 + $0x5d0] sm:$0xff]
    %v990 = vld [vmem:[#allocation4 + $0x5d8] sm:$0xff]
    %v991 = vld [vmem:[#allocation4 + $0x5e0] sm:$0xff]
    %v992 = vld [vmem:[#allocation4 + $0x5e8] sm:$0xff]
    %v993 = vld [vmem:[#allocation4 + $0x5f0] sm:$0xff]
    %v994 = vld [vmem:[#allocation4 + $0x5f8] sm:$0xff]
    %v995 = vld [vmem:[#allocation4 + $0x600] sm:$0xff]
    %v996 = vld [vmem:[#allocation4 + $0x608] sm:$0xff]
    %v997 = vld [vmem:[#allocation4 + $0x610] sm:$0xff]
    %v998 = vld [vmem:[#allocation4 + $0x618] sm:$0xff]
    %v999 = vld [vmem:[#allocation4 + $0x620] sm:$0xff]
    %v1000 = vld [vmem:[#allocation4 + $0x628] sm:$0xff]
    %v1001 = vld [vmem:[#allocation4 + $0x630] sm:$0xff]
    %v1002 = vld [vmem:[#allocation4 + $0x638] sm:$0xff]
    %v1003 = vld [vmem:[#allocation4 + $0x640] sm:$0xff]
    %v1004 = vld [vmem:[#allocation4 + $0x648] sm:$0xff]
    %v1005 = vld [vmem:[#allocation4 + $0x650] sm:$0xff]
    %v1006 = vld [vmem:[#allocation4 + $0x658] sm:$0xff]
    %v1007 = vld [vmem:[#allocation4 + $0x660] sm:$0xff]
    %v1008 = vld [vmem:[#allocation4 + $0x668] sm:$0xff]
    %v1009 = vld [vmem:[#allocation4 + $0x670] sm:$0xff]
    %v1010 = vld [vmem:[#allocation4 + $0x678] sm:$0xff]
    %v1011 = vld [vmem:[#allocation4 + $0x680] sm:$0xff]
    %v1012 = vld [vmem:[#allocation4 + $0x688] sm:$0xff]
    %v1013 = vld [vmem:[#allocation4 + $0x690] sm:$0xff]
    %v1014 = vld [vmem:[#allocation4 + $0x698] sm:$0xff]
    %v1015 = vld [vmem:[#allocation4 + $0x6a0] sm:$0xff]
    %v1016 = vld [vmem:[#allocation4 + $0x6a8] sm:$0xff]
    %v1017 = vld [vmem:[#allocation4 + $0x6b0] sm:$0xff]
    %v1018 = vld [vmem:[#allocation4 + $0x6b8] sm:$0xff]
    %v1019 = vld [vmem:[#allocation4 + $0x6c0] sm:$0xff]
    %v1020 = vld [vmem:[#allocation4 + $0x6c8] sm:$0xff]
    %v1021 = vld [vmem:[#allocation4 + $0x6d0] sm:$0xff]
    %v1022 = vld [vmem:[#allocation4 + $0x6d8] sm:$0xff]
    %v1023 = vld [vmem:[#allocation4 + $0x6e0] sm:$0xff]
    %v1024 = vld [vmem:[#allocation4 + $0x6e8] sm:$0xff]
    %v1025 = vld [vmem:[#allocation4 + $0x6f0] sm:$0xff]
    %v1026 = vld [vmem:[#allocation4 + $0x6f8] sm:$0xff]
    %v1027 = vld [vmem:[#allocation4 + $0x700] sm:$0xff]
    %v1028 = vld [vmem:[#allocation4 + $0x708] sm:$0xff]
    %v1029 = vld [vmem:[#allocation4 + $0x710] sm:$0xff]
    %v1030 = vld [vmem:[#allocation4 + $0x718] sm:$0xff]
    %v1031 = vld [vmem:[#allocation4 + $0x720] sm:$0xff]
    %v1032 = vld [vmem:[#allocation4 + $0x728] sm:$0xff]
    %v1033 = vld [vmem:[#allocation4 + $0x730] sm:$0xff]
    %v1034 = vld [vmem:[#allocation4 + $0x738] sm:$0xff]
    %v1035 = vld [vmem:[#allocation4 + $0x740] sm:$0xff]
    %v1036 = vld [vmem:[#allocation4 + $0x748] sm:$0xff]
    %v1037 = vld [vmem:[#allocation4 + $0x750] sm:$0xff]
    %v1038 = vld [vmem:[#allocation4 + $0x758] sm:$0xff]
    %v1039 = vld [vmem:[#allocation4 + $0x760] sm:$0xff]
    %v1040 = vld [vmem:[#allocation4 + $0x768] sm:$0xff]
    %v1041 = vld [vmem:[#allocation4 + $0x770] sm:$0xff]
    %v1042 = vld [vmem:[#allocation4 + $0x778] sm:$0xff]
    %v1043 = vld [vmem:[#allocation4 + $0x780] sm:$0xff]
    %v1044 = vld [vmem:[#allocation4 + $0x788] sm:$0xff]
    %v1045 = vld [vmem:[#allocation4 + $0x790] sm:$0xff]
    %v1046 = vld [vmem:[#allocation4 + $0x798] sm:$0xff]
    %v1047 = vld [vmem:[#allocation4 + $0x7a0] sm:$0xff]
    %v1048 = vld [vmem:[#allocation4 + $0x7a8] sm:$0xff]
    %v1049 = vld [vmem:[#allocation4 + $0x7b0] sm:$0xff]
    %v1050 = vld [vmem:[#allocation4 + $0x7b8] sm:$0xff]
    %v1051 = vld [vmem:[#allocation4 + $0x7c0] sm:$0xff]
    %v1052 = vld [vmem:[#allocation4 + $0x7c8] sm:$0xff]
    %v1053 = vld [vmem:[#allocation4 + $0x7d0] sm:$0xff]
    %v1054 = vld [vmem:[#allocation4 + $0x7d8] sm:$0xff]
    %v1055 = vld [vmem:[#allocation4 + $0x7e0] sm:$0xff]
    %v1056 = vld [vmem:[#allocation4 + $0x7e8] sm:$0xff]
    %v1057 = vld [vmem:[#allocation4 + $0x7f0] sm:$0xff]
    %v1058 = vld [vmem:[#allocation4 + $0x7f8] sm:$0xff]
    %v1059 = vpack.c.bf16 %v747, %v739
    %v1060 = vpack.c.bf16 %v748, %v740
    %v1061 = vpack.c.bf16 %v749, %v741
    %v1062 = vpack.c.bf16 %v750, %v742
    %v1063 = vpack.c.bf16 %v751, %v743
    %v1064 = vpack.c.bf16 %v752, %v744
    %v1065 = vpack.c.bf16 %v753, %v745
    %v1066 = vpack.c.bf16 %v754, %v746
    %v1067 = vpack.c.bf16 %v763, %v755
    %v1068 = vpack.c.bf16 %v764, %v756
    %v1069 = vpack.c.bf16 %v765, %v757
    %v1070 = vpack.c.bf16 %v766, %v758
    %v1071 = vpack.c.bf16 %v767, %v759
    %v1072 = vpack.c.bf16 %v768, %v760
    %v1073 = vpack.c.bf16 %v769, %v761
    %v1074 = vpack.c.bf16 %v770, %v762
    %v1075 = vpack.c.bf16 %v779, %v771
    %v1076 = vpack.c.bf16 %v780, %v772
    %v1077 = vpack.c.bf16 %v781, %v773
    %v1078 = vpack.c.bf16 %v782, %v774
    %v1079 = vpack.c.bf16 %v783, %v775
    %v1080 = vpack.c.bf16 %v784, %v776
    %v1081 = vpack.c.bf16 %v785, %v777
    %v1082 = vpack.c.bf16 %v786, %v778
    %v1083 = vpack.c.bf16 %v795, %v787
    %v1084 = vpack.c.bf16 %v796, %v788
    %v1085 = vpack.c.bf16 %v797, %v789
    %v1086 = vpack.c.bf16 %v798, %v790
    %v1087 = vpack.c.bf16 %v799, %v791
    %v1088 = vpack.c.bf16 %v800, %v792
    %v1089 = vpack.c.bf16 %v801, %v793
    %v1090 = vpack.c.bf16 %v802, %v794
    %v1091 = vld [vmem:[%s9 + $0x8] sm:$0xf]
    %v1093 = vlaneseq
    %v1094 = vshrl.u32 %v1093, 7
    %v1095 = vsub.s32 0, %v1094
    %v1096 = vrot.slane %v1091, %v1095
    %v1097 = vlaneseq
    %v1098 = vshrl.u32 %v1097, 7
    %v1099 = vsub.s32 1, %v1098
    %v1100 = vrot.slane %v1091, %v1099
    %v1101 = vlaneseq
    %v1102 = vshrl.u32 %v1101, 7
    %v1103 = vsub.s32 2, %v1102
    %v1104 = vrot.slane %v1091, %v1103
    %v1105 = vlaneseq
    %v1106 = vshrl.u32 %v1105, 7
    %v1107 = vsub.s32 3, %v1106
    %v1108 = vrot.slane %v1091, %v1107
    %v1369 = vunpack.c.l.b16 %v803
    %v1370 = vunpack.c.h.b16 %v803
    %v1371 = vunpack.c.l.b16 %v804
    %v1372 = vunpack.c.h.b16 %v804
    %v1373 = vunpack.c.l.b16 %v805
    %v1374 = vunpack.c.h.b16 %v805
    %v1375 = vunpack.c.l.b16 %v806
    %v1376 = vunpack.c.h.b16 %v806
    %v1377 = vunpack.c.l.b16 %v807
    %v1378 = vunpack.c.h.b16 %v807
    %v1379 = vunpack.c.l.b16 %v808
    %v1380 = vunpack.c.h.b16 %v808
    %v1381 = vunpack.c.l.b16 %v809
    %v1382 = vunpack.c.h.b16 %v809
    %v1383 = vunpack.c.l.b16 %v810
    %v1384 = vunpack.c.h.b16 %v810
    %v1385 = vunpack.c.l.b16 %v811
    %v1386 = vunpack.c.h.b16 %v811
    %v1387 = vunpack.c.l.b16 %v812
    %v1388 = vunpack.c.h.b16 %v812
    %v1389 = vunpack.c.l.b16 %v813
    %v1390 = vunpack.c.h.b16 %v813
    %v1391 = vunpack.c.l.b16 %v814
    %v1392 = vunpack.c.h.b16 %v814
    %v1393 = vunpack.c.l.b16 %v815
    %v1394 = vunpack.c.h.b16 %v815
    %v1395 = vunpack.c.l.b16 %v816
    %v1396 = vunpack.c.h.b16 %v816
    %v1397 = vunpack.c.l.b16 %v817
    %v1398 = vunpack.c.h.b16 %v817
    %v1399 = vunpack.c.l.b16 %v818
    %v1400 = vunpack.c.h.b16 %v818
    %v1401 = vunpack.c.l.b16 %v819
    %v1402 = vunpack.c.h.b16 %v819
    %v1403 = vunpack.c.l.b16 %v820
    %v1404 = vunpack.c.h.b16 %v820
    %v1405 = vunpack.c.l.b16 %v821
    %v1406 = vunpack.c.h.b16 %v821
    %v1407 = vunpack.c.l.b16 %v822
    %v1408 = vunpack.c.h.b16 %v822
    %v1409 = vunpack.c.l.b16 %v823
    %v1410 = vunpack.c.h.b16 %v823
    %v1411 = vunpack.c.l.b16 %v824
    %v1412 = vunpack.c.h.b16 %v824
    %v1413 = vunpack.c.l.b16 %v825
    %v1414 = vunpack.c.h.b16 %v825
    %v1415 = vunpack.c.l.b16 %v826
    %v1416 = vunpack.c.h.b16 %v826
    %v1417 = vunpack.c.l.b16 %v827
    %v1418 = vunpack.c.h.b16 %v827
    %v1419 = vunpack.c.l.b16 %v828
    %v1420 = vunpack.c.h.b16 %v828
    %v1421 = vunpack.c.l.b16 %v829
    %v1422 = vunpack.c.h.b16 %v829
    %v1423 = vunpack.c.l.b16 %v830
    %v1424 = vunpack.c.h.b16 %v830
    %v1425 = vunpack.c.l.b16 %v831
    %v1426 = vunpack.c.h.b16 %v831
    %v1427 = vunpack.c.l.b16 %v832
    %v1428 = vunpack.c.h.b16 %v832
    %v1429 = vunpack.c.l.b16 %v833
    %v1430 = vunpack.c.h.b16 %v833
    %v1431 = vunpack.c.l.b16 %v834
    %v1432 = vunpack.c.h.b16 %v834
    %v1433 = vunpack.c.l.b16 %v835
    %v1434 = vunpack.c.h.b16 %v835
    %v1435 = vunpack.c.l.b16 %v836
    %v1436 = vunpack.c.h.b16 %v836
    %v1437 = vunpack.c.l.b16 %v837
    %v1438 = vunpack.c.h.b16 %v837
    %v1439 = vunpack.c.l.b16 %v838
    %v1440 = vunpack.c.h.b16 %v838
    %v1441 = vunpack.c.l.b16 %v839
    %v1442 = vunpack.c.h.b16 %v839
    %v1443 = vunpack.c.l.b16 %v840
    %v1444 = vunpack.c.h.b16 %v840
    %v1445 = vunpack.c.l.b16 %v841
    %v1446 = vunpack.c.h.b16 %v841
    %v1447 = vunpack.c.l.b16 %v842
    %v1448 = vunpack.c.h.b16 %v842
    %v1449 = vunpack.c.l.b16 %v843
    %v1450 = vunpack.c.h.b16 %v843
    %v1451 = vunpack.c.l.b16 %v844
    %v1452 = vunpack.c.h.b16 %v844
    %v1453 = vunpack.c.l.b16 %v845
    %v1454 = vunpack.c.h.b16 %v845
    %v1455 = vunpack.c.l.b16 %v846
    %v1456 = vunpack.c.h.b16 %v846
    %v1457 = vunpack.c.l.b16 %v847
    %v1458 = vunpack.c.h.b16 %v847
    %v1459 = vunpack.c.l.b16 %v848
    %v1460 = vunpack.c.h.b16 %v848
    %v1461 = vunpack.c.l.b16 %v849
    %v1462 = vunpack.c.h.b16 %v849
    %v1463 = vunpack.c.l.b16 %v850
    %v1464 = vunpack.c.h.b16 %v850
    %v1465 = vunpack.c.l.b16 %v851
    %v1466 = vunpack.c.h.b16 %v851
    %v1467 = vunpack.c.l.b16 %v852
    %v1468 = vunpack.c.h.b16 %v852
    %v1469 = vunpack.c.l.b16 %v853
    %v1470 = vunpack.c.h.b16 %v853
    %v1471 = vunpack.c.l.b16 %v854
    %v1472 = vunpack.c.h.b16 %v854
    %v1473 = vunpack.c.l.b16 %v855
    %v1474 = vunpack.c.h.b16 %v855
    %v1475 = vunpack.c.l.b16 %v856
    %v1476 = vunpack.c.h.b16 %v856
    %v1477 = vunpack.c.l.b16 %v857
    %v1478 = vunpack.c.h.b16 %v857
    %v1479 = vunpack.c.l.b16 %v858
    %v1480 = vunpack.c.h.b16 %v858
    %v1481 = vunpack.c.l.b16 %v859
    %v1482 = vunpack.c.h.b16 %v859
    %v1483 = vunpack.c.l.b16 %v860
    %v1484 = vunpack.c.h.b16 %v860
    %v1485 = vunpack.c.l.b16 %v861
    %v1486 = vunpack.c.h.b16 %v861
    %v1487 = vunpack.c.l.b16 %v862
    %v1488 = vunpack.c.h.b16 %v862
    %v1489 = vunpack.c.l.b16 %v863
    %v1490 = vunpack.c.h.b16 %v863
    %v1491 = vunpack.c.l.b16 %v864
    %v1492 = vunpack.c.h.b16 %v864
    %v1493 = vunpack.c.l.b16 %v865
    %v1494 = vunpack.c.h.b16 %v865
    %v1495 = vunpack.c.l.b16 %v866
    %v1496 = vunpack.c.h.b16 %v866
    %v1497 = vunpack.c.l.b16 %v867
    %v1498 = vunpack.c.h.b16 %v867
    %v1499 = vunpack.c.l.b16 %v868
    %v1500 = vunpack.c.h.b16 %v868
    %v1501 = vunpack.c.l.b16 %v869
    %v1502 = vunpack.c.h.b16 %v869
    %v1503 = vunpack.c.l.b16 %v870
    %v1504 = vunpack.c.h.b16 %v870
    %v1505 = vunpack.c.l.b16 %v871
    %v1506 = vunpack.c.h.b16 %v871
    %v1507 = vunpack.c.l.b16 %v872
    %v1508 = vunpack.c.h.b16 %v872
    %v1509 = vunpack.c.l.b16 %v873
    %v1510 = vunpack.c.h.b16 %v873
    %v1511 = vunpack.c.l.b16 %v874
    %v1512 = vunpack.c.h.b16 %v874
    %v1513 = vunpack.c.l.b16 %v875
    %v1514 = vunpack.c.h.b16 %v875
    %v1515 = vunpack.c.l.b16 %v876
    %v1516 = vunpack.c.h.b16 %v876
    %v1517 = vunpack.c.l.b16 %v877
    %v1518 = vunpack.c.h.b16 %v877
    %v1519 = vunpack.c.l.b16 %v878
    %v1520 = vunpack.c.h.b16 %v878
    %v1521 = vunpack.c.l.b16 %v879
    %v1522 = vunpack.c.h.b16 %v879
    %v1523 = vunpack.c.l.b16 %v880
    %v1524 = vunpack.c.h.b16 %v880
    %v1525 = vunpack.c.l.b16 %v881
    %v1526 = vunpack.c.h.b16 %v881
    %v1527 = vunpack.c.l.b16 %v882
    %v1528 = vunpack.c.h.b16 %v882
    %v1529 = vunpack.c.l.b16 %v883
    %v1530 = vunpack.c.h.b16 %v883
    %v1531 = vunpack.c.l.b16 %v884
    %v1532 = vunpack.c.h.b16 %v884
    %v1533 = vunpack.c.l.b16 %v885
    %v1534 = vunpack.c.h.b16 %v885
    %v1535 = vunpack.c.l.b16 %v886
    %v1536 = vunpack.c.h.b16 %v886
    %v1537 = vunpack.c.l.b16 %v887
    %v1538 = vunpack.c.h.b16 %v887
    %v1539 = vunpack.c.l.b16 %v888
    %v1540 = vunpack.c.h.b16 %v888
    %v1541 = vunpack.c.l.b16 %v889
    %v1542 = vunpack.c.h.b16 %v889
    %v1543 = vunpack.c.l.b16 %v890
    %v1544 = vunpack.c.h.b16 %v890
    %v1545 = vunpack.c.l.b16 %v891
    %v1546 = vunpack.c.h.b16 %v891
    %v1547 = vunpack.c.l.b16 %v892
    %v1548 = vunpack.c.h.b16 %v892
    %v1549 = vunpack.c.l.b16 %v893
    %v1550 = vunpack.c.h.b16 %v893
    %v1551 = vunpack.c.l.b16 %v894
    %v1552 = vunpack.c.h.b16 %v894
    %v1553 = vunpack.c.l.b16 %v895
    %v1554 = vunpack.c.h.b16 %v895
    %v1555 = vunpack.c.l.b16 %v896
    %v1556 = vunpack.c.h.b16 %v896
    %v1557 = vunpack.c.l.b16 %v897
    %v1558 = vunpack.c.h.b16 %v897
    %v1559 = vunpack.c.l.b16 %v898
    %v1560 = vunpack.c.h.b16 %v898
    %v1561 = vunpack.c.l.b16 %v899
    %v1562 = vunpack.c.h.b16 %v899
    %v1563 = vunpack.c.l.b16 %v900
    %v1564 = vunpack.c.h.b16 %v900
    %v1565 = vunpack.c.l.b16 %v901
    %v1566 = vunpack.c.h.b16 %v901
    %v1567 = vunpack.c.l.b16 %v902
    %v1568 = vunpack.c.h.b16 %v902
    %v1569 = vunpack.c.l.b16 %v903
    %v1570 = vunpack.c.h.b16 %v903
    %v1571 = vunpack.c.l.b16 %v904
    %v1572 = vunpack.c.h.b16 %v904
    %v1573 = vunpack.c.l.b16 %v905
    %v1574 = vunpack.c.h.b16 %v905
    %v1575 = vunpack.c.l.b16 %v906
    %v1576 = vunpack.c.h.b16 %v906
    %v1577 = vunpack.c.l.b16 %v907
    %v1578 = vunpack.c.h.b16 %v907
    %v1579 = vunpack.c.l.b16 %v908
    %v1580 = vunpack.c.h.b16 %v908
    %v1581 = vunpack.c.l.b16 %v909
    %v1582 = vunpack.c.h.b16 %v909
    %v1583 = vunpack.c.l.b16 %v910
    %v1584 = vunpack.c.h.b16 %v910
    %v1585 = vunpack.c.l.b16 %v911
    %v1586 = vunpack.c.h.b16 %v911
    %v1587 = vunpack.c.l.b16 %v912
    %v1588 = vunpack.c.h.b16 %v912
    %v1589 = vunpack.c.l.b16 %v913
    %v1590 = vunpack.c.h.b16 %v913
    %v1591 = vunpack.c.l.b16 %v914
    %v1592 = vunpack.c.h.b16 %v914
    %v1593 = vunpack.c.l.b16 %v915
    %v1594 = vunpack.c.h.b16 %v915
    %v1595 = vunpack.c.l.b16 %v916
    %v1596 = vunpack.c.h.b16 %v916
    %v1597 = vunpack.c.l.b16 %v917
    %v1598 = vunpack.c.h.b16 %v917
    %v1599 = vunpack.c.l.b16 %v918
    %v1600 = vunpack.c.h.b16 %v918
    %v1601 = vunpack.c.l.b16 %v919
    %v1602 = vunpack.c.h.b16 %v919
    %v1603 = vunpack.c.l.b16 %v920
    %v1604 = vunpack.c.h.b16 %v920
    %v1605 = vunpack.c.l.b16 %v921
    %v1606 = vunpack.c.h.b16 %v921
    %v1607 = vunpack.c.l.b16 %v922
    %v1608 = vunpack.c.h.b16 %v922
    %v1609 = vunpack.c.l.b16 %v923
    %v1610 = vunpack.c.h.b16 %v923
    %v1611 = vunpack.c.l.b16 %v924
    %v1612 = vunpack.c.h.b16 %v924
    %v1613 = vunpack.c.l.b16 %v925
    %v1614 = vunpack.c.h.b16 %v925
    %v1615 = vunpack.c.l.b16 %v926
    %v1616 = vunpack.c.h.b16 %v926
    %v1617 = vunpack.c.l.b16 %v927
    %v1618 = vunpack.c.h.b16 %v927
    %v1619 = vunpack.c.l.b16 %v928
    %v1620 = vunpack.c.h.b16 %v928
    %v1621 = vunpack.c.l.b16 %v929
    %v1622 = vunpack.c.h.b16 %v929
    %v1623 = vunpack.c.l.b16 %v930
    %v1624 = vunpack.c.h.b16 %v930
    %v1625 = vunpack.c.l.b16 %v931
    %v1626 = vunpack.c.h.b16 %v931
    %v1627 = vunpack.c.l.b16 %v932
    %v1628 = vunpack.c.h.b16 %v932
    %v1629 = vunpack.c.l.b16 %v933
    %v1630 = vunpack.c.h.b16 %v933
    %v1631 = vunpack.c.l.b16 %v934
    %v1632 = vunpack.c.h.b16 %v934
    %v1633 = vunpack.c.l.b16 %v935
    %v1634 = vunpack.c.h.b16 %v935
    %v1635 = vunpack.c.l.b16 %v936
    %v1636 = vunpack.c.h.b16 %v936
    %v1637 = vunpack.c.l.b16 %v937
    %v1638 = vunpack.c.h.b16 %v937
    %v1639 = vunpack.c.l.b16 %v938
    %v1640 = vunpack.c.h.b16 %v938
    %v1641 = vunpack.c.l.b16 %v939
    %v1642 = vunpack.c.h.b16 %v939
    %v1643 = vunpack.c.l.b16 %v940
    %v1644 = vunpack.c.h.b16 %v940
    %v1645 = vunpack.c.l.b16 %v941
    %v1646 = vunpack.c.h.b16 %v941
    %v1647 = vunpack.c.l.b16 %v942
    %v1648 = vunpack.c.h.b16 %v942
    %v1649 = vunpack.c.l.b16 %v943
    %v1650 = vunpack.c.h.b16 %v943
    %v1651 = vunpack.c.l.b16 %v944
    %v1652 = vunpack.c.h.b16 %v944
    %v1653 = vunpack.c.l.b16 %v945
    %v1654 = vunpack.c.h.b16 %v945
    %v1655 = vunpack.c.l.b16 %v946
    %v1656 = vunpack.c.h.b16 %v946
    %v1657 = vunpack.c.l.b16 %v947
    %v1658 = vunpack.c.h.b16 %v947
    %v1659 = vunpack.c.l.b16 %v948
    %v1660 = vunpack.c.h.b16 %v948
    %v1661 = vunpack.c.l.b16 %v949
    %v1662 = vunpack.c.h.b16 %v949
    %v1663 = vunpack.c.l.b16 %v950
    %v1664 = vunpack.c.h.b16 %v950
    %v1665 = vunpack.c.l.b16 %v951
    %v1666 = vunpack.c.h.b16 %v951
    %v1667 = vunpack.c.l.b16 %v952
    %v1668 = vunpack.c.h.b16 %v952
    %v1669 = vunpack.c.l.b16 %v953
    %v1670 = vunpack.c.h.b16 %v953
    %v1671 = vunpack.c.l.b16 %v954
    %v1672 = vunpack.c.h.b16 %v954
    %v1673 = vunpack.c.l.b16 %v955
    %v1674 = vunpack.c.h.b16 %v955
    %v1675 = vunpack.c.l.b16 %v956
    %v1676 = vunpack.c.h.b16 %v956
    %v1677 = vunpack.c.l.b16 %v957
    %v1678 = vunpack.c.h.b16 %v957
    %v1679 = vunpack.c.l.b16 %v958
    %v1680 = vunpack.c.h.b16 %v958
    %v1681 = vunpack.c.l.b16 %v959
    %v1682 = vunpack.c.h.b16 %v959
    %v1683 = vunpack.c.l.b16 %v960
    %v1684 = vunpack.c.h.b16 %v960
    %v1685 = vunpack.c.l.b16 %v961
    %v1686 = vunpack.c.h.b16 %v961
    %v1687 = vunpack.c.l.b16 %v962
    %v1688 = vunpack.c.h.b16 %v962
    %v1689 = vunpack.c.l.b16 %v963
    %v1690 = vunpack.c.h.b16 %v963
    %v1691 = vunpack.c.l.b16 %v964
    %v1692 = vunpack.c.h.b16 %v964
    %v1693 = vunpack.c.l.b16 %v965
    %v1694 = vunpack.c.h.b16 %v965
    %v1695 = vunpack.c.l.b16 %v966
    %v1696 = vunpack.c.h.b16 %v966
    %v1697 = vunpack.c.l.b16 %v967
    %v1698 = vunpack.c.h.b16 %v967
    %v1699 = vunpack.c.l.b16 %v968
    %v1700 = vunpack.c.h.b16 %v968
    %v1701 = vunpack.c.l.b16 %v969
    %v1702 = vunpack.c.h.b16 %v969
    %v1703 = vunpack.c.l.b16 %v970
    %v1704 = vunpack.c.h.b16 %v970
    %v1705 = vunpack.c.l.b16 %v971
    %v1706 = vunpack.c.h.b16 %v971
    %v1707 = vunpack.c.l.b16 %v972
    %v1708 = vunpack.c.h.b16 %v972
    %v1709 = vunpack.c.l.b16 %v973
    %v1710 = vunpack.c.h.b16 %v973
    %v1711 = vunpack.c.l.b16 %v974
    %v1712 = vunpack.c.h.b16 %v974
    %v1713 = vunpack.c.l.b16 %v975
    %v1714 = vunpack.c.h.b16 %v975
    %v1715 = vunpack.c.l.b16 %v976
    %v1716 = vunpack.c.h.b16 %v976
    %v1717 = vunpack.c.l.b16 %v977
    %v1718 = vunpack.c.h.b16 %v977
    %v1719 = vunpack.c.l.b16 %v978
    %v1720 = vunpack.c.h.b16 %v978
    %v1721 = vunpack.c.l.b16 %v979
    %v1722 = vunpack.c.h.b16 %v979
    %v1723 = vunpack.c.l.b16 %v980
    %v1724 = vunpack.c.h.b16 %v980
    %v1725 = vunpack.c.l.b16 %v981
    %v1726 = vunpack.c.h.b16 %v981
    %v1727 = vunpack.c.l.b16 %v982
    %v1728 = vunpack.c.h.b16 %v982
    %v1729 = vunpack.c.l.b16 %v983
    %v1730 = vunpack.c.h.b16 %v983
    %v1731 = vunpack.c.l.b16 %v984
    %v1732 = vunpack.c.h.b16 %v984
    %v1733 = vunpack.c.l.b16 %v985
    %v1734 = vunpack.c.h.b16 %v985
    %v1735 = vunpack.c.l.b16 %v986
    %v1736 = vunpack.c.h.b16 %v986
    %v1737 = vunpack.c.l.b16 %v987
    %v1738 = vunpack.c.h.b16 %v987
    %v1739 = vunpack.c.l.b16 %v988
    %v1740 = vunpack.c.h.b16 %v988
    %v1741 = vunpack.c.l.b16 %v989
    %v1742 = vunpack.c.h.b16 %v989
    %v1743 = vunpack.c.l.b16 %v990
    %v1744 = vunpack.c.h.b16 %v990
    %v1745 = vunpack.c.l.b16 %v991
    %v1746 = vunpack.c.h.b16 %v991
    %v1747 = vunpack.c.l.b16 %v992
    %v1748 = vunpack.c.h.b16 %v992
    %v1749 = vunpack.c.l.b16 %v993
    %v1750 = vunpack.c.h.b16 %v993
    %v1751 = vunpack.c.l.b16 %v994
    %v1752 = vunpack.c.h.b16 %v994
    %v1753 = vunpack.c.l.b16 %v995
    %v1754 = vunpack.c.h.b16 %v995
    %v1755 = vunpack.c.l.b16 %v996
    %v1756 = vunpack.c.h.b16 %v996
    %v1757 = vunpack.c.l.b16 %v997
    %v1758 = vunpack.c.h.b16 %v997
    %v1759 = vunpack.c.l.b16 %v998
    %v1760 = vunpack.c.h.b16 %v998
    %v1761 = vunpack.c.l.b16 %v999
    %v1762 = vunpack.c.h.b16 %v999
    %v1763 = vunpack.c.l.b16 %v1000
    %v1764 = vunpack.c.h.b16 %v1000
    %v1765 = vunpack.c.l.b16 %v1001
    %v1766 = vunpack.c.h.b16 %v1001
    %v1767 = vunpack.c.l.b16 %v1002
    %v1768 = vunpack.c.h.b16 %v1002
    %v1769 = vunpack.c.l.b16 %v1003
    %v1770 = vunpack.c.h.b16 %v1003
    %v1771 = vunpack.c.l.b16 %v1004
    %v1772 = vunpack.c.h.b16 %v1004
    %v1773 = vunpack.c.l.b16 %v1005
    %v1774 = vunpack.c.h.b16 %v1005
    %v1775 = vunpack.c.l.b16 %v1006
    %v1776 = vunpack.c.h.b16 %v1006
    %v1777 = vunpack.c.l.b16 %v1007
    %v1778 = vunpack.c.h.b16 %v1007
    %v1779 = vunpack.c.l.b16 %v1008
    %v1780 = vunpack.c.h.b16 %v1008
    %v1781 = vunpack.c.l.b16 %v1009
    %v1782 = vunpack.c.h.b16 %v1009
    %v1783 = vunpack.c.l.b16 %v1010
    %v1784 = vunpack.c.h.b16 %v1010
    %v1785 = vunpack.c.l.b16 %v1011
    %v1786 = vunpack.c.h.b16 %v1011
    %v1787 = vunpack.c.l.b16 %v1012
    %v1788 = vunpack.c.h.b16 %v1012
    %v1789 = vunpack.c.l.b16 %v1013
    %v1790 = vunpack.c.h.b16 %v1013
    %v1791 = vunpack.c.l.b16 %v1014
    %v1792 = vunpack.c.h.b16 %v1014
    %v1793 = vunpack.c.l.b16 %v1015
    %v1794 = vunpack.c.h.b16 %v1015
    %v1795 = vunpack.c.l.b16 %v1016
    %v1796 = vunpack.c.h.b16 %v1016
    %v1797 = vunpack.c.l.b16 %v1017
    %v1798 = vunpack.c.h.b16 %v1017
    %v1799 = vunpack.c.l.b16 %v1018
    %v1800 = vunpack.c.h.b16 %v1018
    %v1801 = vunpack.c.l.b16 %v1019
    %v1802 = vunpack.c.h.b16 %v1019
    %v1803 = vunpack.c.l.b16 %v1020
    %v1804 = vunpack.c.h.b16 %v1020
    %v1805 = vunpack.c.l.b16 %v1021
    %v1806 = vunpack.c.h.b16 %v1021
    %v1807 = vunpack.c.l.b16 %v1022
    %v1808 = vunpack.c.h.b16 %v1022
    %v1809 = vunpack.c.l.b16 %v1023
    %v1810 = vunpack.c.h.b16 %v1023
    %v1811 = vunpack.c.l.b16 %v1024
    %v1812 = vunpack.c.h.b16 %v1024
    %v1813 = vunpack.c.l.b16 %v1025
    %v1814 = vunpack.c.h.b16 %v1025
    %v1815 = vunpack.c.l.b16 %v1026
    %v1816 = vunpack.c.h.b16 %v1026
    %v1817 = vunpack.c.l.b16 %v1027
    %v1818 = vunpack.c.h.b16 %v1027
    %v1819 = vunpack.c.l.b16 %v1028
    %v1820 = vunpack.c.h.b16 %v1028
    %v1821 = vunpack.c.l.b16 %v1029
    %v1822 = vunpack.c.h.b16 %v1029
    %v1823 = vunpack.c.l.b16 %v1030
    %v1824 = vunpack.c.h.b16 %v1030
    %v1825 = vunpack.c.l.b16 %v1031
    %v1826 = vunpack.c.h.b16 %v1031
    %v1827 = vunpack.c.l.b16 %v1032
    %v1828 = vunpack.c.h.b16 %v1032
    %v1829 = vunpack.c.l.b16 %v1033
    %v1830 = vunpack.c.h.b16 %v1033
    %v1831 = vunpack.c.l.b16 %v1034
    %v1832 = vunpack.c.h.b16 %v1034
    %v1833 = vunpack.c.l.b16 %v1035
    %v1834 = vunpack.c.h.b16 %v1035
    %v1835 = vunpack.c.l.b16 %v1036
    %v1836 = vunpack.c.h.b16 %v1036
    %v1837 = vunpack.c.l.b16 %v1037
    %v1838 = vunpack.c.h.b16 %v1037
    %v1839 = vunpack.c.l.b16 %v1038
    %v1840 = vunpack.c.h.b16 %v1038
    %v1841 = vunpack.c.l.b16 %v1039
    %v1842 = vunpack.c.h.b16 %v1039
    %v1843 = vunpack.c.l.b16 %v1040
    %v1844 = vunpack.c.h.b16 %v1040
    %v1845 = vunpack.c.l.b16 %v1041
    %v1846 = vunpack.c.h.b16 %v1041
    %v1847 = vunpack.c.l.b16 %v1042
    %v1848 = vunpack.c.h.b16 %v1042
    %v1849 = vunpack.c.l.b16 %v1043
    %v1850 = vunpack.c.h.b16 %v1043
    %v1851 = vunpack.c.l.b16 %v1044
    %v1852 = vunpack.c.h.b16 %v1044
    %v1853 = vunpack.c.l.b16 %v1045
    %v1854 = vunpack.c.h.b16 %v1045
    %v1855 = vunpack.c.l.b16 %v1046
    %v1856 = vunpack.c.h.b16 %v1046
    %v1857 = vunpack.c.l.b16 %v1047
    %v1858 = vunpack.c.h.b16 %v1047
    %v1859 = vunpack.c.l.b16 %v1048
    %v1860 = vunpack.c.h.b16 %v1048
    %v1861 = vunpack.c.l.b16 %v1049
    %v1862 = vunpack.c.h.b16 %v1049
    %v1863 = vunpack.c.l.b16 %v1050
    %v1864 = vunpack.c.h.b16 %v1050
    %v1865 = vunpack.c.l.b16 %v1051
    %v1866 = vunpack.c.h.b16 %v1051
    %v1867 = vunpack.c.l.b16 %v1052
    %v1868 = vunpack.c.h.b16 %v1052
    %v1869 = vunpack.c.l.b16 %v1053
    %v1870 = vunpack.c.h.b16 %v1053
    %v1871 = vunpack.c.l.b16 %v1054
    %v1872 = vunpack.c.h.b16 %v1054
    %v1873 = vunpack.c.l.b16 %v1055
    %v1874 = vunpack.c.h.b16 %v1055
    %v1875 = vunpack.c.l.b16 %v1056
    %v1876 = vunpack.c.h.b16 %v1056
    %v1877 = vunpack.c.l.b16 %v1057
    %v1878 = vunpack.c.h.b16 %v1057
    %v1879 = vunpack.c.l.b16 %v1058
    %v1880 = vunpack.c.h.b16 %v1058
    %v1881 = vpack.c.b16 %v1373, %v1369
    %v1882 = vpack.c.b16 %v1374, %v1370
    %v1883 = vpack.c.b16 %v1375, %v1371
    %v1884 = vpack.c.b16 %v1376, %v1372
    %v1885 = vpack.c.b16 %v1381, %v1377
    %v1886 = vpack.c.b16 %v1382, %v1378
    %v1887 = vpack.c.b16 %v1383, %v1379
    %v1888 = vpack.c.b16 %v1384, %v1380
    %v1889 = vpack.c.b16 %v1389, %v1385
    %v1890 = vpack.c.b16 %v1390, %v1386
    %v1891 = vpack.c.b16 %v1391, %v1387
    %v1892 = vpack.c.b16 %v1392, %v1388
    %v1893 = vpack.c.b16 %v1397, %v1393
    %v1894 = vpack.c.b16 %v1398, %v1394
    %v1895 = vpack.c.b16 %v1399, %v1395
    %v1896 = vpack.c.b16 %v1400, %v1396
    %v1897 = vpack.c.b16 %v1405, %v1401
    %v1898 = vpack.c.b16 %v1406, %v1402
    %v1899 = vpack.c.b16 %v1407, %v1403
    %v1900 = vpack.c.b16 %v1408, %v1404
    %v1901 = vpack.c.b16 %v1413, %v1409
    %v1902 = vpack.c.b16 %v1414, %v1410
    %v1903 = vpack.c.b16 %v1415, %v1411
    %v1904 = vpack.c.b16 %v1416, %v1412
    %v1905 = vpack.c.b16 %v1421, %v1417
    %v1906 = vpack.c.b16 %v1422, %v1418
    %v1907 = vpack.c.b16 %v1423, %v1419
    %v1908 = vpack.c.b16 %v1424, %v1420
    %v1909 = vpack.c.b16 %v1429, %v1425
    %v1910 = vpack.c.b16 %v1430, %v1426
    %v1911 = vpack.c.b16 %v1431, %v1427
    %v1912 = vpack.c.b16 %v1432, %v1428
    %v1913 = vpack.c.b16 %v1437, %v1433
    %v1914 = vpack.c.b16 %v1438, %v1434
    %v1915 = vpack.c.b16 %v1439, %v1435
    %v1916 = vpack.c.b16 %v1440, %v1436
    %v1917 = vpack.c.b16 %v1445, %v1441
    %v1918 = vpack.c.b16 %v1446, %v1442
    %v1919 = vpack.c.b16 %v1447, %v1443
    %v1920 = vpack.c.b16 %v1448, %v1444
    %v1921 = vpack.c.b16 %v1453, %v1449
    %v1922 = vpack.c.b16 %v1454, %v1450
    %v1923 = vpack.c.b16 %v1455, %v1451
    %v1924 = vpack.c.b16 %v1456, %v1452
    %v1925 = vpack.c.b16 %v1461, %v1457
    %v1926 = vpack.c.b16 %v1462, %v1458
    %v1927 = vpack.c.b16 %v1463, %v1459
    %v1928 = vpack.c.b16 %v1464, %v1460
    %v1929 = vpack.c.b16 %v1469, %v1465
    %v1930 = vpack.c.b16 %v1470, %v1466
    %v1931 = vpack.c.b16 %v1471, %v1467
    %v1932 = vpack.c.b16 %v1472, %v1468
    %v1933 = vpack.c.b16 %v1477, %v1473
    %v1934 = vpack.c.b16 %v1478, %v1474
    %v1935 = vpack.c.b16 %v1479, %v1475
    %v1936 = vpack.c.b16 %v1480, %v1476
    %v1937 = vpack.c.b16 %v1485, %v1481
    %v1938 = vpack.c.b16 %v1486, %v1482
    %v1939 = vpack.c.b16 %v1487, %v1483
    %v1940 = vpack.c.b16 %v1488, %v1484
    %v1941 = vpack.c.b16 %v1493, %v1489
    %v1942 = vpack.c.b16 %v1494, %v1490
    %v1943 = vpack.c.b16 %v1495, %v1491
    %v1944 = vpack.c.b16 %v1496, %v1492
    %v1945 = vpack.c.b16 %v1501, %v1497
    %v1946 = vpack.c.b16 %v1502, %v1498
    %v1947 = vpack.c.b16 %v1503, %v1499
    %v1948 = vpack.c.b16 %v1504, %v1500
    %v1949 = vpack.c.b16 %v1509, %v1505
    %v1950 = vpack.c.b16 %v1510, %v1506
    %v1951 = vpack.c.b16 %v1511, %v1507
    %v1952 = vpack.c.b16 %v1512, %v1508
    %v1953 = vpack.c.b16 %v1517, %v1513
    %v1954 = vpack.c.b16 %v1518, %v1514
    %v1955 = vpack.c.b16 %v1519, %v1515
    %v1956 = vpack.c.b16 %v1520, %v1516
    %v1957 = vpack.c.b16 %v1525, %v1521
    %v1958 = vpack.c.b16 %v1526, %v1522
    %v1959 = vpack.c.b16 %v1527, %v1523
    %v1960 = vpack.c.b16 %v1528, %v1524
    %v1961 = vpack.c.b16 %v1533, %v1529
    %v1962 = vpack.c.b16 %v1534, %v1530
    %v1963 = vpack.c.b16 %v1535, %v1531
    %v1964 = vpack.c.b16 %v1536, %v1532
    %v1965 = vpack.c.b16 %v1541, %v1537
    %v1966 = vpack.c.b16 %v1542, %v1538
    %v1967 = vpack.c.b16 %v1543, %v1539
    %v1968 = vpack.c.b16 %v1544, %v1540
    %v1969 = vpack.c.b16 %v1549, %v1545
    %v1970 = vpack.c.b16 %v1550, %v1546
    %v1971 = vpack.c.b16 %v1551, %v1547
    %v1972 = vpack.c.b16 %v1552, %v1548
    %v1973 = vpack.c.b16 %v1557, %v1553
    %v1974 = vpack.c.b16 %v1558, %v1554
    %v1975 = vpack.c.b16 %v1559, %v1555
    %v1976 = vpack.c.b16 %v1560, %v1556
    %v1977 = vpack.c.b16 %v1565, %v1561
    %v1978 = vpack.c.b16 %v1566, %v1562
    %v1979 = vpack.c.b16 %v1567, %v1563
    %v1980 = vpack.c.b16 %v1568, %v1564
    %v1981 = vpack.c.b16 %v1573, %v1569
    %v1982 = vpack.c.b16 %v1574, %v1570
    %v1983 = vpack.c.b16 %v1575, %v1571
    %v1984 = vpack.c.b16 %v1576, %v1572
    %v1985 = vpack.c.b16 %v1581, %v1577
    %v1986 = vpack.c.b16 %v1582, %v1578
    %v1987 = vpack.c.b16 %v1583, %v1579
    %v1988 = vpack.c.b16 %v1584, %v1580
    %v1989 = vpack.c.b16 %v1589, %v1585
    %v1990 = vpack.c.b16 %v1590, %v1586
    %v1991 = vpack.c.b16 %v1591, %v1587
    %v1992 = vpack.c.b16 %v1592, %v1588
    %v1993 = vpack.c.b16 %v1597, %v1593
    %v1994 = vpack.c.b16 %v1598, %v1594
    %v1995 = vpack.c.b16 %v1599, %v1595
    %v1996 = vpack.c.b16 %v1600, %v1596
    %v1997 = vpack.c.b16 %v1605, %v1601
    %v1998 = vpack.c.b16 %v1606, %v1602
    %v1999 = vpack.c.b16 %v1607, %v1603
    %v2000 = vpack.c.b16 %v1608, %v1604
    %v2001 = vpack.c.b16 %v1613, %v1609
    %v2002 = vpack.c.b16 %v1614, %v1610
    %v2003 = vpack.c.b16 %v1615, %v1611
    %v2004 = vpack.c.b16 %v1616, %v1612
    %v2005 = vpack.c.b16 %v1621, %v1617
    %v2006 = vpack.c.b16 %v1622, %v1618
    %v2007 = vpack.c.b16 %v1623, %v1619
    %v2008 = vpack.c.b16 %v1624, %v1620
    %v2009 = vpack.c.b16 %v1629, %v1625
    %v2010 = vpack.c.b16 %v1630, %v1626
    %v2011 = vpack.c.b16 %v1631, %v1627
    %v2012 = vpack.c.b16 %v1632, %v1628
    %v2013 = vpack.c.b16 %v1637, %v1633
    %v2014 = vpack.c.b16 %v1638, %v1634
    %v2015 = vpack.c.b16 %v1639, %v1635
    %v2016 = vpack.c.b16 %v1640, %v1636
    %v2017 = vpack.c.b16 %v1645, %v1641
    %v2018 = vpack.c.b16 %v1646, %v1642
    %v2019 = vpack.c.b16 %v1647, %v1643
    %v2020 = vpack.c.b16 %v1648, %v1644
    %v2021 = vpack.c.b16 %v1653, %v1649
    %v2022 = vpack.c.b16 %v1654, %v1650
    %v2023 = vpack.c.b16 %v1655, %v1651
    %v2024 = vpack.c.b16 %v1656, %v1652
    %v2025 = vpack.c.b16 %v1661, %v1657
    %v2026 = vpack.c.b16 %v1662, %v1658
    %v2027 = vpack.c.b16 %v1663, %v1659
    %v2028 = vpack.c.b16 %v1664, %v1660
    %v2029 = vpack.c.b16 %v1669, %v1665
    %v2030 = vpack.c.b16 %v1670, %v1666
    %v2031 = vpack.c.b16 %v1671, %v1667
    %v2032 = vpack.c.b16 %v1672, %v1668
    %v2033 = vpack.c.b16 %v1677, %v1673
    %v2034 = vpack.c.b16 %v1678, %v1674
    %v2035 = vpack.c.b16 %v1679, %v1675
    %v2036 = vpack.c.b16 %v1680, %v1676
    %v2037 = vpack.c.b16 %v1685, %v1681
    %v2038 = vpack.c.b16 %v1686, %v1682
    %v2039 = vpack.c.b16 %v1687, %v1683
    %v2040 = vpack.c.b16 %v1688, %v1684
    %v2041 = vpack.c.b16 %v1693, %v1689
    %v2042 = vpack.c.b16 %v1694, %v1690
    %v2043 = vpack.c.b16 %v1695, %v1691
    %v2044 = vpack.c.b16 %v1696, %v1692
    %v2045 = vpack.c.b16 %v1701, %v1697
    %v2046 = vpack.c.b16 %v1702, %v1698
    %v2047 = vpack.c.b16 %v1703, %v1699
    %v2048 = vpack.c.b16 %v1704, %v1700
    %v2049 = vpack.c.b16 %v1709, %v1705
    %v2050 = vpack.c.b16 %v1710, %v1706
    %v2051 = vpack.c.b16 %v1711, %v1707
    %v2052 = vpack.c.b16 %v1712, %v1708
    %v2053 = vpack.c.b16 %v1717, %v1713
    %v2054 = vpack.c.b16 %v1718, %v1714
    %v2055 = vpack.c.b16 %v1719, %v1715
    %v2056 = vpack.c.b16 %v1720, %v1716
    %v2057 = vpack.c.b16 %v1725, %v1721
    %v2058 = vpack.c.b16 %v1726, %v1722
    %v2059 = vpack.c.b16 %v1727, %v1723
    %v2060 = vpack.c.b16 %v1728, %v1724
    %v2061 = vpack.c.b16 %v1733, %v1729
    %v2062 = vpack.c.b16 %v1734, %v1730
    %v2063 = vpack.c.b16 %v1735, %v1731
    %v2064 = vpack.c.b16 %v1736, %v1732
    %v2065 = vpack.c.b16 %v1741, %v1737
    %v2066 = vpack.c.b16 %v1742, %v1738
    %v2067 = vpack.c.b16 %v1743, %v1739
    %v2068 = vpack.c.b16 %v1744, %v1740
    %v2069 = vpack.c.b16 %v1749, %v1745
    %v2070 = vpack.c.b16 %v1750, %v1746
    %v2071 = vpack.c.b16 %v1751, %v1747
    %v2072 = vpack.c.b16 %v1752, %v1748
    %v2073 = vpack.c.b16 %v1757, %v1753
    %v2074 = vpack.c.b16 %v1758, %v1754
    %v2075 = vpack.c.b16 %v1759, %v1755
    %v2076 = vpack.c.b16 %v1760, %v1756
    %v2077 = vpack.c.b16 %v1765, %v1761
    %v2078 = vpack.c.b16 %v1766, %v1762
    %v2079 = vpack.c.b16 %v1767, %v1763
    %v2080 = vpack.c.b16 %v1768, %v1764
    %v2081 = vpack.c.b16 %v1773, %v1769
    %v2082 = vpack.c.b16 %v1774, %v1770
    %v2083 = vpack.c.b16 %v1775, %v1771
    %v2084 = vpack.c.b16 %v1776, %v1772
    %v2085 = vpack.c.b16 %v1781, %v1777
    %v2086 = vpack.c.b16 %v1782, %v1778
    %v2087 = vpack.c.b16 %v1783, %v1779
    %v2088 = vpack.c.b16 %v1784, %v1780
    %v2089 = vpack.c.b16 %v1789, %v1785
    %v2090 = vpack.c.b16 %v1790, %v1786
    %v2091 = vpack.c.b16 %v1791, %v1787
    %v2092 = vpack.c.b16 %v1792, %v1788
    %v2093 = vpack.c.b16 %v1797, %v1793
    %v2094 = vpack.c.b16 %v1798, %v1794
    %v2095 = vpack.c.b16 %v1799, %v1795
    %v2096 = vpack.c.b16 %v1800, %v1796
    %v2097 = vpack.c.b16 %v1805, %v1801
    %v2098 = vpack.c.b16 %v1806, %v1802
    %v2099 = vpack.c.b16 %v1807, %v1803
    %v2100 = vpack.c.b16 %v1808, %v1804
    %v2101 = vpack.c.b16 %v1813, %v1809
    %v2102 = vpack.c.b16 %v1814, %v1810
    %v2103 = vpack.c.b16 %v1815, %v1811
    %v2104 = vpack.c.b16 %v1816, %v1812
    %v2105 = vpack.c.b16 %v1821, %v1817
    %v2106 = vpack.c.b16 %v1822, %v1818
    %v2107 = vpack.c.b16 %v1823, %v1819
    %v2108 = vpack.c.b16 %v1824, %v1820
    %v2109 = vpack.c.b16 %v1829, %v1825
    %v2110 = vpack.c.b16 %v1830, %v1826
    %v2111 = vpack.c.b16 %v1831, %v1827
    %v2112 = vpack.c.b16 %v1832, %v1828
    %v2113 = vpack.c.b16 %v1837, %v1833
    %v2114 = vpack.c.b16 %v1838, %v1834
    %v2115 = vpack.c.b16 %v1839, %v1835
    %v2116 = vpack.c.b16 %v1840, %v1836
    %v2117 = vpack.c.b16 %v1845, %v1841
    %v2118 = vpack.c.b16 %v1846, %v1842
    %v2119 = vpack.c.b16 %v1847, %v1843
    %v2120 = vpack.c.b16 %v1848, %v1844
    %v2121 = vpack.c.b16 %v1853, %v1849
    %v2122 = vpack.c.b16 %v1854, %v1850
    %v2123 = vpack.c.b16 %v1855, %v1851
    %v2124 = vpack.c.b16 %v1856, %v1852
    %v2125 = vpack.c.b16 %v1861, %v1857
    %v2126 = vpack.c.b16 %v1862, %v1858
    %v2127 = vpack.c.b16 %v1863, %v1859
    %v2128 = vpack.c.b16 %v1864, %v1860
    %v2129 = vpack.c.b16 %v1869, %v1865
    %v2130 = vpack.c.b16 %v1870, %v1866
    %v2131 = vpack.c.b16 %v1871, %v1867
    %v2132 = vpack.c.b16 %v1872, %v1868
    %v2133 = vpack.c.b16 %v1877, %v1873
    %v2134 = vpack.c.b16 %v1878, %v1874
    %v2135 = vpack.c.b16 %v1879, %v1875
    %v2136 = vpack.c.b16 %v1880, %v1876
    %2393 = vmatprep.subr.bf16.mxu0 %v1910
    %2394 = vmatpush1.bf16.msra.mxu0 %v1909
    %2395 = vmatprep.subr.bf16.mxu0 %v1906
    %2396 = vmatpush1.bf16.msra.mxu0 %v1905
    %2397 = vmatprep.subr.bf16.mxu0 %v1902
    %2398 = vmatpush1.bf16.msra.mxu0 %v1901
    %2399 = vmatprep.subr.bf16.mxu0 %v1898
    %2400 = vmatpush1.bf16.msra.mxu0 %v1897
    %2401 = vmatprep.subr.bf16.mxu0 %v1894
    %2402 = vmatpush1.bf16.msra.mxu0 %v1893
    %2403 = vmatprep.subr.bf16.mxu0 %v1890
    %2404 = vmatpush1.bf16.msra.mxu0 %v1889
    %2405 = vmatprep.subr.bf16.mxu0 %v1886
    %2406 = vmatpush1.bf16.msra.mxu0 %v1885
    %2407 = vmatprep.subr.bf16.mxu0 %v1882
    %2408 = vmatpush1.bf16.msra.mxu0 %v1881
    %2409 = vmatprep.subr.bf16.mxu0 %v1942
    %2410 = vmatpush2.bf16.msra.mxu0 %v1941
    %2411 = vmatprep.subr.bf16.mxu0 %v1938
    %2412 = vmatpush2.bf16.msra.mxu0 %v1937
    %2413 = vmatprep.subr.bf16.mxu0 %v1934
    %2414 = vmatpush2.bf16.msra.mxu0 %v1933
    %2415 = vmatprep.subr.bf16.mxu0 %v1930
    %2416 = vmatpush2.bf16.msra.mxu0 %v1929
    %2417 = vmatprep.subr.bf16.mxu0 %v1926
    %2418 = vmatpush2.bf16.msra.mxu0 %v1925
    %2419 = vmatprep.subr.bf16.mxu0 %v1922
    %2420 = vmatpush2.bf16.msra.mxu0 %v1921
    %2421 = vmatprep.subr.bf16.mxu0 %v1918
    %2422 = vmatpush2.bf16.msra.mxu0 %v1917
    %2423 = vmatprep.subr.bf16.mxu0 %v1914
    %2424 = vmatpush2.bf16.msra.mxu0 %v1913
    %2425 = vmatprep.mubr.bf16.mxu0 %v1060
    %2426 = vmatmul.mubr.bf16.gmra.mxu0 %v1059
    %v2427 = vpop.f32.mrf.mxu0
    %v2428 = vadd.f32 %v1096, %v2427
    %v2429 = vpop.f32.mrf.mxu0
    %v2430 = vadd.f32 %v1100, %v2429
    %v2431 = vpop.f32.mrf.mxu0
    %v2432 = vadd.f32 %v1096, %v2431
    %v2433 = vpop.f32.mrf.mxu0
    %v2434 = vadd.f32 %v1100, %v2433
    %2435 = vmatprep.mubr.bf16.mxu0 %v1068
    %2436 = vmatmul.mubr.bf16.gmra.mxu0 %v1067
    %v2437 = vpop.f32.mrf.mxu0
    %v2438 = vadd.f32 %v1096, %v2437
    %v2439 = vpop.f32.mrf.mxu0
    %v2440 = vadd.f32 %v1100, %v2439
    %v2441 = vpop.f32.mrf.mxu0
    %v2442 = vadd.f32 %v1096, %v2441
    %v2443 = vpop.f32.mrf.mxu0
    %v2444 = vadd.f32 %v1100, %v2443
    %2445 = vmatprep.mubr.bf16.mxu0 %v1076
    %2446 = vmatmul.mubr.bf16.gmra.mxu0 %v1075
    %v2447 = vpop.f32.mrf.mxu0
    %v2448 = vadd.f32 %v1096, %v2447
    %v2449 = vpop.f32.mrf.mxu0
    %v2450 = vadd.f32 %v1100, %v2449
    %v2451 = vpop.f32.mrf.mxu0
    %v2452 = vadd.f32 %v1096, %v2451
    %v2453 = vpop.f32.mrf.mxu0
    %v2454 = vadd.f32 %v1100, %v2453
    %2455 = vmatprep.mubr.bf16.mxu0 %v1084
    %2456 = vmatmul.mubr.bf16.gmra.mxu0 %v1083
    %v2457 = vpop.f32.mrf.mxu0
    %v2458 = vadd.f32 %v1096, %v2457
    %v2459 = vpop.f32.mrf.mxu0
    %v2460 = vadd.f32 %v1100, %v2459
    %v2461 = vpop.f32.mrf.mxu0
    %v2462 = vadd.f32 %v1096, %v2461
    %v2463 = vpop.f32.mrf.mxu0
    %v2464 = vadd.f32 %v1100, %v2463
    %2465 = vdwg.mxu0
    %2466 = vmatprep.subr.bf16.mxu0 %v1974
    %2467 = vmatpush1.bf16.msra.mxu0 %v1973
    %2468 = vmatprep.subr.bf16.mxu0 %v1970
    %2469 = vmatpush1.bf16.msra.mxu0 %v1969
    %2470 = vmatprep.subr.bf16.mxu0 %v1966
    %2471 = vmatpush1.bf16.msra.mxu0 %v1965
    %2472 = vmatprep.subr.bf16.mxu0 %v1962
    %2473 = vmatpush1.bf16.msra.mxu0 %v1961
    %2474 = vmatprep.subr.bf16.mxu0 %v1958
    %2475 = vmatpush1.bf16.msra.mxu0 %v1957
    %2476 = vmatprep.subr.bf16.mxu0 %v1954
    %2477 = vmatpush1.bf16.msra.mxu0 %v1953
    %2478 = vmatprep.subr.bf16.mxu0 %v1950
    %2479 = vmatpush1.bf16.msra.mxu0 %v1949
    %2480 = vmatprep.subr.bf16.mxu0 %v1946
    %2481 = vmatpush1.bf16.msra.mxu0 %v1945
    %2482 = vmatprep.subr.bf16.mxu0 %v2006
    %2483 = vmatpush2.bf16.msra.mxu0 %v2005
    %2484 = vmatprep.subr.bf16.mxu0 %v2002
    %2485 = vmatpush2.bf16.msra.mxu0 %v2001
    %2486 = vmatprep.subr.bf16.mxu0 %v1998
    %2487 = vmatpush2.bf16.msra.mxu0 %v1997
    %2488 = vmatprep.subr.bf16.mxu0 %v1994
    %2489 = vmatpush2.bf16.msra.mxu0 %v1993
    %2490 = vmatprep.subr.bf16.mxu0 %v1990
    %2491 = vmatpush2.bf16.msra.mxu0 %v1989
    %2492 = vmatprep.subr.bf16.mxu0 %v1986
    %2493 = vmatpush2.bf16.msra.mxu0 %v1985
    %2494 = vmatprep.subr.bf16.mxu0 %v1982
    %2495 = vmatpush2.bf16.msra.mxu0 %v1981
    %2496 = vmatprep.subr.bf16.mxu0 %v1978
    %2497 = vmatpush2.bf16.msra.mxu0 %v1977
    %2498 = vmatprep.mubr.bf16.mxu0 %v1062
    %2499 = vmatmul.mubr.bf16.gmra.mxu0 %v1061
    %v2500 = vpop.f32.mrf.mxu0
    %v2501 = vadd.f32 %v2428, %v2500
    %v2502 = vpop.f32.mrf.mxu0
    %v2503 = vadd.f32 %v2430, %v2502
    %v2504 = vpop.f32.mrf.mxu0
    %v2505 = vadd.f32 %v2432, %v2504
    %v2506 = vpop.f32.mrf.mxu0
    %v2507 = vadd.f32 %v2434, %v2506
    %2508 = vmatprep.mubr.bf16.mxu0 %v1070
    %2509 = vmatmul.mubr.bf16.gmra.mxu0 %v1069
    %v2510 = vpop.f32.mrf.mxu0
    %v2511 = vadd.f32 %v2438, %v2510
    %v2512 = vpop.f32.mrf.mxu0
    %v2513 = vadd.f32 %v2440, %v2512
    %v2514 = vpop.f32.mrf.mxu0
    %v2515 = vadd.f32 %v2442, %v2514
    %v2516 = vpop.f32.mrf.mxu0
    %v2517 = vadd.f32 %v2444, %v2516
    %2518 = vmatprep.mubr.bf16.mxu0 %v1078
    %2519 = vmatmul.mubr.bf16.gmra.mxu0 %v1077
    %v2520 = vpop.f32.mrf.mxu0
    %v2521 = vadd.f32 %v2448, %v2520
    %v2522 = vpop.f32.mrf.mxu0
    %v2523 = vadd.f32 %v2450, %v2522
    %v2524 = vpop.f32.mrf.mxu0
    %v2525 = vadd.f32 %v2452, %v2524
    %v2526 = vpop.f32.mrf.mxu0
    %v2527 = vadd.f32 %v2454, %v2526
    %2528 = vmatprep.mubr.bf16.mxu0 %v1086
    %2529 = vmatmul.mubr.bf16.gmra.mxu0 %v1085
    %v2530 = vpop.f32.mrf.mxu0
    %v2531 = vadd.f32 %v2458, %v2530
    %v2532 = vpop.f32.mrf.mxu0
    %v2533 = vadd.f32 %v2460, %v2532
    %v2534 = vpop.f32.mrf.mxu0
    %v2535 = vadd.f32 %v2462, %v2534
    %v2536 = vpop.f32.mrf.mxu0
    %v2537 = vadd.f32 %v2464, %v2536
    %2538 = vdwg.mxu0
    %2539 = vmatprep.subr.bf16.mxu0 %v2038
    %2540 = vmatpush1.bf16.msra.mxu0 %v2037
    %2541 = vmatprep.subr.bf16.mxu0 %v2034
    %2542 = vmatpush1.bf16.msra.mxu0 %v2033
    %2543 = vmatprep.subr.bf16.mxu0 %v2030
    %2544 = vmatpush1.bf16.msra.mxu0 %v2029
    %2545 = vmatprep.subr.bf16.mxu0 %v2026
    %2546 = vmatpush1.bf16.msra.mxu0 %v2025
    %2547 = vmatprep.subr.bf16.mxu0 %v2022
    %2548 = vmatpush1.bf16.msra.mxu0 %v2021
    %2549 = vmatprep.subr.bf16.mxu0 %v2018
    %2550 = vmatpush1.bf16.msra.mxu0 %v2017
    %2551 = vmatprep.subr.bf16.mxu0 %v2014
    %2552 = vmatpush1.bf16.msra.mxu0 %v2013
    %2553 = vmatprep.subr.bf16.mxu0 %v2010
    %2554 = vmatpush1.bf16.msra.mxu0 %v2009
    %2555 = vmatprep.subr.bf16.mxu0 %v2070
    %2556 = vmatpush2.bf16.msra.mxu0 %v2069
    %2557 = vmatprep.subr.bf16.mxu0 %v2066
    %2558 = vmatpush2.bf16.msra.mxu0 %v2065
    %2559 = vmatprep.subr.bf16.mxu0 %v2062
    %2560 = vmatpush2.bf16.msra.mxu0 %v2061
    %2561 = vmatprep.subr.bf16.mxu0 %v2058
    %2562 = vmatpush2.bf16.msra.mxu0 %v2057
    %2563 = vmatprep.subr.bf16.mxu0 %v2054
    %2564 = vmatpush2.bf16.msra.mxu0 %v2053
    %2565 = vmatprep.subr.bf16.mxu0 %v2050
    %2566 = vmatpush2.bf16.msra.mxu0 %v2049
    %2567 = vmatprep.subr.bf16.mxu0 %v2046
    %2568 = vmatpush2.bf16.msra.mxu0 %v2045
    %2569 = vmatprep.subr.bf16.mxu0 %v2042
    %2570 = vmatpush2.bf16.msra.mxu0 %v2041
    %2571 = vmatprep.mubr.bf16.mxu0 %v1064
    %2572 = vmatmul.mubr.bf16.gmra.mxu0 %v1063
    %v2573 = vpop.f32.mrf.mxu0
    %v2574 = vadd.f32 %v2501, %v2573
    %v2575 = vpop.f32.mrf.mxu0
    %v2576 = vadd.f32 %v2503, %v2575
    %v2577 = vpop.f32.mrf.mxu0
    %v2578 = vadd.f32 %v2505, %v2577
    %v2579 = vpop.f32.mrf.mxu0
    %v2580 = vadd.f32 %v2507, %v2579
    %2581 = vmatprep.mubr.bf16.mxu0 %v1072
    %2582 = vmatmul.mubr.bf16.gmra.mxu0 %v1071
    %v2583 = vpop.f32.mrf.mxu0
    %v2584 = vadd.f32 %v2511, %v2583
    %v2585 = vpop.f32.mrf.mxu0
    %v2586 = vadd.f32 %v2513, %v2585
    %v2587 = vpop.f32.mrf.mxu0
    %v2588 = vadd.f32 %v2515, %v2587
    %v2589 = vpop.f32.mrf.mxu0
    %v2590 = vadd.f32 %v2517, %v2589
    %2591 = vmatprep.mubr.bf16.mxu0 %v1080
    %2592 = vmatmul.mubr.bf16.gmra.mxu0 %v1079
    %v2593 = vpop.f32.mrf.mxu0
    %v2594 = vadd.f32 %v2521, %v2593
    %v2595 = vpop.f32.mrf.mxu0
    %v2596 = vadd.f32 %v2523, %v2595
    %v2597 = vpop.f32.mrf.mxu0
    %v2598 = vadd.f32 %v2525, %v2597
    %v2599 = vpop.f32.mrf.mxu0
    %v2600 = vadd.f32 %v2527, %v2599
    %2601 = vmatprep.mubr.bf16.mxu0 %v1088
    %2602 = vmatmul.mubr.bf16.gmra.mxu0 %v1087
    %v2603 = vpop.f32.mrf.mxu0
    %v2604 = vadd.f32 %v2531, %v2603
    %v2605 = vpop.f32.mrf.mxu0
    %v2606 = vadd.f32 %v2533, %v2605
    %v2607 = vpop.f32.mrf.mxu0
    %v2608 = vadd.f32 %v2535, %v2607
    %v2609 = vpop.f32.mrf.mxu0
    %v2610 = vadd.f32 %v2537, %v2609
    %2611 = vdwg.mxu0
    %2612 = vmatprep.subr.bf16.mxu0 %v2102
    %2613 = vmatpush1.bf16.msra.mxu0 %v2101
    %2614 = vmatprep.subr.bf16.mxu0 %v2098
    %2615 = vmatpush1.bf16.msra.mxu0 %v2097
    %2616 = vmatprep.subr.bf16.mxu0 %v2094
    %2617 = vmatpush1.bf16.msra.mxu0 %v2093
    %2618 = vmatprep.subr.bf16.mxu0 %v2090
    %2619 = vmatpush1.bf16.msra.mxu0 %v2089
    %2620 = vmatprep.subr.bf16.mxu0 %v2086
    %2621 = vmatpush1.bf16.msra.mxu0 %v2085
    %2622 = vmatprep.subr.bf16.mxu0 %v2082
    %2623 = vmatpush1.bf16.msra.mxu0 %v2081
    %2624 = vmatprep.subr.bf16.mxu0 %v2078
    %2625 = vmatpush1.bf16.msra.mxu0 %v2077
    %2626 = vmatprep.subr.bf16.mxu0 %v2074
    %2627 = vmatpush1.bf16.msra.mxu0 %v2073
    %2628 = vmatprep.subr.bf16.mxu0 %v2134
    %2629 = vmatpush2.bf16.msra.mxu0 %v2133
    %2630 = vmatprep.subr.bf16.mxu0 %v2130
    %2631 = vmatpush2.bf16.msra.mxu0 %v2129
    %2632 = vmatprep.subr.bf16.mxu0 %v2126
    %2633 = vmatpush2.bf16.msra.mxu0 %v2125
    %2634 = vmatprep.subr.bf16.mxu0 %v2122
    %2635 = vmatpush2.bf16.msra.mxu0 %v2121
    %2636 = vmatprep.subr.bf16.mxu0 %v2118
    %2637 = vmatpush2.bf16.msra.mxu0 %v2117
    %2638 = vmatprep.subr.bf16.mxu0 %v2114
    %2639 = vmatpush2.bf16.msra.mxu0 %v2113
    %2640 = vmatprep.subr.bf16.mxu0 %v2110
    %2641 = vmatpush2.bf16.msra.mxu0 %v2109
    %2642 = vmatprep.subr.bf16.mxu0 %v2106
    %2643 = vmatpush2.bf16.msra.mxu0 %v2105
    %2644 = vmatprep.mubr.bf16.mxu0 %v1066
    %2645 = vmatmul.mubr.bf16.gmra.mxu0 %v1065
    %v2646 = vpop.f32.mrf.mxu0
    %v2647 = vadd.f32 %v2574, %v2646
    %v2648 = vpop.f32.mrf.mxu0
    %v2649 = vadd.f32 %v2576, %v2648
    %v2650 = vpop.f32.mrf.mxu0
    %v2651 = vadd.f32 %v2578, %v2650
    %v2652 = vpop.f32.mrf.mxu0
    %v2653 = vadd.f32 %v2580, %v2652
    %2654 = vmatprep.mubr.bf16.mxu0 %v1074
    %2655 = vmatmul.mubr.bf16.gmra.mxu0 %v1073
    %v2656 = vpop.f32.mrf.mxu0
    %v2657 = vadd.f32 %v2584, %v2656
    %v2658 = vpop.f32.mrf.mxu0
    %v2659 = vadd.f32 %v2586, %v2658
    %v2660 = vpop.f32.mrf.mxu0
    %v2661 = vadd.f32 %v2588, %v2660
    %v2662 = vpop.f32.mrf.mxu0
    %v2663 = vadd.f32 %v2590, %v2662
    %2664 = vmatprep.mubr.bf16.mxu0 %v1082
    %2665 = vmatmul.mubr.bf16.gmra.mxu0 %v1081
    %v2666 = vpop.f32.mrf.mxu0
    %v2667 = vadd.f32 %v2594, %v2666
    %v2668 = vpop.f32.mrf.mxu0
    %v2669 = vadd.f32 %v2596, %v2668
    %v2670 = vpop.f32.mrf.mxu0
    %v2671 = vadd.f32 %v2598, %v2670
    %v2672 = vpop.f32.mrf.mxu0
    %v2673 = vadd.f32 %v2600, %v2672
    %2674 = vmatprep.mubr.bf16.mxu0 %v1090
    %2675 = vmatmul.mubr.bf16.gmra.mxu0 %v1089
    %v2676 = vpop.f32.mrf.mxu0
    %v2677 = vadd.f32 %v2604, %v2676
    %v2678 = vpop.f32.mrf.mxu0
    %v2679 = vadd.f32 %v2606, %v2678
    %v2680 = vpop.f32.mrf.mxu0
    %v2681 = vadd.f32 %v2608, %v2680
    %v2682 = vpop.f32.mrf.mxu0
    %v2683 = vadd.f32 %v2610, %v2682
    %2684 = vdwg.mxu0
    %2685 = vmatprep.subr.bf16.mxu0 %v1912
    %2686 = vmatpush1.bf16.msra.mxu0 %v1911
    %2687 = vmatprep.subr.bf16.mxu0 %v1908
    %2688 = vmatpush1.bf16.msra.mxu0 %v1907
    %2689 = vmatprep.subr.bf16.mxu0 %v1904
    %2690 = vmatpush1.bf16.msra.mxu0 %v1903
    %2691 = vmatprep.subr.bf16.mxu0 %v1900
    %2692 = vmatpush1.bf16.msra.mxu0 %v1899
    %2693 = vmatprep.subr.bf16.mxu0 %v1896
    %2694 = vmatpush1.bf16.msra.mxu0 %v1895
    %2695 = vmatprep.subr.bf16.mxu0 %v1892
    %2696 = vmatpush1.bf16.msra.mxu0 %v1891
    %2697 = vmatprep.subr.bf16.mxu0 %v1888
    %2698 = vmatpush1.bf16.msra.mxu0 %v1887
    %2699 = vmatprep.subr.bf16.mxu0 %v1884
    %2700 = vmatpush1.bf16.msra.mxu0 %v1883
    %2701 = vmatprep.subr.bf16.mxu0 %v1944
    %2702 = vmatpush2.bf16.msra.mxu0 %v1943
    %2703 = vmatprep.subr.bf16.mxu0 %v1940
    %2704 = vmatpush2.bf16.msra.mxu0 %v1939
    %2705 = vmatprep.subr.bf16.mxu0 %v1936
    %2706 = vmatpush2.bf16.msra.mxu0 %v1935
    %2707 = vmatprep.subr.bf16.mxu0 %v1932
    %2708 = vmatpush2.bf16.msra.mxu0 %v1931
    %2709 = vmatprep.subr.bf16.mxu0 %v1928
    %2710 = vmatpush2.bf16.msra.mxu0 %v1927
    %2711 = vmatprep.subr.bf16.mxu0 %v1924
    %2712 = vmatpush2.bf16.msra.mxu0 %v1923
    %2713 = vmatprep.subr.bf16.mxu0 %v1920
    %2714 = vmatpush2.bf16.msra.mxu0 %v1919
    %2715 = vmatprep.subr.bf16.mxu0 %v1916
    %2716 = vmatpush2.bf16.msra.mxu0 %v1915
    %2717 = vmatprep.mubr.bf16.mxu0 %v1060
    %2718 = vmatmul.mubr.bf16.gmra.mxu0 %v1059
    %v2719 = vpop.f32.mrf.mxu0
    %v2720 = vadd.f32 %v1104, %v2719
    %v2721 = vpop.f32.mrf.mxu0
    %v2722 = vadd.f32 %v1108, %v2721
    %v2723 = vpop.f32.mrf.mxu0
    %v2724 = vadd.f32 %v1104, %v2723
    %v2725 = vpop.f32.mrf.mxu0
    %v2726 = vadd.f32 %v1108, %v2725
    %2727 = vmatprep.mubr.bf16.mxu0 %v1068
    %2728 = vmatmul.mubr.bf16.gmra.mxu0 %v1067
    %v2729 = vpop.f32.mrf.mxu0
    %v2730 = vadd.f32 %v1104, %v2729
    %v2731 = vpop.f32.mrf.mxu0
    %v2732 = vadd.f32 %v1108, %v2731
    %v2733 = vpop.f32.mrf.mxu0
    %v2734 = vadd.f32 %v1104, %v2733
    %v2735 = vpop.f32.mrf.mxu0
    %v2736 = vadd.f32 %v1108, %v2735
    %2737 = vmatprep.mubr.bf16.mxu0 %v1076
    %2738 = vmatmul.mubr.bf16.gmra.mxu0 %v1075
    %v2739 = vpop.f32.mrf.mxu0
    %v2740 = vadd.f32 %v1104, %v2739
    %v2741 = vpop.f32.mrf.mxu0
    %v2742 = vadd.f32 %v1108, %v2741
    %v2743 = vpop.f32.mrf.mxu0
    %v2744 = vadd.f32 %v1104, %v2743
    %v2745 = vpop.f32.mrf.mxu0
    %v2746 = vadd.f32 %v1108, %v2745
    %2747 = vmatprep.mubr.bf16.mxu0 %v1084
    %2748 = vmatmul.mubr.bf16.gmra.mxu0 %v1083
    %v2749 = vpop.f32.mrf.mxu0
    %v2750 = vadd.f32 %v1104, %v2749
    %v2751 = vpop.f32.mrf.mxu0
    %v2752 = vadd.f32 %v1108, %v2751
    %v2753 = vpop.f32.mrf.mxu0
    %v2754 = vadd.f32 %v1104, %v2753
    %v2755 = vpop.f32.mrf.mxu0
    %v2756 = vadd.f32 %v1108, %v2755
    %2757 = vdwg.mxu0
    %2758 = vmatprep.subr.bf16.mxu0 %v1976
    %2759 = vmatpush1.bf16.msra.mxu0 %v1975
    %2760 = vmatprep.subr.bf16.mxu0 %v1972
    %2761 = vmatpush1.bf16.msra.mxu0 %v1971
    %2762 = vmatprep.subr.bf16.mxu0 %v1968
    %2763 = vmatpush1.bf16.msra.mxu0 %v1967
    %2764 = vmatprep.subr.bf16.mxu0 %v1964
    %2765 = vmatpush1.bf16.msra.mxu0 %v1963
    %2766 = vmatprep.subr.bf16.mxu0 %v1960
    %2767 = vmatpush1.bf16.msra.mxu0 %v1959
    %2768 = vmatprep.subr.bf16.mxu0 %v1956
    %2769 = vmatpush1.bf16.msra.mxu0 %v1955
    %2770 = vmatprep.subr.bf16.mxu0 %v1952
    %2771 = vmatpush1.bf16.msra.mxu0 %v1951
    %2772 = vmatprep.subr.bf16.mxu0 %v1948
    %2773 = vmatpush1.bf16.msra.mxu0 %v1947
    %2774 = vmatprep.subr.bf16.mxu0 %v2008
    %2775 = vmatpush2.bf16.msra.mxu0 %v2007
    %2776 = vmatprep.subr.bf16.mxu0 %v2004
    %2777 = vmatpush2.bf16.msra.mxu0 %v2003
    %2778 = vmatprep.subr.bf16.mxu0 %v2000
    %2779 = vmatpush2.bf16.msra.mxu0 %v1999
    %2780 = vmatprep.subr.bf16.mxu0 %v1996
    %2781 = vmatpush2.bf16.msra.mxu0 %v1995
    %2782 = vmatprep.subr.bf16.mxu0 %v1992
    %2783 = vmatpush2.bf16.msra.mxu0 %v1991
    %2784 = vmatprep.subr.bf16.mxu0 %v1988
    %2785 = vmatpush2.bf16.msra.mxu0 %v1987
    %2786 = vmatprep.subr.bf16.mxu0 %v1984
    %2787 = vmatpush2.bf16.msra.mxu0 %v1983
    %2788 = vmatprep.subr.bf16.mxu0 %v1980
    %2789 = vmatpush2.bf16.msra.mxu0 %v1979
    %2790 = vmatprep.mubr.bf16.mxu0 %v1062
    %2791 = vmatmul.mubr.bf16.gmra.mxu0 %v1061
    %v2792 = vpop.f32.mrf.mxu0
    %v2793 = vadd.f32 %v2720, %v2792
    %v2794 = vpop.f32.mrf.mxu0
    %v2795 = vadd.f32 %v2722, %v2794
    %v2796 = vpop.f32.mrf.mxu0
    %v2797 = vadd.f32 %v2724, %v2796
    %v2798 = vpop.f32.mrf.mxu0
    %v2799 = vadd.f32 %v2726, %v2798
    %2800 = vmatprep.mubr.bf16.mxu0 %v1070
    %2801 = vmatmul.mubr.bf16.gmra.mxu0 %v1069
    %v2802 = vpop.f32.mrf.mxu0
    %v2803 = vadd.f32 %v2730, %v2802
    %v2804 = vpop.f32.mrf.mxu0
    %v2805 = vadd.f32 %v2732, %v2804
    %v2806 = vpop.f32.mrf.mxu0
    %v2807 = vadd.f32 %v2734, %v2806
    %v2808 = vpop.f32.mrf.mxu0
    %v2809 = vadd.f32 %v2736, %v2808
    %2810 = vmatprep.mubr.bf16.mxu0 %v1078
    %2811 = vmatmul.mubr.bf16.gmra.mxu0 %v1077
    %v2812 = vpop.f32.mrf.mxu0
    %v2813 = vadd.f32 %v2740, %v2812
    %v2814 = vpop.f32.mrf.mxu0
    %v2815 = vadd.f32 %v2742, %v2814
    %v2816 = vpop.f32.mrf.mxu0
    %v2817 = vadd.f32 %v2744, %v2816
    %v2818 = vpop.f32.mrf.mxu0
    %v2819 = vadd.f32 %v2746, %v2818
    %2820 = vmatprep.mubr.bf16.mxu0 %v1086
    %2821 = vmatmul.mubr.bf16.gmra.mxu0 %v1085
    %v2822 = vpop.f32.mrf.mxu0
    %v2823 = vadd.f32 %v2750, %v2822
    %v2824 = vpop.f32.mrf.mxu0
    %v2825 = vadd.f32 %v2752, %v2824
    %v2826 = vpop.f32.mrf.mxu0
    %v2827 = vadd.f32 %v2754, %v2826
    %v2828 = vpop.f32.mrf.mxu0
    %v2829 = vadd.f32 %v2756, %v2828
    %2830 = vdwg.mxu0
    %2831 = vmatprep.subr.bf16.mxu0 %v2040
    %2832 = vmatpush1.bf16.msra.mxu0 %v2039
    %2833 = vmatprep.subr.bf16.mxu0 %v2036
    %2834 = vmatpush1.bf16.msra.mxu0 %v2035
    %2835 = vmatprep.subr.bf16.mxu0 %v2032
    %2836 = vmatpush1.bf16.msra.mxu0 %v2031
    %2837 = vmatprep.subr.bf16.mxu0 %v2028
    %2838 = vmatpush1.bf16.msra.mxu0 %v2027
    %2839 = vmatprep.subr.bf16.mxu0 %v2024
    %2840 = vmatpush1.bf16.msra.mxu0 %v2023
    %2841 = vmatprep.subr.bf16.mxu0 %v2020
    %2842 = vmatpush1.bf16.msra.mxu0 %v2019
    %2843 = vmatprep.subr.bf16.mxu0 %v2016
    %2844 = vmatpush1.bf16.msra.mxu0 %v2015
    %2845 = vmatprep.subr.bf16.mxu0 %v2012
    %2846 = vmatpush1.bf16.msra.mxu0 %v2011
    %2847 = vmatprep.subr.bf16.mxu0 %v2072
    %2848 = vmatpush2.bf16.msra.mxu0 %v2071
    %2849 = vmatprep.subr.bf16.mxu0 %v2068
    %2850 = vmatpush2.bf16.msra.mxu0 %v2067
    %2851 = vmatprep.subr.bf16.mxu0 %v2064
    %2852 = vmatpush2.bf16.msra.mxu0 %v2063
    %2853 = vmatprep.subr.bf16.mxu0 %v2060
    %2854 = vmatpush2.bf16.msra.mxu0 %v2059
    %2855 = vmatprep.subr.bf16.mxu0 %v2056
    %2856 = vmatpush2.bf16.msra.mxu0 %v2055
    %2857 = vmatprep.subr.bf16.mxu0 %v2052
    %2858 = vmatpush2.bf16.msra.mxu0 %v2051
    %2859 = vmatprep.subr.bf16.mxu0 %v2048
    %2860 = vmatpush2.bf16.msra.mxu0 %v2047
    %2861 = vmatprep.subr.bf16.mxu0 %v2044
    %2862 = vmatpush2.bf16.msra.mxu0 %v2043
    %2863 = vmatprep.mubr.bf16.mxu0 %v1064
    %2864 = vmatmul.mubr.bf16.gmra.mxu0 %v1063
    %v2865 = vpop.f32.mrf.mxu0
    %v2866 = vadd.f32 %v2793, %v2865
    %v2867 = vpop.f32.mrf.mxu0
    %v2868 = vadd.f32 %v2795, %v2867
    %v2869 = vpop.f32.mrf.mxu0
    %v2870 = vadd.f32 %v2797, %v2869
    %v2871 = vpop.f32.mrf.mxu0
    %v2872 = vadd.f32 %v2799, %v2871
    %2873 = vmatprep.mubr.bf16.mxu0 %v1072
    %2874 = vmatmul.mubr.bf16.gmra.mxu0 %v1071
    %v2875 = vpop.f32.mrf.mxu0
    %v2876 = vadd.f32 %v2803, %v2875
    %v2877 = vpop.f32.mrf.mxu0
    %v2878 = vadd.f32 %v2805, %v2877
    %v2879 = vpop.f32.mrf.mxu0
    %v2880 = vadd.f32 %v2807, %v2879
    %v2881 = vpop.f32.mrf.mxu0
    %v2882 = vadd.f32 %v2809, %v2881
    %2883 = vmatprep.mubr.bf16.mxu0 %v1080
    %2884 = vmatmul.mubr.bf16.gmra.mxu0 %v1079
    %v2885 = vpop.f32.mrf.mxu0
    %v2886 = vadd.f32 %v2813, %v2885
    %v2887 = vpop.f32.mrf.mxu0
    %v2888 = vadd.f32 %v2815, %v2887
    %v2889 = vpop.f32.mrf.mxu0
    %v2890 = vadd.f32 %v2817, %v2889
    %v2891 = vpop.f32.mrf.mxu0
    %v2892 = vadd.f32 %v2819, %v2891
    %2893 = vmatprep.mubr.bf16.mxu0 %v1088
    %2894 = vmatmul.mubr.bf16.gmra.mxu0 %v1087
    %v2895 = vpop.f32.mrf.mxu0
    %v2896 = vadd.f32 %v2823, %v2895
    %v2897 = vpop.f32.mrf.mxu0
    %v2898 = vadd.f32 %v2825, %v2897
    %v2899 = vpop.f32.mrf.mxu0
    %v2900 = vadd.f32 %v2827, %v2899
    %v2901 = vpop.f32.mrf.mxu0
    %v2902 = vadd.f32 %v2829, %v2901
    %2903 = vdwg.mxu0
    %2904 = vmatprep.subr.bf16.mxu0 %v2104
    %2905 = vmatpush1.bf16.msra.mxu0 %v2103
    %2906 = vmatprep.subr.bf16.mxu0 %v2100
    %2907 = vmatpush1.bf16.msra.mxu0 %v2099
    %2908 = vmatprep.subr.bf16.mxu0 %v2096
    %2909 = vmatpush1.bf16.msra.mxu0 %v2095
    %2910 = vmatprep.subr.bf16.mxu0 %v2092
    %2911 = vmatpush1.bf16.msra.mxu0 %v2091
    %2912 = vmatprep.subr.bf16.mxu0 %v2088
    %2913 = vmatpush1.bf16.msra.mxu0 %v2087
    %2914 = vmatprep.subr.bf16.mxu0 %v2084
    %2915 = vmatpush1.bf16.msra.mxu0 %v2083
    %2916 = vmatprep.subr.bf16.mxu0 %v2080
    %2917 = vmatpush1.bf16.msra.mxu0 %v2079
    %2918 = vmatprep.subr.bf16.mxu0 %v2076
    %2919 = vmatpush1.bf16.msra.mxu0 %v2075
    %2920 = vmatprep.subr.bf16.mxu0 %v2136
    %2921 = vmatpush2.bf16.msra.mxu0 %v2135
    %2922 = vmatprep.subr.bf16.mxu0 %v2132
    %2923 = vmatpush2.bf16.msra.mxu0 %v2131
    %2924 = vmatprep.subr.bf16.mxu0 %v2128
    %2925 = vmatpush2.bf16.msra.mxu0 %v2127
    %2926 = vmatprep.subr.bf16.mxu0 %v2124
    %2927 = vmatpush2.bf16.msra.mxu0 %v2123
    %2928 = vmatprep.subr.bf16.mxu0 %v2120
    %2929 = vmatpush2.bf16.msra.mxu0 %v2119
    %2930 = vmatprep.subr.bf16.mxu0 %v2116
    %2931 = vmatpush2.bf16.msra.mxu0 %v2115
    %2932 = vmatprep.subr.bf16.mxu0 %v2112
    %2933 = vmatpush2.bf16.msra.mxu0 %v2111
    %2934 = vmatprep.subr.bf16.mxu0 %v2108
    %2935 = vmatpush2.bf16.msra.mxu0 %v2107
    %2936 = vmatprep.mubr.bf16.mxu0 %v1066
    %2937 = vmatmul.mubr.bf16.gmra.mxu0 %v1065
    %v2938 = vpop.f32.mrf.mxu0
    %v2939 = vadd.f32 %v2866, %v2938
    %v2940 = vpop.f32.mrf.mxu0
    %v2941 = vadd.f32 %v2868, %v2940
    %v2942 = vpop.f32.mrf.mxu0
    %v2943 = vadd.f32 %v2870, %v2942
    %v2944 = vpop.f32.mrf.mxu0
    %v2945 = vadd.f32 %v2872, %v2944
    %2946 = vmatprep.mubr.bf16.mxu0 %v1074
    %2947 = vmatmul.mubr.bf16.gmra.mxu0 %v1073
    %v2948 = vpop.f32.mrf.mxu0
    %v2949 = vadd.f32 %v2876, %v2948
    %v2950 = vpop.f32.mrf.mxu0
    %v2951 = vadd.f32 %v2878, %v2950
    %v2952 = vpop.f32.mrf.mxu0
    %v2953 = vadd.f32 %v2880, %v2952
    %v2954 = vpop.f32.mrf.mxu0
    %v2955 = vadd.f32 %v2882, %v2954
    %2956 = vmatprep.mubr.bf16.mxu0 %v1082
    %2957 = vmatmul.mubr.bf16.gmra.mxu0 %v1081
    %v2958 = vpop.f32.mrf.mxu0
    %v2959 = vadd.f32 %v2886, %v2958
    %v2960 = vpop.f32.mrf.mxu0
    %v2961 = vadd.f32 %v2888, %v2960
    %v2962 = vpop.f32.mrf.mxu0
    %v2963 = vadd.f32 %v2890, %v2962
    %v2964 = vpop.f32.mrf.mxu0
    %v2965 = vadd.f32 %v2892, %v2964
    %2966 = vmatprep.mubr.bf16.mxu0 %v1090
    %2967 = vmatmul.mubr.bf16.gmra.mxu0 %v1089
    %v2968 = vpop.f32.mrf.mxu0
    %v2969 = vadd.f32 %v2896, %v2968
    %v2970 = vpop.f32.mrf.mxu0
    %v2971 = vadd.f32 %v2898, %v2970
    %v2972 = vpop.f32.mrf.mxu0
    %v2973 = vadd.f32 %v2900, %v2972
    %v2974 = vpop.f32.mrf.mxu0
    %v2975 = vadd.f32 %v2902, %v2974
    %2976 = vdwg.mxu0
    %vm2977 = vcmp.ge.f32.partialorder %v2647, 0.0
    %vm2978 = vcmp.ge.f32.partialorder %v2649, 0.0
    %vm2979 = vcmp.ge.f32.partialorder %v2939, 0.0
    %vm2980 = vcmp.ge.f32.partialorder %v2941, 0.0
    %vm2981 = vcmp.ge.f32.partialorder %v2651, 0.0
    %vm2982 = vcmp.ge.f32.partialorder %v2653, 0.0
    %vm2983 = vcmp.ge.f32.partialorder %v2943, 0.0
    %vm2984 = vcmp.ge.f32.partialorder %v2945, 0.0
    %vm2985 = vcmp.ge.f32.partialorder %v2657, 0.0
    %vm2986 = vcmp.ge.f32.partialorder %v2659, 0.0
    %vm2987 = vcmp.ge.f32.partialorder %v2949, 0.0
    %vm2988 = vcmp.ge.f32.partialorder %v2951, 0.0
    %vm2989 = vcmp.ge.f32.partialorder %v2661, 0.0
    %vm2990 = vcmp.ge.f32.partialorder %v2663, 0.0
    %vm2991 = vcmp.ge.f32.partialorder %v2953, 0.0
    %vm2992 = vcmp.ge.f32.partialorder %v2955, 0.0
    %vm2993 = vcmp.ge.f32.partialorder %v2667, 0.0
    %vm2994 = vcmp.ge.f32.partialorder %v2669, 0.0
    %vm2995 = vcmp.ge.f32.partialorder %v2959, 0.0
    %vm2996 = vcmp.ge.f32.partialorder %v2961, 0.0
    %vm2997 = vcmp.ge.f32.partialorder %v2671, 0.0
    %vm2998 = vcmp.ge.f32.partialorder %v2673, 0.0
    %vm2999 = vcmp.ge.f32.partialorder %v2963, 0.0
    %vm3000 = vcmp.ge.f32.partialorder %v2965, 0.0
    %vm3001 = vcmp.ge.f32.partialorder %v2677, 0.0
    %vm3002 = vcmp.ge.f32.partialorder %v2679, 0.0
    %vm3003 = vcmp.ge.f32.partialorder %v2969, 0.0
    %vm3004 = vcmp.ge.f32.partialorder %v2971, 0.0
    %vm3005 = vcmp.ge.f32.partialorder %v2681, 0.0
    %vm3006 = vcmp.ge.f32.partialorder %v2683, 0.0
    %vm3007 = vcmp.ge.f32.partialorder %v2973, 0.0
    %vm3008 = vcmp.ge.f32.partialorder %v2975, 0.0
    %v3009 = vmul.f32 %v2647, 0.01
    %v3010 = vmul.f32 %v2649, 0.01
    %v3011 = vmul.f32 %v2939, 0.01
    %v3012 = vmul.f32 %v2941, 0.01
    %v3013 = vmul.f32 %v2651, 0.01
    %v3014 = vmul.f32 %v2653, 0.01
    %v3015 = vmul.f32 %v2943, 0.01
    %v3016 = vmul.f32 %v2945, 0.01
    %v3017 = vmul.f32 %v2657, 0.01
    %v3018 = vmul.f32 %v2659, 0.01
    %v3019 = vmul.f32 %v2949, 0.01
    %v3020 = vmul.f32 %v2951, 0.01
    %v3021 = vmul.f32 %v2661, 0.01
    %v3022 = vmul.f32 %v2663, 0.01
    %v3023 = vmul.f32 %v2953, 0.01
    %v3024 = vmul.f32 %v2955, 0.01
    %v3025 = vmul.f32 %v2667, 0.01
    %v3026 = vmul.f32 %v2669, 0.01
    %v3027 = vmul.f32 %v2959, 0.01
    %v3028 = vmul.f32 %v2961, 0.01
    %v3029 = vmul.f32 %v2671, 0.01
    %v3030 = vmul.f32 %v2673, 0.01
    %v3031 = vmul.f32 %v2963, 0.01
    %v3032 = vmul.f32 %v2965, 0.01
    %v3033 = vmul.f32 %v2677, 0.01
    %v3034 = vmul.f32 %v2679, 0.01
    %v3035 = vmul.f32 %v2969, 0.01
    %v3036 = vmul.f32 %v2971, 0.01
    %v3037 = vmul.f32 %v2681, 0.01
    %v3038 = vmul.f32 %v2683, 0.01
    %v3039 = vmul.f32 %v2973, 0.01
    %v3040 = vmul.f32 %v2975, 0.01
    %v3041 = vsel %vm2977, %v2647, %v3009
    %v3042 = vsel %vm2978, %v2649, %v3010
    %v3043 = vsel %vm2979, %v2939, %v3011
    %v3044 = vsel %vm2980, %v2941, %v3012
    %v3045 = vsel %vm2981, %v2651, %v3013
    %v3046 = vsel %vm2982, %v2653, %v3014
    %v3047 = vsel %vm2983, %v2943, %v3015
    %v3048 = vsel %vm2984, %v2945, %v3016
    %v3049 = vsel %vm2985, %v2657, %v3017
    %v3050 = vsel %vm2986, %v2659, %v3018
    %v3051 = vsel %vm2987, %v2949, %v3019
    %v3052 = vsel %vm2988, %v2951, %v3020
    %v3053 = vsel %vm2989, %v2661, %v3021
    %v3054 = vsel %vm2990, %v2663, %v3022
    %v3055 = vsel %vm2991, %v2953, %v3023
    %v3056 = vsel %vm2992, %v2955, %v3024
    %v3057 = vsel %vm2993, %v2667, %v3025
    %v3058 = vsel %vm2994, %v2669, %v3026
    %v3059 = vsel %vm2995, %v2959, %v3027
    %v3060 = vsel %vm2996, %v2961, %v3028
    %v3061 = vsel %vm2997, %v2671, %v3029
    %v3062 = vsel %vm2998, %v2673, %v3030
    %v3063 = vsel %vm2999, %v2963, %v3031
    %v3064 = vsel %vm3000, %v2965, %v3032
    %v3065 = vsel %vm3001, %v2677, %v3033
    %v3066 = vsel %vm3002, %v2679, %v3034
    %v3067 = vsel %vm3003, %v2969, %v3035
    %v3068 = vsel %vm3004, %v2971, %v3036
    %v3069 = vsel %vm3005, %v2681, %v3037
    %v3070 = vsel %vm3006, %v2683, %v3038
    %v3071 = vsel %vm3007, %v2973, %v3039
    %v3072 = vsel %vm3008, %v2975, %v3040
    %v3073 = vld [vmem:[%s3] sm:$0xff]
    %v3074 = vld [vmem:[%s3 + $0x8] sm:$0xff]
    %v3075 = vld [vmem:[%s3 + $0x10] sm:$0xff]
    %v3076 = vld [vmem:[%s3 + $0x18] sm:$0xff]
    %v3077 = vld [vmem:[%s3 + $0x20] sm:$0xff]
    %v3078 = vld [vmem:[%s3 + $0x28] sm:$0xff]
    %v3079 = vld [vmem:[%s3 + $0x30] sm:$0xff]
    %v3080 = vld [vmem:[%s3 + $0x38] sm:$0xff]
    %v3081 = vld [vmem:[%s3 + $0x40] sm:$0xff]
    %v3082 = vld [vmem:[%s3 + $0x48] sm:$0xff]
    %v3083 = vld [vmem:[%s3 + $0x50] sm:$0xff]
    %v3084 = vld [vmem:[%s3 + $0x58] sm:$0xff]
    %v3085 = vld [vmem:[%s3 + $0x60] sm:$0xff]
    %v3086 = vld [vmem:[%s3 + $0x68] sm:$0xff]
    %v3087 = vld [vmem:[%s3 + $0x70] sm:$0xff]
    %v3088 = vld [vmem:[%s3 + $0x78] sm:$0xff]
    %v3089 = vld [vmem:[%s3 + $0x80] sm:$0xff]
    %v3090 = vld [vmem:[%s3 + $0x88] sm:$0xff]
    %v3091 = vld [vmem:[%s3 + $0x90] sm:$0xff]
    %v3092 = vld [vmem:[%s3 + $0x98] sm:$0xff]
    %v3093 = vld [vmem:[%s3 + $0xa0] sm:$0xff]
    %v3094 = vld [vmem:[%s3 + $0xa8] sm:$0xff]
    %v3095 = vld [vmem:[%s3 + $0xb0] sm:$0xff]
    %v3096 = vld [vmem:[%s3 + $0xb8] sm:$0xff]
    %v3097 = vld [vmem:[%s3 + $0xc0] sm:$0xff]
    %v3098 = vld [vmem:[%s3 + $0xc8] sm:$0xff]
    %v3099 = vld [vmem:[%s3 + $0xd0] sm:$0xff]
    %v3100 = vld [vmem:[%s3 + $0xd8] sm:$0xff]
    %v3101 = vld [vmem:[%s3 + $0xe0] sm:$0xff]
    %v3102 = vld [vmem:[%s3 + $0xe8] sm:$0xff]
    %v3103 = vld [vmem:[%s3 + $0xf0] sm:$0xff]
    %v3104 = vld [vmem:[%s3 + $0xf8] sm:$0xff]
    %v3105 = vld [vmem:[%s3 + $0x100] sm:$0xff]
    %v3106 = vld [vmem:[%s3 + $0x108] sm:$0xff]
    %v3107 = vld [vmem:[%s3 + $0x110] sm:$0xff]
    %v3108 = vld [vmem:[%s3 + $0x118] sm:$0xff]
    %v3109 = vld [vmem:[%s3 + $0x120] sm:$0xff]
    %v3110 = vld [vmem:[%s3 + $0x128] sm:$0xff]
    %v3111 = vld [vmem:[%s3 + $0x130] sm:$0xff]
    %v3112 = vld [vmem:[%s3 + $0x138] sm:$0xff]
    %v3113 = vld [vmem:[%s3 + $0x140] sm:$0xff]
    %v3114 = vld [vmem:[%s3 + $0x148] sm:$0xff]
    %v3115 = vld [vmem:[%s3 + $0x150] sm:$0xff]
    %v3116 = vld [vmem:[%s3 + $0x158] sm:$0xff]
    %v3117 = vld [vmem:[%s3 + $0x160] sm:$0xff]
    %v3118 = vld [vmem:[%s3 + $0x168] sm:$0xff]
    %v3119 = vld [vmem:[%s3 + $0x170] sm:$0xff]
    %v3120 = vld [vmem:[%s3 + $0x178] sm:$0xff]
    %v3121 = vld [vmem:[%s3 + $0x180] sm:$0xff]
    %v3122 = vld [vmem:[%s3 + $0x188] sm:$0xff]
    %v3123 = vld [vmem:[%s3 + $0x190] sm:$0xff]
    %v3124 = vld [vmem:[%s3 + $0x198] sm:$0xff]
    %v3125 = vld [vmem:[%s3 + $0x1a0] sm:$0xff]
    %v3126 = vld [vmem:[%s3 + $0x1a8] sm:$0xff]
    %v3127 = vld [vmem:[%s3 + $0x1b0] sm:$0xff]
    %v3128 = vld [vmem:[%s3 + $0x1b8] sm:$0xff]
    %v3129 = vld [vmem:[%s3 + $0x1c0] sm:$0xff]
    %v3130 = vld [vmem:[%s3 + $0x1c8] sm:$0xff]
    %v3131 = vld [vmem:[%s3 + $0x1d0] sm:$0xff]
    %v3132 = vld [vmem:[%s3 + $0x1d8] sm:$0xff]
    %v3133 = vld [vmem:[%s3 + $0x1e0] sm:$0xff]
    %v3134 = vld [vmem:[%s3 + $0x1e8] sm:$0xff]
    %v3135 = vld [vmem:[%s3 + $0x1f0] sm:$0xff]
    %v3136 = vld [vmem:[%s3 + $0x1f8] sm:$0xff]
    %v3137 = vpack.c.bf16 %v3045, %v3041
    %v3138 = vpack.c.bf16 %v3046, %v3042
    %v3139 = vpack.c.bf16 %v3047, %v3043
    %v3140 = vpack.c.bf16 %v3048, %v3044
    %v3141 = vpack.c.bf16 %v3053, %v3049
    %v3142 = vpack.c.bf16 %v3054, %v3050
    %v3143 = vpack.c.bf16 %v3055, %v3051
    %v3144 = vpack.c.bf16 %v3056, %v3052
    %v3145 = vpack.c.bf16 %v3061, %v3057
    %v3146 = vpack.c.bf16 %v3062, %v3058
    %v3147 = vpack.c.bf16 %v3063, %v3059
    %v3148 = vpack.c.bf16 %v3064, %v3060
    %v3149 = vpack.c.bf16 %v3069, %v3065
    %v3150 = vpack.c.bf16 %v3070, %v3066
    %v3151 = vpack.c.bf16 %v3071, %v3067
    %v3152 = vpack.c.bf16 %v3072, %v3068
    %v3153 = vld [vmem:[%s9 + $0xc] sm:$0x3]
    %v3155 = vlaneseq
    %v3156 = vshrl.u32 %v3155, 7
    %v3157 = vsub.s32 0, %v3156
    %v3158 = vrot.slane %v3153, %v3157
    %v3159 = vlaneseq
    %v3160 = vshrl.u32 %v3159, 7
    %v3161 = vsub.s32 1, %v3160
    %v3162 = vrot.slane %v3153, %v3161
    %v3229 = vunpack.c.l.b16 %v3073
    %v3230 = vunpack.c.h.b16 %v3073
    %v3231 = vunpack.c.l.b16 %v3074
    %v3232 = vunpack.c.h.b16 %v3074
    %v3233 = vunpack.c.l.b16 %v3075
    %v3234 = vunpack.c.h.b16 %v3075
    %v3235 = vunpack.c.l.b16 %v3076
    %v3236 = vunpack.c.h.b16 %v3076
    %v3237 = vunpack.c.l.b16 %v3077
    %v3238 = vunpack.c.h.b16 %v3077
    %v3239 = vunpack.c.l.b16 %v3078
    %v3240 = vunpack.c.h.b16 %v3078
    %v3241 = vunpack.c.l.b16 %v3079
    %v3242 = vunpack.c.h.b16 %v3079
    %v3243 = vunpack.c.l.b16 %v3080
    %v3244 = vunpack.c.h.b16 %v3080
    %v3245 = vunpack.c.l.b16 %v3081
    %v3246 = vunpack.c.h.b16 %v3081
    %v3247 = vunpack.c.l.b16 %v3082
    %v3248 = vunpack.c.h.b16 %v3082
    %v3249 = vunpack.c.l.b16 %v3083
    %v3250 = vunpack.c.h.b16 %v3083
    %v3251 = vunpack.c.l.b16 %v3084
    %v3252 = vunpack.c.h.b16 %v3084
    %v3253 = vunpack.c.l.b16 %v3085
    %v3254 = vunpack.c.h.b16 %v3085
    %v3255 = vunpack.c.l.b16 %v3086
    %v3256 = vunpack.c.h.b16 %v3086
    %v3257 = vunpack.c.l.b16 %v3087
    %v3258 = vunpack.c.h.b16 %v3087
    %v3259 = vunpack.c.l.b16 %v3088
    %v3260 = vunpack.c.h.b16 %v3088
    %v3261 = vunpack.c.l.b16 %v3089
    %v3262 = vunpack.c.h.b16 %v3089
    %v3263 = vunpack.c.l.b16 %v3090
    %v3264 = vunpack.c.h.b16 %v3090
    %v3265 = vunpack.c.l.b16 %v3091
    %v3266 = vunpack.c.h.b16 %v3091
    %v3267 = vunpack.c.l.b16 %v3092
    %v3268 = vunpack.c.h.b16 %v3092
    %v3269 = vunpack.c.l.b16 %v3093
    %v3270 = vunpack.c.h.b16 %v3093
    %v3271 = vunpack.c.l.b16 %v3094
    %v3272 = vunpack.c.h.b16 %v3094
    %v3273 = vunpack.c.l.b16 %v3095
    %v3274 = vunpack.c.h.b16 %v3095
    %v3275 = vunpack.c.l.b16 %v3096
    %v3276 = vunpack.c.h.b16 %v3096
    %v3277 = vunpack.c.l.b16 %v3097
    %v3278 = vunpack.c.h.b16 %v3097
    %v3279 = vunpack.c.l.b16 %v3098
    %v3280 = vunpack.c.h.b16 %v3098
    %v3281 = vunpack.c.l.b16 %v3099
    %v3282 = vunpack.c.h.b16 %v3099
    %v3283 = vunpack.c.l.b16 %v3100
    %v3284 = vunpack.c.h.b16 %v3100
    %v3285 = vunpack.c.l.b16 %v3101
    %v3286 = vunpack.c.h.b16 %v3101
    %v3287 = vunpack.c.l.b16 %v3102
    %v3288 = vunpack.c.h.b16 %v3102
    %v3289 = vunpack.c.l.b16 %v3103
    %v3290 = vunpack.c.h.b16 %v3103
    %v3291 = vunpack.c.l.b16 %v3104
    %v3292 = vunpack.c.h.b16 %v3104
    %v3293 = vunpack.c.l.b16 %v3105
    %v3294 = vunpack.c.h.b16 %v3105
    %v3295 = vunpack.c.l.b16 %v3106
    %v3296 = vunpack.c.h.b16 %v3106
    %v3297 = vunpack.c.l.b16 %v3107
    %v3298 = vunpack.c.h.b16 %v3107
    %v3299 = vunpack.c.l.b16 %v3108
    %v3300 = vunpack.c.h.b16 %v3108
    %v3301 = vunpack.c.l.b16 %v3109
    %v3302 = vunpack.c.h.b16 %v3109
    %v3303 = vunpack.c.l.b16 %v3110
    %v3304 = vunpack.c.h.b16 %v3110
    %v3305 = vunpack.c.l.b16 %v3111
    %v3306 = vunpack.c.h.b16 %v3111
    %v3307 = vunpack.c.l.b16 %v3112
    %v3308 = vunpack.c.h.b16 %v3112
    %v3309 = vunpack.c.l.b16 %v3113
    %v3310 = vunpack.c.h.b16 %v3113
    %v3311 = vunpack.c.l.b16 %v3114
    %v3312 = vunpack.c.h.b16 %v3114
    %v3313 = vunpack.c.l.b16 %v3115
    %v3314 = vunpack.c.h.b16 %v3115
    %v3315 = vunpack.c.l.b16 %v3116
    %v3316 = vunpack.c.h.b16 %v3116
    %v3317 = vunpack.c.l.b16 %v3117
    %v3318 = vunpack.c.h.b16 %v3117
    %v3319 = vunpack.c.l.b16 %v3118
    %v3320 = vunpack.c.h.b16 %v3118
    %v3321 = vunpack.c.l.b16 %v3119
    %v3322 = vunpack.c.h.b16 %v3119
    %v3323 = vunpack.c.l.b16 %v3120
    %v3324 = vunpack.c.h.b16 %v3120
    %v3325 = vunpack.c.l.b16 %v3121
    %v3326 = vunpack.c.h.b16 %v3121
    %v3327 = vunpack.c.l.b16 %v3122
    %v3328 = vunpack.c.h.b16 %v3122
    %v3329 = vunpack.c.l.b16 %v3123
    %v3330 = vunpack.c.h.b16 %v3123
    %v3331 = vunpack.c.l.b16 %v3124
    %v3332 = vunpack.c.h.b16 %v3124
    %v3333 = vunpack.c.l.b16 %v3125
    %v3334 = vunpack.c.h.b16 %v3125
    %v3335 = vunpack.c.l.b16 %v3126
    %v3336 = vunpack.c.h.b16 %v3126
    %v3337 = vunpack.c.l.b16 %v3127
    %v3338 = vunpack.c.h.b16 %v3127
    %v3339 = vunpack.c.l.b16 %v3128
    %v3340 = vunpack.c.h.b16 %v3128
    %v3341 = vunpack.c.l.b16 %v3129
    %v3342 = vunpack.c.h.b16 %v3129
    %v3343 = vunpack.c.l.b16 %v3130
    %v3344 = vunpack.c.h.b16 %v3130
    %v3345 = vunpack.c.l.b16 %v3131
    %v3346 = vunpack.c.h.b16 %v3131
    %v3347 = vunpack.c.l.b16 %v3132
    %v3348 = vunpack.c.h.b16 %v3132
    %v3349 = vunpack.c.l.b16 %v3133
    %v3350 = vunpack.c.h.b16 %v3133
    %v3351 = vunpack.c.l.b16 %v3134
    %v3352 = vunpack.c.h.b16 %v3134
    %v3353 = vunpack.c.l.b16 %v3135
    %v3354 = vunpack.c.h.b16 %v3135
    %v3355 = vunpack.c.l.b16 %v3136
    %v3356 = vunpack.c.h.b16 %v3136
    %v3357 = vpack.c.b16 %v3231, %v3229
    %v3358 = vpack.c.b16 %v3232, %v3230
    %v3359 = vpack.c.b16 %v3235, %v3233
    %v3360 = vpack.c.b16 %v3236, %v3234
    %v3361 = vpack.c.b16 %v3239, %v3237
    %v3362 = vpack.c.b16 %v3240, %v3238
    %v3363 = vpack.c.b16 %v3243, %v3241
    %v3364 = vpack.c.b16 %v3244, %v3242
    %v3365 = vpack.c.b16 %v3247, %v3245
    %v3366 = vpack.c.b16 %v3248, %v3246
    %v3367 = vpack.c.b16 %v3251, %v3249
    %v3368 = vpack.c.b16 %v3252, %v3250
    %v3369 = vpack.c.b16 %v3255, %v3253
    %v3370 = vpack.c.b16 %v3256, %v3254
    %v3371 = vpack.c.b16 %v3259, %v3257
    %v3372 = vpack.c.b16 %v3260, %v3258
    %v3373 = vpack.c.b16 %v3263, %v3261
    %v3374 = vpack.c.b16 %v3264, %v3262
    %v3375 = vpack.c.b16 %v3267, %v3265
    %v3376 = vpack.c.b16 %v3268, %v3266
    %v3377 = vpack.c.b16 %v3271, %v3269
    %v3378 = vpack.c.b16 %v3272, %v3270
    %v3379 = vpack.c.b16 %v3275, %v3273
    %v3380 = vpack.c.b16 %v3276, %v3274
    %v3381 = vpack.c.b16 %v3279, %v3277
    %v3382 = vpack.c.b16 %v3280, %v3278
    %v3383 = vpack.c.b16 %v3283, %v3281
    %v3384 = vpack.c.b16 %v3284, %v3282
    %v3385 = vpack.c.b16 %v3287, %v3285
    %v3386 = vpack.c.b16 %v3288, %v3286
    %v3387 = vpack.c.b16 %v3291, %v3289
    %v3388 = vpack.c.b16 %v3292, %v3290
    %v3389 = vpack.c.b16 %v3295, %v3293
    %v3390 = vpack.c.b16 %v3296, %v3294
    %v3391 = vpack.c.b16 %v3299, %v3297
    %v3392 = vpack.c.b16 %v3300, %v3298
    %v3393 = vpack.c.b16 %v3303, %v3301
    %v3394 = vpack.c.b16 %v3304, %v3302
    %v3395 = vpack.c.b16 %v3307, %v3305
    %v3396 = vpack.c.b16 %v3308, %v3306
    %v3397 = vpack.c.b16 %v3311, %v3309
    %v3398 = vpack.c.b16 %v3312, %v3310
    %v3399 = vpack.c.b16 %v3315, %v3313
    %v3400 = vpack.c.b16 %v3316, %v3314
    %v3401 = vpack.c.b16 %v3319, %v3317
    %v3402 = vpack.c.b16 %v3320, %v3318
    %v3403 = vpack.c.b16 %v3323, %v3321
    %v3404 = vpack.c.b16 %v3324, %v3322
    %v3405 = vpack.c.b16 %v3327, %v3325
    %v3406 = vpack.c.b16 %v3328, %v3326
    %v3407 = vpack.c.b16 %v3331, %v3329
    %v3408 = vpack.c.b16 %v3332, %v3330
    %v3409 = vpack.c.b16 %v3335, %v3333
    %v3410 = vpack.c.b16 %v3336, %v3334
    %v3411 = vpack.c.b16 %v3339, %v3337
    %v3412 = vpack.c.b16 %v3340, %v3338
    %v3413 = vpack.c.b16 %v3343, %v3341
    %v3414 = vpack.c.b16 %v3344, %v3342
    %v3415 = vpack.c.b16 %v3347, %v3345
    %v3416 = vpack.c.b16 %v3348, %v3346
    %v3417 = vpack.c.b16 %v3351, %v3349
    %v3418 = vpack.c.b16 %v3352, %v3350
    %v3419 = vpack.c.b16 %v3355, %v3353
    %v3420 = vpack.c.b16 %v3356, %v3354
    %3485 = vmatprep.subr.bf16.mxu0 %v3372
    %3486 = vmatpush1.bf16.msra.mxu0 %v3371
    %3487 = vmatprep.subr.bf16.mxu0 %v3370
    %3488 = vmatpush1.bf16.msra.mxu0 %v3369
    %3489 = vmatprep.subr.bf16.mxu0 %v3368
    %3490 = vmatpush1.bf16.msra.mxu0 %v3367
    %3491 = vmatprep.subr.bf16.mxu0 %v3366
    %3492 = vmatpush1.bf16.msra.mxu0 %v3365
    %3493 = vmatprep.subr.bf16.mxu0 %v3364
    %3494 = vmatpush1.bf16.msra.mxu0 %v3363
    %3495 = vmatprep.subr.bf16.mxu0 %v3362
    %3496 = vmatpush1.bf16.msra.mxu0 %v3361
    %3497 = vmatprep.subr.bf16.mxu0 %v3360
    %3498 = vmatpush1.bf16.msra.mxu0 %v3359
    %3499 = vmatprep.subr.bf16.mxu0 %v3358
    %3500 = vmatpush1.bf16.msra.mxu0 %v3357
    %3501 = vmatprep.subr.bf16.mxu0 %v3388
    %3502 = vmatpush2.bf16.msra.mxu0 %v3387
    %3503 = vmatprep.subr.bf16.mxu0 %v3386
    %3504 = vmatpush2.bf16.msra.mxu0 %v3385
    %3505 = vmatprep.subr.bf16.mxu0 %v3384
    %3506 = vmatpush2.bf16.msra.mxu0 %v3383
    %3507 = vmatprep.subr.bf16.mxu0 %v3382
    %3508 = vmatpush2.bf16.msra.mxu0 %v3381
    %3509 = vmatprep.subr.bf16.mxu0 %v3380
    %3510 = vmatpush2.bf16.msra.mxu0 %v3379
    %3511 = vmatprep.subr.bf16.mxu0 %v3378
    %3512 = vmatpush2.bf16.msra.mxu0 %v3377
    %3513 = vmatprep.subr.bf16.mxu0 %v3376
    %3514 = vmatpush2.bf16.msra.mxu0 %v3375
    %3515 = vmatprep.subr.bf16.mxu0 %v3374
    %3516 = vmatpush2.bf16.msra.mxu0 %v3373
    %3517 = vmatprep.mubr.bf16.mxu0 %v3138
    %3518 = vmatmul.mubr.bf16.gmra.mxu0 %v3137
    %v3519 = vpop.f32.mrf.mxu0
    %v3520 = vadd.f32 %v3158, %v3519
    %v3521 = vpop.f32.mrf.mxu0
    %v3522 = vadd.f32 %v3162, %v3521
    %v3523 = vpop.f32.mrf.mxu0
    %v3524 = vadd.f32 %v3158, %v3523
    %v3525 = vpop.f32.mrf.mxu0
    %v3526 = vadd.f32 %v3162, %v3525
    %3527 = vmatprep.mubr.bf16.mxu0 %v3142
    %3528 = vmatmul.mubr.bf16.gmra.mxu0 %v3141
    %v3529 = vpop.f32.mrf.mxu0
    %v3530 = vadd.f32 %v3158, %v3529
    %v3531 = vpop.f32.mrf.mxu0
    %v3532 = vadd.f32 %v3162, %v3531
    %v3533 = vpop.f32.mrf.mxu0
    %v3534 = vadd.f32 %v3158, %v3533
    %v3535 = vpop.f32.mrf.mxu0
    %v3536 = vadd.f32 %v3162, %v3535
    %3537 = vmatprep.mubr.bf16.mxu0 %v3146
    %3538 = vmatmul.mubr.bf16.gmra.mxu0 %v3145
    %v3539 = vpop.f32.mrf.mxu0
    %v3540 = vadd.f32 %v3158, %v3539
    %v3541 = vpop.f32.mrf.mxu0
    %v3542 = vadd.f32 %v3162, %v3541
    %v3543 = vpop.f32.mrf.mxu0
    %v3544 = vadd.f32 %v3158, %v3543
    %v3545 = vpop.f32.mrf.mxu0
    %v3546 = vadd.f32 %v3162, %v3545
    %3547 = vmatprep.mubr.bf16.mxu0 %v3150
    %3548 = vmatmul.mubr.bf16.gmra.mxu0 %v3149
    %v3549 = vpop.f32.mrf.mxu0
    %v3550 = vadd.f32 %v3158, %v3549
    %v3551 = vpop.f32.mrf.mxu0
    %v3552 = vadd.f32 %v3162, %v3551
    %v3553 = vpop.f32.mrf.mxu0
    %v3554 = vadd.f32 %v3158, %v3553
    %v3555 = vpop.f32.mrf.mxu0
    %v3556 = vadd.f32 %v3162, %v3555
    %3557 = vdwg.mxu0
    %3558 = vmatprep.subr.bf16.mxu0 %v3404
    %3559 = vmatpush1.bf16.msra.mxu0 %v3403
    %3560 = vmatprep.subr.bf16.mxu0 %v3402
    %3561 = vmatpush1.bf16.msra.mxu0 %v3401
    %3562 = vmatprep.subr.bf16.mxu0 %v3400
    %3563 = vmatpush1.bf16.msra.mxu0 %v3399
    %3564 = vmatprep.subr.bf16.mxu0 %v3398
    %3565 = vmatpush1.bf16.msra.mxu0 %v3397
    %3566 = vmatprep.subr.bf16.mxu0 %v3396
    %3567 = vmatpush1.bf16.msra.mxu0 %v3395
    %3568 = vmatprep.subr.bf16.mxu0 %v3394
    %3569 = vmatpush1.bf16.msra.mxu0 %v3393
    %3570 = vmatprep.subr.bf16.mxu0 %v3392
    %3571 = vmatpush1.bf16.msra.mxu0 %v3391
    %3572 = vmatprep.subr.bf16.mxu0 %v3390
    %3573 = vmatpush1.bf16.msra.mxu0 %v3389
    %3574 = vmatprep.subr.bf16.mxu0 %v3420
    %3575 = vmatpush2.bf16.msra.mxu0 %v3419
    %3576 = vmatprep.subr.bf16.mxu0 %v3418
    %3577 = vmatpush2.bf16.msra.mxu0 %v3417
    %3578 = vmatprep.subr.bf16.mxu0 %v3416
    %3579 = vmatpush2.bf16.msra.mxu0 %v3415
    %3580 = vmatprep.subr.bf16.mxu0 %v3414
    %3581 = vmatpush2.bf16.msra.mxu0 %v3413
    %3582 = vmatprep.subr.bf16.mxu0 %v3412
    %3583 = vmatpush2.bf16.msra.mxu0 %v3411
    %3584 = vmatprep.subr.bf16.mxu0 %v3410
    %3585 = vmatpush2.bf16.msra.mxu0 %v3409
    %3586 = vmatprep.subr.bf16.mxu0 %v3408
    %3587 = vmatpush2.bf16.msra.mxu0 %v3407
    %3588 = vmatprep.subr.bf16.mxu0 %v3406
    %3589 = vmatpush2.bf16.msra.mxu0 %v3405
    %3590 = vmatprep.mubr.bf16.mxu0 %v3140
    %3591 = vmatmul.mubr.bf16.gmra.mxu0 %v3139
    %v3592 = vpop.f32.mrf.mxu0
    %v3593 = vadd.f32 %v3520, %v3592
    %v3594 = vpop.f32.mrf.mxu0
    %v3595 = vadd.f32 %v3522, %v3594
    %v3596 = vpop.f32.mrf.mxu0
    %v3597 = vadd.f32 %v3524, %v3596
    %v3598 = vpop.f32.mrf.mxu0
    %v3599 = vadd.f32 %v3526, %v3598
    %3600 = vmatprep.mubr.bf16.mxu0 %v3144
    %3601 = vmatmul.mubr.bf16.gmra.mxu0 %v3143
    %v3602 = vpop.f32.mrf.mxu0
    %v3603 = vadd.f32 %v3530, %v3602
    %v3604 = vpop.f32.mrf.mxu0
    %v3605 = vadd.f32 %v3532, %v3604
    %v3606 = vpop.f32.mrf.mxu0
    %v3607 = vadd.f32 %v3534, %v3606
    %v3608 = vpop.f32.mrf.mxu0
    %v3609 = vadd.f32 %v3536, %v3608
    %3610 = vmatprep.mubr.bf16.mxu0 %v3148
    %3611 = vmatmul.mubr.bf16.gmra.mxu0 %v3147
    %v3612 = vpop.f32.mrf.mxu0
    %v3613 = vadd.f32 %v3540, %v3612
    %v3614 = vpop.f32.mrf.mxu0
    %v3615 = vadd.f32 %v3542, %v3614
    %v3616 = vpop.f32.mrf.mxu0
    %v3617 = vadd.f32 %v3544, %v3616
    %v3618 = vpop.f32.mrf.mxu0
    %v3619 = vadd.f32 %v3546, %v3618
    %3620 = vmatprep.mubr.bf16.mxu0 %v3152
    %3621 = vmatmul.mubr.bf16.gmra.mxu0 %v3151
    %v3622 = vpop.f32.mrf.mxu0
    %v3623 = vadd.f32 %v3550, %v3622
    %v3624 = vpop.f32.mrf.mxu0
    %v3625 = vadd.f32 %v3552, %v3624
    %v3626 = vpop.f32.mrf.mxu0
    %v3627 = vadd.f32 %v3554, %v3626
    %v3628 = vpop.f32.mrf.mxu0
    %v3629 = vadd.f32 %v3556, %v3628
    %3630 = vdwg.mxu0
    %vm3631 = vcmp.ge.f32.partialorder %v3593, 0.0
    %vm3632 = vcmp.ge.f32.partialorder %v3595, 0.0
    %vm3633 = vcmp.ge.f32.partialorder %v3597, 0.0
    %vm3634 = vcmp.ge.f32.partialorder %v3599, 0.0
    %vm3635 = vcmp.ge.f32.partialorder %v3603, 0.0
    %vm3636 = vcmp.ge.f32.partialorder %v3605, 0.0
    %vm3637 = vcmp.ge.f32.partialorder %v3607, 0.0
    %vm3638 = vcmp.ge.f32.partialorder %v3609, 0.0
    %vm3639 = vcmp.ge.f32.partialorder %v3613, 0.0
    %vm3640 = vcmp.ge.f32.partialorder %v3615, 0.0
    %vm3641 = vcmp.ge.f32.partialorder %v3617, 0.0
    %vm3642 = vcmp.ge.f32.partialorder %v3619, 0.0
    %vm3643 = vcmp.ge.f32.partialorder %v3623, 0.0
    %vm3644 = vcmp.ge.f32.partialorder %v3625, 0.0
    %vm3645 = vcmp.ge.f32.partialorder %v3627, 0.0
    %vm3646 = vcmp.ge.f32.partialorder %v3629, 0.0
    %v3647 = vmul.f32 %v3593, 0.01
    %v3648 = vmul.f32 %v3595, 0.01
    %v3649 = vmul.f32 %v3597, 0.01
    %v3650 = vmul.f32 %v3599, 0.01
    %v3651 = vmul.f32 %v3603, 0.01
    %v3652 = vmul.f32 %v3605, 0.01
    %v3653 = vmul.f32 %v3607, 0.01
    %v3654 = vmul.f32 %v3609, 0.01
    %v3655 = vmul.f32 %v3613, 0.01
    %v3656 = vmul.f32 %v3615, 0.01
    %v3657 = vmul.f32 %v3617, 0.01
    %v3658 = vmul.f32 %v3619, 0.01
    %v3659 = vmul.f32 %v3623, 0.01
    %v3660 = vmul.f32 %v3625, 0.01
    %v3661 = vmul.f32 %v3627, 0.01
    %v3662 = vmul.f32 %v3629, 0.01
    %v3663 = vsel %vm3631, %v3593, %v3647
    %v3664 = vsel %vm3632, %v3595, %v3648
    %v3665 = vsel %vm3633, %v3597, %v3649
    %v3666 = vsel %vm3634, %v3599, %v3650
    %v3667 = vsel %vm3635, %v3603, %v3651
    %v3668 = vsel %vm3636, %v3605, %v3652
    %v3669 = vsel %vm3637, %v3607, %v3653
    %v3670 = vsel %vm3638, %v3609, %v3654
    %v3671 = vsel %vm3639, %v3613, %v3655
    %v3672 = vsel %vm3640, %v3615, %v3656
    %v3673 = vsel %vm3641, %v3617, %v3657
    %v3674 = vsel %vm3642, %v3619, %v3658
    %v3675 = vsel %vm3643, %v3623, %v3659
    %v3676 = vsel %vm3644, %v3625, %v3660
    %v3677 = vsel %vm3645, %v3627, %v3661
    %v3678 = vsel %vm3646, %v3629, %v3662
    %v3679 = vld [vmem:[%s4] sm:$0xf]
    %v3680 = vld [vmem:[%s4 + $0x4] sm:$0xf]
    %v3681 = vld [vmem:[%s4 + $0x8] sm:$0xf]
    %v3682 = vld [vmem:[%s4 + $0xc] sm:$0xf]
    %v3683 = vld [vmem:[%s4 + $0x10] sm:$0xf]
    %v3684 = vld [vmem:[%s4 + $0x14] sm:$0xf]
    %v3685 = vld [vmem:[%s4 + $0x18] sm:$0xf]
    %v3686 = vld [vmem:[%s4 + $0x1c] sm:$0xf]
    %v3687 = vld [vmem:[%s4 + $0x20] sm:$0xf]
    %v3688 = vld [vmem:[%s4 + $0x24] sm:$0xf]
    %v3689 = vld [vmem:[%s4 + $0x28] sm:$0xf]
    %v3690 = vld [vmem:[%s4 + $0x2c] sm:$0xf]
    %v3691 = vld [vmem:[%s4 + $0x30] sm:$0xf]
    %v3692 = vld [vmem:[%s4 + $0x34] sm:$0xf]
    %v3693 = vld [vmem:[%s4 + $0x38] sm:$0xf]
    %v3694 = vld [vmem:[%s4 + $0x3c] sm:$0xf]
    %v3695 = vld [vmem:[%s4 + $0x40] sm:$0xf]
    %v3696 = vld [vmem:[%s4 + $0x44] sm:$0xf]
    %v3697 = vld [vmem:[%s4 + $0x48] sm:$0xf]
    %v3698 = vld [vmem:[%s4 + $0x4c] sm:$0xf]
    %v3699 = vld [vmem:[%s4 + $0x50] sm:$0xf]
    %v3700 = vld [vmem:[%s4 + $0x54] sm:$0xf]
    %v3701 = vld [vmem:[%s4 + $0x58] sm:$0xf]
    %v3702 = vld [vmem:[%s4 + $0x5c] sm:$0xf]
    %v3703 = vld [vmem:[%s4 + $0x60] sm:$0xf]
    %v3704 = vld [vmem:[%s4 + $0x64] sm:$0xf]
    %v3705 = vld [vmem:[%s4 + $0x68] sm:$0xf]
    %v3706 = vld [vmem:[%s4 + $0x6c] sm:$0xf]
    %v3707 = vld [vmem:[%s4 + $0x70] sm:$0xf]
    %v3708 = vld [vmem:[%s4 + $0x74] sm:$0xf]
    %v3709 = vld [vmem:[%s4 + $0x78] sm:$0xf]
    %v3710 = vld [vmem:[%s4 + $0x7c] sm:$0xf]
    %v3711 = vpack.c.bf16 %v3665, %v3663
    %v3712 = vpack.c.bf16 %v3666, %v3664
    %v3713 = vpack.c.bf16 %v3669, %v3667
    %v3714 = vpack.c.bf16 %v3670, %v3668
    %v3715 = vpack.c.bf16 %v3673, %v3671
    %v3716 = vpack.c.bf16 %v3674, %v3672
    %v3717 = vpack.c.bf16 %v3677, %v3675
    %v3718 = vpack.c.bf16 %v3678, %v3676
    %v3719 = vld [vmem:[%s9 + $0xe] sm:$0x1]
    %v3721 = vlaneseq
    %v3722 = vshrl.u32 %v3721, 7
    %v3723 = vsub.s32 0, %v3722
    %v3724 = vrot.slane %v3719, %v3723
    %v3758 = vunpack.c.l.b16 %v3679
    %v3759 = vunpack.c.l.b16 %v3680
    %v3760 = vunpack.c.l.b16 %v3681
    %v3761 = vunpack.c.l.b16 %v3682
    %v3762 = vunpack.c.l.b16 %v3683
    %v3763 = vunpack.c.l.b16 %v3684
    %v3764 = vunpack.c.l.b16 %v3685
    %v3765 = vunpack.c.l.b16 %v3686
    %v3766 = vunpack.c.l.b16 %v3687
    %v3767 = vunpack.c.l.b16 %v3688
    %v3768 = vunpack.c.l.b16 %v3689
    %v3769 = vunpack.c.l.b16 %v3690
    %v3770 = vunpack.c.l.b16 %v3691
    %v3771 = vunpack.c.l.b16 %v3692
    %v3772 = vunpack.c.l.b16 %v3693
    %v3773 = vunpack.c.l.b16 %v3694
    %v3774 = vunpack.c.l.b16 %v3695
    %v3775 = vunpack.c.l.b16 %v3696
    %v3776 = vunpack.c.l.b16 %v3697
    %v3777 = vunpack.c.l.b16 %v3698
    %v3778 = vunpack.c.l.b16 %v3699
    %v3779 = vunpack.c.l.b16 %v3700
    %v3780 = vunpack.c.l.b16 %v3701
    %v3781 = vunpack.c.l.b16 %v3702
    %v3782 = vunpack.c.l.b16 %v3703
    %v3783 = vunpack.c.l.b16 %v3704
    %v3784 = vunpack.c.l.b16 %v3705
    %v3785 = vunpack.c.l.b16 %v3706
    %v3786 = vunpack.c.l.b16 %v3707
    %v3787 = vunpack.c.l.b16 %v3708
    %v3788 = vunpack.c.l.b16 %v3709
    %v3789 = vunpack.c.l.b16 %v3710
    %v3790 = vpack.c.b16 %v3759, %v3758
    %v3791 = vpack.c.b16 %v3761, %v3760
    %v3792 = vpack.c.b16 %v3763, %v3762
    %v3793 = vpack.c.b16 %v3765, %v3764
    %v3794 = vpack.c.b16 %v3767, %v3766
    %v3795 = vpack.c.b16 %v3769, %v3768
    %v3796 = vpack.c.b16 %v3771, %v3770
    %v3797 = vpack.c.b16 %v3773, %v3772
    %v3798 = vpack.c.b16 %v3775, %v3774
    %v3799 = vpack.c.b16 %v3777, %v3776
    %v3800 = vpack.c.b16 %v3779, %v3778
    %v3801 = vpack.c.b16 %v3781, %v3780
    %v3802 = vpack.c.b16 %v3783, %v3782
    %v3803 = vpack.c.b16 %v3785, %v3784
    %v3804 = vpack.c.b16 %v3787, %v3786
    %v3805 = vpack.c.b16 %v3789, %v3788
    %3822 = vmatprep.subr.bf16.mxu0 0
    %3823 = vmatpush1.bf16.msra.mxu0 %v3797
    %3824 = vmatprep.subr.bf16.mxu0 0
    %3825 = vmatpush1.bf16.msra.mxu0 %v3796
    %3826 = vmatprep.subr.bf16.mxu0 0
    %3827 = vmatpush1.bf16.msra.mxu0 %v3795
    %3828 = vmatprep.subr.bf16.mxu0 0
    %3829 = vmatpush1.bf16.msra.mxu0 %v3794
    %3830 = vmatprep.subr.bf16.mxu0 0
    %3831 = vmatpush1.bf16.msra.mxu0 %v3793
    %3832 = vmatprep.subr.bf16.mxu0 0
    %3833 = vmatpush1.bf16.msra.mxu0 %v3792
    %3834 = vmatprep.subr.bf16.mxu0 0
    %3835 = vmatpush1.bf16.msra.mxu0 %v3791
    %3836 = vmatprep.subr.bf16.mxu0 0
    %3837 = vmatpush1.bf16.msra.mxu0 %v3790
    %3838 = vmatprep.subr.bf16.mxu0 0
    %3839 = vmatpush2.bf16.msra.mxu0 %v3805
    %3840 = vmatprep.subr.bf16.mxu0 0
    %3841 = vmatpush2.bf16.msra.mxu0 %v3804
    %3842 = vmatprep.subr.bf16.mxu0 0
    %3843 = vmatpush2.bf16.msra.mxu0 %v3803
    %3844 = vmatprep.subr.bf16.mxu0 0
    %3845 = vmatpush2.bf16.msra.mxu0 %v3802
    %3846 = vmatprep.subr.bf16.mxu0 0
    %3847 = vmatpush2.bf16.msra.mxu0 %v3801
    %3848 = vmatprep.subr.bf16.mxu0 0
    %3849 = vmatpush2.bf16.msra.mxu0 %v3800
    %3850 = vmatprep.subr.bf16.mxu0 0
    %3851 = vmatpush2.bf16.msra.mxu0 %v3799
    %3852 = vmatprep.subr.bf16.mxu0 0
    %3853 = vmatpush2.bf16.msra.mxu0 %v3798
    %3854 = vmatprep.mubr.bf16.mxu0 %v3712
    %3855 = vmatmul.mubr.bf16.gmra.mxu0 %v3711
    %v3856 = vpop.f32.mrf.mxu0
    %v3857 = vadd.f32 %v3724, %v3856
    %v3858 = vpop.f32.mrf.mxu0
    %v3859 = vpop.f32.mrf.mxu0
    %v3860 = vadd.f32 %v3724, %v3859
    %v3861 = vpop.f32.mrf.mxu0
    %3862 = vmatprep.mubr.bf16.mxu0 %v3714
    %3863 = vmatmul.mubr.bf16.gmra.mxu0 %v3713
    %v3864 = vpop.f32.mrf.mxu0
    %v3865 = vadd.f32 %v3724, %v3864
    %v3866 = vpop.f32.mrf.mxu0
    %v3867 = vpop.f32.mrf.mxu0
    %v3868 = vadd.f32 %v3724, %v3867
    %v3869 = vpop.f32.mrf.mxu0
    %3870 = vmatprep.mubr.bf16.mxu0 %v3716
    %3871 = vmatmul.mubr.bf16.gmra.mxu0 %v3715
    %v3872 = vpop.f32.mrf.mxu0
    %v3873 = vadd.f32 %v3724, %v3872
    %v3874 = vpop.f32.mrf.mxu0
    %v3875 = vpop.f32.mrf.mxu0
    %v3876 = vadd.f32 %v3724, %v3875
    %v3877 = vpop.f32.mrf.mxu0
    %3878 = vmatprep.mubr.bf16.mxu0 %v3718
    %3879 = vmatmul.mubr.bf16.gmra.mxu0 %v3717
    %v3880 = vpop.f32.mrf.mxu0
    %v3881 = vadd.f32 %v3724, %v3880
    %v3882 = vpop.f32.mrf.mxu0
    %v3883 = vpop.f32.mrf.mxu0
    %v3884 = vadd.f32 %v3724, %v3883
    %v3885 = vpop.f32.mrf.mxu0
    %3886 = vdwg.mxu0
    %v3887 = vld [vmem:[%s5] sm:$0xff]
    %v3888 = vld [vmem:[%s5 + $0x8] sm:$0xf]
    %v3889 = vld [vmem:[%s5 + $0x24] sm:$0xff]
    %v3890 = vld [vmem:[%s5 + $0x2c] sm:$0xf]
    %v3891 = vld [vmem:[%s5 + $0x48] sm:$0xff]
    %v3892 = vld [vmem:[%s5 + $0x50] sm:$0xf]
    %v3893 = vld [vmem:[%s5 + $0x6c] sm:$0xff]
    %v3894 = vld [vmem:[%s5 + $0x74] sm:$0xf]
    %v3895 = vpack.c.bf16 %v3860, %v3857
    %v3896 = vpack.c.bf16 %v3868, %v3865
    %v3897 = vpack.c.bf16 %v3876, %v3873
    %v3898 = vpack.c.bf16 %v3884, %v3881
    %v3899 = vld [vmem:[%s9 + $0xf] sm:$0x7]
    %v3901 = vlaneseq
    %v3902 = vshrl.u32 %v3901, 7
    %v3903 = vsub.s32 0, %v3902
    %v3904 = vrot.slane %v3899, %v3903
    %v3905 = vlaneseq
    %v3906 = vshrl.u32 %v3905, 7
    %v3907 = vsub.s32 1, %v3906
    %v3908 = vrot.slane %v3899, %v3907
    %v3909 = vlaneseq
    %v3910 = vshrl.u32 %v3909, 7
    %v3911 = vsub.s32 2, %v3910
    %v3912 = vrot.slane %v3899, %v3911
    %v3924 = vunpack.c.l.b16 %v3887
    %v3925 = vunpack.c.h.b16 %v3887
    %v3926 = vunpack.c.l.b16 %v3888
    %v3927 = vunpack.c.l.b16 %v3889
    %v3928 = vunpack.c.h.b16 %v3889
    %v3929 = vunpack.c.l.b16 %v3890
    %v3930 = vunpack.c.l.b16 %v3891
    %v3931 = vunpack.c.h.b16 %v3891
    %v3932 = vunpack.c.l.b16 %v3892
    %v3933 = vunpack.c.l.b16 %v3893
    %v3934 = vunpack.c.h.b16 %v3893
    %v3935 = vunpack.c.l.b16 %v3894
    %v3936 = vpack.c.b16 %v3927, %v3924
    %v3937 = vpack.c.b16 %v3928, %v3925
    %v3938 = vpack.c.b16 %v3929, %v3926
    %v3939 = vpack.c.b16 %v3933, %v3930
    %v3940 = vpack.c.b16 %v3934, %v3931
    %v3941 = vpack.c.b16 %v3935, %v3932
    %vm3948 = vcmask 261120
    %v3950 = vsel %vm3948, %v3895, 0
    %v3953 = vsel %vm3948, %v3896, 0
    %v3956 = vsel %vm3948, %v3897, 0
    %v3959 = vsel %vm3948, %v3898, 0
    %3961 = vmatprep.subr.bf16.mxu0 0
    %3962 = vmatpush1.bf16.msra.mxu0 0
    %3963 = vmatprep.subr.bf16.mxu0 0
    %3964 = vmatpush1.bf16.msra.mxu0 0
    %3965 = vmatprep.subr.bf16.mxu0 0
    %3966 = vmatpush1.bf16.msra.mxu0 0
    %3967 = vmatprep.subr.bf16.mxu0 0
    %3968 = vmatpush1.bf16.msra.mxu0 0
    %3969 = vmatprep.subr.bf16.mxu0 0
    %3970 = vmatpush1.bf16.msra.mxu0 0
    %3971 = vmatprep.subr.bf16.mxu0 0
    %3972 = vmatpush1.bf16.msra.mxu0 0
    %3973 = vmatprep.subr.bf16.mxu0 %v3940
    %3974 = vmatpush1.bf16.msra.mxu0 %v3939
    %3975 = vmatprep.subr.bf16.mxu0 %v3937
    %3976 = vmatpush1.bf16.msra.mxu0 %v3936
    %3977 = vmatprep.subr.bf16.mxu0 0
    %3978 = vmatpush2.bf16.msra.mxu0 0
    %3979 = vmatprep.subr.bf16.mxu0 0
    %3980 = vmatpush2.bf16.msra.mxu0 0
    %3981 = vmatprep.subr.bf16.mxu0 0
    %3982 = vmatpush2.bf16.msra.mxu0 0
    %3983 = vmatprep.subr.bf16.mxu0 0
    %3984 = vmatpush2.bf16.msra.mxu0 0
    %3985 = vmatprep.subr.bf16.mxu0 0
    %3986 = vmatpush2.bf16.msra.mxu0 0
    %3987 = vmatprep.subr.bf16.mxu0 0
    %3988 = vmatpush2.bf16.msra.mxu0 0
    %3989 = vmatprep.subr.bf16.mxu0 0
    %3990 = vmatpush2.bf16.msra.mxu0 0
    %3991 = vmatprep.subr.bf16.mxu0 0
    %3992 = vmatpush2.bf16.msra.mxu0 0
    %3993 = vmatprep.mubr.bf16.mxu0 0
    %3994 = vmatmul.mubr.bf16.gmra.mxu0 %v3950
    %v3995 = vpop.f32.mrf.mxu0
    %v3996 = vadd.f32 %v3904, %v3995
    %v3997 = vpop.f32.mrf.mxu0
    %v3998 = vadd.f32 %v3908, %v3997
    %v3999 = vpop.f32.mrf.mxu0
    %v4000 = vadd.f32 %v3904, %v3999
    %v4001 = vpop.f32.mrf.mxu0
    %v4002 = vadd.f32 %v3908, %v4001
    %4003 = vmatprep.mubr.bf16.mxu0 0
    %4004 = vmatmul.mubr.bf16.gmra.mxu0 %v3953
    %v4005 = vpop.f32.mrf.mxu0
    %v4006 = vadd.f32 %v3904, %v4005
    %v4007 = vpop.f32.mrf.mxu0
    %v4008 = vadd.f32 %v3908, %v4007
    %v4009 = vpop.f32.mrf.mxu0
    %v4010 = vadd.f32 %v3904, %v4009
    %v4011 = vpop.f32.mrf.mxu0
    %v4012 = vadd.f32 %v3908, %v4011
    %4013 = vmatprep.mubr.bf16.mxu0 0
    %4014 = vmatmul.mubr.bf16.gmra.mxu0 %v3956
    %v4015 = vpop.f32.mrf.mxu0
    %v4016 = vadd.f32 %v3904, %v4015
    %v4017 = vpop.f32.mrf.mxu0
    %v4018 = vadd.f32 %v3908, %v4017
    %v4019 = vpop.f32.mrf.mxu0
    %v4020 = vadd.f32 %v3904, %v4019
    %v4021 = vpop.f32.mrf.mxu0
    %v4022 = vadd.f32 %v3908, %v4021
    %4023 = vmatprep.mubr.bf16.mxu0 0
    %4024 = vmatmul.mubr.bf16.gmra.mxu0 %v3959
    %v4025 = vpop.f32.mrf.mxu0
    %v4026 = vadd.f32 %v3904, %v4025
    %v4027 = vpop.f32.mrf.mxu0
    %v4028 = vadd.f32 %v3908, %v4027
    %v4029 = vpop.f32.mrf.mxu0
    %v4030 = vadd.f32 %v3904, %v4029
    %v4031 = vpop.f32.mrf.mxu0
    %v4032 = vadd.f32 %v3908, %v4031
    %4033 = vdwg.mxu0
    %4034 = vmatprep.subr.bf16.mxu0 0
    %4035 = vmatpush1.bf16.msra.mxu0 0
    %4036 = vmatprep.subr.bf16.mxu0 0
    %4037 = vmatpush1.bf16.msra.mxu0 0
    %4038 = vmatprep.subr.bf16.mxu0 0
    %4039 = vmatpush1.bf16.msra.mxu0 0
    %4040 = vmatprep.subr.bf16.mxu0 0
    %4041 = vmatpush1.bf16.msra.mxu0 0
    %4042 = vmatprep.subr.bf16.mxu0 0
    %4043 = vmatpush1.bf16.msra.mxu0 0
    %4044 = vmatprep.subr.bf16.mxu0 0
    %4045 = vmatpush1.bf16.msra.mxu0 0
    %4046 = vmatprep.subr.bf16.mxu0 0
    %4047 = vmatpush1.bf16.msra.mxu0 %v3941
    %4048 = vmatprep.subr.bf16.mxu0 0
    %4049 = vmatpush1.bf16.msra.mxu0 %v3938
    %4050 = vmatprep.subr.bf16.mxu0 0
    %4051 = vmatpush2.bf16.msra.mxu0 0
    %4052 = vmatprep.subr.bf16.mxu0 0
    %4053 = vmatpush2.bf16.msra.mxu0 0
    %4054 = vmatprep.subr.bf16.mxu0 0
    %4055 = vmatpush2.bf16.msra.mxu0 0
    %4056 = vmatprep.subr.bf16.mxu0 0
    %4057 = vmatpush2.bf16.msra.mxu0 0
    %4058 = vmatprep.subr.bf16.mxu0 0
    %4059 = vmatpush2.bf16.msra.mxu0 0
    %4060 = vmatprep.subr.bf16.mxu0 0
    %4061 = vmatpush2.bf16.msra.mxu0 0
    %4062 = vmatprep.subr.bf16.mxu0 0
    %4063 = vmatpush2.bf16.msra.mxu0 0
    %4064 = vmatprep.subr.bf16.mxu0 0
    %4065 = vmatpush2.bf16.msra.mxu0 0
    %4066 = vmatprep.mubr.bf16.mxu0 0
    %4067 = vmatmul.mubr.bf16.gmra.mxu0 %v3950
    %v4068 = vpop.f32.mrf.mxu0
    %v4069 = vadd.f32 %v3912, %v4068
    %v4070 = vpop.f32.mrf.mxu0
    %v4071 = vpop.f32.mrf.mxu0
    %v4072 = vadd.f32 %v3912, %v4071
    %v4073 = vpop.f32.mrf.mxu0
    %4074 = vmatprep.mubr.bf16.mxu0 0
    %4075 = vmatmul.mubr.bf16.gmra.mxu0 %v3953
    %v4076 = vpop.f32.mrf.mxu0
    %v4077 = vadd.f32 %v3912, %v4076
    %v4078 = vpop.f32.mrf.mxu0
    %v4079 = vpop.f32.mrf.mxu0
    %v4080 = vadd.f32 %v3912, %v4079
    %v4081 = vpop.f32.mrf.mxu0
    %4082 = vmatprep.mubr.bf16.mxu0 0
    %4083 = vmatmul.mubr.bf16.gmra.mxu0 %v3956
    %v4084 = vpop.f32.mrf.mxu0
    %v4085 = vadd.f32 %v3912, %v4084
    %v4086 = vpop.f32.mrf.mxu0
    %v4087 = vpop.f32.mrf.mxu0
    %v4088 = vadd.f32 %v3912, %v4087
    %v4089 = vpop.f32.mrf.mxu0
    %4090 = vmatprep.mubr.bf16.mxu0 0
    %4091 = vmatmul.mubr.bf16.gmra.mxu0 %v3959
    %v4092 = vpop.f32.mrf.mxu0
    %v4093 = vadd.f32 %v3912, %v4092
    %v4094 = vpop.f32.mrf.mxu0
    %v4095 = vpop.f32.mrf.mxu0
    %v4096 = vadd.f32 %v3912, %v4095
    %v4097 = vpop.f32.mrf.mxu0
    %4098 = vdwg.mxu0
    %v4099 = vpack.c.bf16 %v4000, %v3996
    %v4100 = vpack.c.bf16 %v4010, %v4006
    %v4101 = vpack.c.bf16 %v4020, %v4016
    %v4102 = vpack.c.bf16 %v4030, %v4026
    %v4103 = vpack.c.bf16 %v4002, %v3998
    %v4104 = vpack.c.bf16 %v4012, %v4008
    %v4105 = vpack.c.bf16 %v4022, %v4018
    %v4106 = vpack.c.bf16 %v4032, %v4028
    %v4107 = vpack.c.bf16 %v4072, %v4069
    %v4108 = vpack.c.bf16 %v4080, %v4077
    %v4109 = vpack.c.bf16 %v4088, %v4085
    %v4110 = vpack.c.bf16 %v4096, %v4093
    %4111 = vmatprep.subr.bf16.mxu0 0
    %4112 = vmatpush1.bf16.xpose.msra.mxu0 0
    %4113 = vmatprep.subr.bf16.mxu0 0
    %4114 = vmatpush1.bf16.xpose.msra.mxu0 0
    %4115 = vmatprep.subr.bf16.mxu0 0
    %4116 = vmatpush1.bf16.xpose.msra.mxu0 0
    %4117 = vmatprep.subr.bf16.mxu0 0
    %4118 = vmatpush1.bf16.xpose.msra.mxu0 0
    %4119 = vmatprep.subr.bf16.mxu0 0
    %4120 = vmatpush1.bf16.xpose.msra.mxu0 %v4106
    %4121 = vmatprep.subr.bf16.mxu0 0
    %4122 = vmatpush1.bf16.xpose.msra.mxu0 %v4105
    %4123 = vmatprep.subr.bf16.mxu0 0
    %4124 = vmatpush1.bf16.xpose.msra.mxu0 %v4104
    %4125 = vmatprep.subr.bf16.mxu0 0
    %4126 = vmatpush1.bf16.xpose.msra.mxu0 %v4103
    %4127 = vmatprep.subr.bf16.mxu0 0
    %4128 = vmatpush2.bf16.xpose.msra.mxu0 0
    %4129 = vmatprep.subr.bf16.mxu0 0
    %4130 = vmatpush2.bf16.xpose.msra.mxu0 0
    %4131 = vmatprep.subr.bf16.mxu0 0
    %4132 = vmatpush2.bf16.xpose.msra.mxu0 0
    %4133 = vmatprep.subr.bf16.mxu0 0
    %4134 = vmatpush2.bf16.xpose.msra.mxu0 0
    %4135 = vmatprep.subr.bf16.mxu0 0
    %4136 = vmatpush2.bf16.xpose.msra.mxu0 0
    %4137 = vmatprep.subr.bf16.mxu0 0
    %4138 = vmatpush2.bf16.xpose.msra.mxu0 0
    %4139 = vmatprep.subr.bf16.mxu0 0
    %4140 = vmatpush2.bf16.xpose.msra.mxu0 0
    %4141 = vmatprep.subr.bf16.mxu0 0
    %4142 = vmatpush2.bf16.xpose.msra.mxu0 0
    %4143 = vmatprep.mubr.bf16.mxu0 0
    %4144 = vmatmul.mubr.bf16.gmra.mxu0 %v4099
    %v4145 = vpop.f32.mrf.mxu0
    %v4146 = vadd.f32 0.0, %v4145
    %v4147 = vpop.f32.mrf.mxu0
    %v4148 = vpop.f32.mrf.mxu0
    %v4149 = vadd.f32 0.0, %v4148
    %v4150 = vpop.f32.mrf.mxu0
    %4151 = vmatprep.mubr.bf16.mxu0 0
    %4152 = vmatmul.mubr.bf16.gmra.mxu0 %v4100
    %v4153 = vpop.f32.mrf.mxu0
    %v4154 = vadd.f32 0.0, %v4153
    %v4155 = vpop.f32.mrf.mxu0
    %v4156 = vpop.f32.mrf.mxu0
    %v4157 = vadd.f32 0.0, %v4156
    %v4158 = vpop.f32.mrf.mxu0
    %4159 = vmatprep.mubr.bf16.mxu0 0
    %4160 = vmatmul.mubr.bf16.gmra.mxu0 %v4101
    %v4161 = vpop.f32.mrf.mxu0
    %v4162 = vadd.f32 0.0, %v4161
    %v4163 = vpop.f32.mrf.mxu0
    %v4164 = vpop.f32.mrf.mxu0
    %v4165 = vadd.f32 0.0, %v4164
    %v4166 = vpop.f32.mrf.mxu0
    %4167 = vmatprep.mubr.bf16.mxu0 0
    %4168 = vmatmul.mubr.bf16.gmra.mxu0 %v4102
    %v4169 = vpop.f32.mrf.mxu0
    %v4170 = vadd.f32 0.0, %v4169
    %v4171 = vpop.f32.mrf.mxu0
    %v4172 = vpop.f32.mrf.mxu0
    %v4173 = vadd.f32 0.0, %v4172
    %v4174 = vpop.f32.mrf.mxu0
    %4175 = vdwg.mxu0
    %vm4176 = vcmask 523264
    %v4177 = vsel %vm4176, %v4146, -inf
    %4178 = vmax.xlane.f32.xlu0 %v4177
    %v4179 = vpop.xlane.xlu0 %4178
    %v4180 = vsel %vm4176, %v4149, -inf
    %4181 = vmax.xlane.f32.xlu0 %v4180
    %v4182 = vpop.xlane.xlu0 %4181
    %v4183 = vsel %vm4176, %v4154, -inf
    %4184 = vmax.xlane.f32.xlu0 %v4183
    %v4185 = vpop.xlane.xlu0 %4184
    %v4186 = vsel %vm4176, %v4157, -inf
    %4187 = vmax.xlane.f32.xlu0 %v4186
    %v4188 = vpop.xlane.xlu0 %4187
    %v4189 = vsel %vm4176, %v4162, -inf
    %4190 = vmax.xlane.f32.xlu0 %v4189
    %v4191 = vpop.xlane.xlu0 %4190
    %v4192 = vsel %vm4176, %v4165, -inf
    %4193 = vmax.xlane.f32.xlu0 %v4192
    %v4194 = vpop.xlane.xlu0 %4193
    %v4195 = vsel %vm4176, %v4170, -inf
    %4196 = vmax.xlane.f32.xlu0 %v4195
    %v4197 = vpop.xlane.xlu0 %4196
    %v4198 = vsel %vm4176, %v4173, -inf
    %4199 = vmax.xlane.f32.xlu0 %v4198
    %v4200 = vpop.xlane.xlu0 %4199
    %v4201 = vsub.f32 %v4146, %v4179
    %v4202 = vsub.f32 %v4149, %v4182
    %v4203 = vsub.f32 %v4154, %v4185
    %v4204 = vsub.f32 %v4157, %v4188
    %v4205 = vsub.f32 %v4162, %v4191
    %v4206 = vsub.f32 %v4165, %v4194
    %v4207 = vsub.f32 %v4170, %v4197
    %v4208 = vsub.f32 %v4173, %v4200
    %v4209 = vmul.f32 %v4201, 1.442695
    %v4210 = vpow.pop %v4209
    %v4211 = vmul.f32 %v4202, 1.442695
    %v4212 = vpow.pop %v4211
    %v4213 = vmul.f32 %v4203, 1.442695
    %v4214 = vpow.pop %v4213
    %v4215 = vmul.f32 %v4204, 1.442695
    %v4216 = vpow.pop %v4215
    %v4217 = vmul.f32 %v4205, 1.442695
    %v4218 = vpow.pop %v4217
    %v4219 = vmul.f32 %v4206, 1.442695
    %v4220 = vpow.pop %v4219
    %v4221 = vmul.f32 %v4207, 1.442695
    %v4222 = vpow.pop %v4221
    %v4223 = vmul.f32 %v4208, 1.442695
    %v4224 = vpow.pop %v4223
    %v4225 = vsel %vm4176, %v4210, 0.0
    %4226 = vadd.xlane.f32.xlu0 %v4225
    %v4227 = vpop.xlane.xlu0 %4226
    %v4228 = vsel %vm4176, %v4212, 0.0
    %4229 = vadd.xlane.f32.xlu0 %v4228
    %v4230 = vpop.xlane.xlu0 %4229
    %v4231 = vsel %vm4176, %v4214, 0.0
    %4232 = vadd.xlane.f32.xlu0 %v4231
    %v4233 = vpop.xlane.xlu0 %4232
    %v4234 = vsel %vm4176, %v4216, 0.0
    %4235 = vadd.xlane.f32.xlu0 %v4234
    %v4236 = vpop.xlane.xlu0 %4235
    %v4237 = vsel %vm4176, %v4218, 0.0
    %4238 = vadd.xlane.f32.xlu0 %v4237
    %v4239 = vpop.xlane.xlu0 %4238
    %v4240 = vsel %vm4176, %v4220, 0.0
    %4241 = vadd.xlane.f32.xlu0 %v4240
    %v4242 = vpop.xlane.xlu0 %4241
    %v4243 = vsel %vm4176, %v4222, 0.0
    %4244 = vadd.xlane.f32.xlu0 %v4243
    %v4245 = vpop.xlane.xlu0 %4244
    %v4246 = vsel %vm4176, %v4224, 0.0
    %4247 = vadd.xlane.f32.xlu0 %v4246
    %v4248 = vpop.xlane.xlu0 %4247
    %v4249 = vrcp.pop %v4227
    %v4250 = vrcp.pop %v4230
    %v4251 = vrcp.pop %v4233
    %v4252 = vrcp.pop %v4236
    %v4253 = vrcp.pop %v4239
    %v4254 = vrcp.pop %v4242
    %v4255 = vrcp.pop %v4245
    %v4256 = vrcp.pop %v4248
    %v4257 = vmul.f32 %v4210, %v4249
    %v4258 = vmul.f32 %v4212, %v4250
    %v4259 = vmul.f32 %v4214, %v4251
    %v4260 = vmul.f32 %v4216, %v4252
    %v4261 = vmul.f32 %v4218, %v4253
    %v4262 = vmul.f32 %v4220, %v4254
    %v4263 = vmul.f32 %v4222, %v4255
    %v4264 = vmul.f32 %v4224, %v4256
    %v4265 = vpack.c.bf16 %v4258, %v4257
    %v4266 = vpack.c.bf16 %v4260, %v4259
    %v4267 = vpack.c.bf16 %v4262, %v4261
    %v4268 = vpack.c.bf16 %v4264, %v4263
    %v4270 = vsel %vm4176, %v4265, 0
    %v4273 = vsel %vm4176, %v4266, 0
    %v4276 = vsel %vm4176, %v4267, 0
    %v4279 = vsel %vm4176, %v4268, 0
    %4281 = vmatprep.subr.bf16.mxu0 0
    %4282 = vmatpush1.bf16.msra.mxu0 0
    %4283 = vmatprep.subr.bf16.mxu0 0
    %4284 = vmatpush1.bf16.msra.mxu0 0
    %4285 = vmatprep.subr.bf16.mxu0 0
    %4286 = vmatpush1.bf16.msra.mxu0 0
    %4287 = vmatprep.subr.bf16.mxu0 0
    %4288 = vmatpush1.bf16.msra.mxu0 0
    %4289 = vmatprep.subr.bf16.mxu0 0
    %4290 = vmatpush1.bf16.msra.mxu0 %v4110
    %4291 = vmatprep.subr.bf16.mxu0 0
    %4292 = vmatpush1.bf16.msra.mxu0 %v4109
    %4293 = vmatprep.subr.bf16.mxu0 0
    %4294 = vmatpush1.bf16.msra.mxu0 %v4108
    %4295 = vmatprep.subr.bf16.mxu0 0
    %4296 = vmatpush1.bf16.msra.mxu0 %v4107
    %4297 = vmatprep.subr.bf16.mxu0 0
    %4298 = vmatpush2.bf16.msra.mxu0 0
    %4299 = vmatprep.subr.bf16.mxu0 0
    %4300 = vmatpush2.bf16.msra.mxu0 0
    %4301 = vmatprep.subr.bf16.mxu0 0
    %4302 = vmatpush2.bf16.msra.mxu0 0
    %4303 = vmatprep.subr.bf16.mxu0 0
    %4304 = vmatpush2.bf16.msra.mxu0 0
    %4305 = vmatprep.subr.bf16.mxu0 0
    %4306 = vmatpush2.bf16.msra.mxu0 0
    %4307 = vmatprep.subr.bf16.mxu0 0
    %4308 = vmatpush2.bf16.msra.mxu0 0
    %4309 = vmatprep.subr.bf16.mxu0 0
    %4310 = vmatpush2.bf16.msra.mxu0 0
    %4311 = vmatprep.subr.bf16.mxu0 0
    %4312 = vmatpush2.bf16.msra.mxu0 0
    %4313 = vmatprep.mubr.bf16.mxu0 0
    %4314 = vmatmul.mubr.bf16.gmra.mxu0 %v4270
    %v4315 = vpop.f32.mrf.mxu0
    %v4316 = vadd.f32 0.0, %v4315
    %v4317 = vpop.f32.mrf.mxu0
    %v4318 = vpop.f32.mrf.mxu0
    %v4319 = vadd.f32 0.0, %v4318
    %v4320 = vpop.f32.mrf.mxu0
    %4321 = vmatprep.mubr.bf16.mxu0 0
    %4322 = vmatmul.mubr.bf16.gmra.mxu0 %v4273
    %v4323 = vpop.f32.mrf.mxu0
    %v4324 = vadd.f32 0.0, %v4323
    %v4325 = vpop.f32.mrf.mxu0
    %v4326 = vpop.f32.mrf.mxu0
    %v4327 = vadd.f32 0.0, %v4326
    %v4328 = vpop.f32.mrf.mxu0
    %4329 = vmatprep.mubr.bf16.mxu0 0
    %4330 = vmatmul.mubr.bf16.gmra.mxu0 %v4276
    %v4331 = vpop.f32.mrf.mxu0
    %v4332 = vadd.f32 0.0, %v4331
    %v4333 = vpop.f32.mrf.mxu0
    %v4334 = vpop.f32.mrf.mxu0
    %v4335 = vadd.f32 0.0, %v4334
    %v4336 = vpop.f32.mrf.mxu0
    %4337 = vmatprep.mubr.bf16.mxu0 0
    %4338 = vmatmul.mubr.bf16.gmra.mxu0 %v4279
    %v4339 = vpop.f32.mrf.mxu0
    %v4340 = vadd.f32 0.0, %v4339
    %v4341 = vpop.f32.mrf.mxu0
    %v4342 = vpop.f32.mrf.mxu0
    %v4343 = vadd.f32 0.0, %v4342
    %v4344 = vpop.f32.mrf.mxu0
    %4345 = vdwg.mxu0
    %v4346 = vld [vmem:[%s5 + $0xc] sm:$0xf]
    %v4347 = vld [vmem:[%s5 + $0x30] sm:$0xf]
    %v4348 = vld [vmem:[%s5 + $0x54] sm:$0xf]
    %v4349 = vld [vmem:[%s5 + $0x78] sm:$0xf]
    %v4350 = vpack.c.bf16 %v4319, %v4316
    %v4351 = vpack.c.bf16 %v4327, %v4324
    %v4352 = vpack.c.bf16 %v4335, %v4332
    %v4353 = vpack.c.bf16 %v4343, %v4340
    %v4354 = vld [vmem:[%s9 + $0x12] sm:$0x1]
    %v4356 = vlaneseq
    %v4357 = vshrl.u32 %v4356, 7
    %v4358 = vsub.s32 0, %v4357
    %v4359 = vrot.slane %v4354, %v4358
    %v4365 = vunpack.c.l.b16 %v4346
    %v4366 = vunpack.c.l.b16 %v4347
    %v4367 = vunpack.c.l.b16 %v4348
    %v4368 = vunpack.c.l.b16 %v4349
    %v4369 = vpack.c.b16 %v4366, %v4365
    %v4370 = vpack.c.b16 %v4368, %v4367
    %v4374 = vsel %vm3948, %v4350, 0
    %v4377 = vsel %vm3948, %v4351, 0
    %v4380 = vsel %vm3948, %v4352, 0
    %v4383 = vsel %vm3948, %v4353, 0
    %4385 = vmatprep.subr.bf16.mxu0 0
    %4386 = vmatpush1.bf16.msra.mxu0 0
    %4387 = vmatprep.subr.bf16.mxu0 0
    %4388 = vmatpush1.bf16.msra.mxu0 0
    %4389 = vmatprep.subr.bf16.mxu0 0
    %4390 = vmatpush1.bf16.msra.mxu0 0
    %4391 = vmatprep.subr.bf16.mxu0 0
    %4392 = vmatpush1.bf16.msra.mxu0 0
    %4393 = vmatprep.subr.bf16.mxu0 0
    %4394 = vmatpush1.bf16.msra.mxu0 0
    %4395 = vmatprep.subr.bf16.mxu0 0
    %4396 = vmatpush1.bf16.msra.mxu0 0
    %4397 = vmatprep.subr.bf16.mxu0 0
    %4398 = vmatpush1.bf16.msra.mxu0 %v4370
    %4399 = vmatprep.subr.bf16.mxu0 0
    %4400 = vmatpush1.bf16.msra.mxu0 %v4369
    %4401 = vmatprep.subr.bf16.mxu0 0
    %4402 = vmatpush2.bf16.msra.mxu0 0
    %4403 = vmatprep.subr.bf16.mxu0 0
    %4404 = vmatpush2.bf16.msra.mxu0 0
    %4405 = vmatprep.subr.bf16.mxu0 0
    %4406 = vmatpush2.bf16.msra.mxu0 0
    %4407 = vmatprep.subr.bf16.mxu0 0
    %4408 = vmatpush2.bf16.msra.mxu0 0
    %4409 = vmatprep.subr.bf16.mxu0 0
    %4410 = vmatpush2.bf16.msra.mxu0 0
    %4411 = vmatprep.subr.bf16.mxu0 0
    %4412 = vmatpush2.bf16.msra.mxu0 0
    %4413 = vmatprep.subr.bf16.mxu0 0
    %4414 = vmatpush2.bf16.msra.mxu0 0
    %4415 = vmatprep.subr.bf16.mxu0 0
    %4416 = vmatpush2.bf16.msra.mxu0 0
    %4417 = vmatprep.mubr.bf16.mxu0 0
    %4418 = vmatmul.mubr.bf16.gmra.mxu0 %v4374
    %v4419 = vpop.f32.mrf.mxu0
    %v4420 = vadd.f32 %v4359, %v4419
    %v4421 = vpop.f32.mrf.mxu0
    %v4422 = vpop.f32.mrf.mxu0
    %v4423 = vadd.f32 %v4359, %v4422
    %v4424 = vpop.f32.mrf.mxu0
    %4425 = vmatprep.mubr.bf16.mxu0 0
    %4426 = vmatmul.mubr.bf16.gmra.mxu0 %v4377
    %v4427 = vpop.f32.mrf.mxu0
    %v4428 = vadd.f32 %v4359, %v4427
    %v4429 = vpop.f32.mrf.mxu0
    %v4430 = vpop.f32.mrf.mxu0
    %v4431 = vadd.f32 %v4359, %v4430
    %v4432 = vpop.f32.mrf.mxu0
    %4433 = vmatprep.mubr.bf16.mxu0 0
    %4434 = vmatmul.mubr.bf16.gmra.mxu0 %v4380
    %v4435 = vpop.f32.mrf.mxu0
    %v4436 = vadd.f32 %v4359, %v4435
    %v4437 = vpop.f32.mrf.mxu0
    %v4438 = vpop.f32.mrf.mxu0
    %v4439 = vadd.f32 %v4359, %v4438
    %v4440 = vpop.f32.mrf.mxu0
    %4441 = vmatprep.mubr.bf16.mxu0 0
    %4442 = vmatmul.mubr.bf16.gmra.mxu0 %v4383
    %v4443 = vpop.f32.mrf.mxu0
    %v4444 = vadd.f32 %v4359, %v4443
    %v4445 = vpop.f32.mrf.mxu0
    %v4446 = vpop.f32.mrf.mxu0
    %v4447 = vadd.f32 %v4359, %v4446
    %v4448 = vpop.f32.mrf.mxu0
    %4449 = vdwg.mxu0
    %v4450 = vadd.f32 %v3857, %v4420
    %v4451 = vadd.f32 %v3860, %v4423
    %v4452 = vadd.f32 %v3865, %v4428
    %v4453 = vadd.f32 %v3868, %v4431
    %v4454 = vadd.f32 %v3873, %v4436
    %v4455 = vadd.f32 %v3876, %v4439
    %v4456 = vadd.f32 %v3881, %v4444
    %v4457 = vadd.f32 %v3884, %v4447
    %v4458 = vld [vmem:[%s9 + $0x16] sm:$0x1]
    %v4459 = vld [vmem:[%s9 + $0x17] sm:$0x1]
    %v4460 = vsel %vm3948, %v4450, 0.0
    %4461 = vadd.xlane.f32.xlu0 %v4460
    %v4462 = vpop.xlane.xlu0 %4461
    %v4463 = vsel %vm3948, %v4451, 0.0
    %4464 = vadd.xlane.f32.xlu0 %v4463
    %v4465 = vpop.xlane.xlu0 %4464
    %v4466 = vsel %vm3948, %v4452, 0.0
    %4467 = vadd.xlane.f32.xlu0 %v4466
    %v4468 = vpop.xlane.xlu0 %4467
    %v4469 = vsel %vm3948, %v4453, 0.0
    %4470 = vadd.xlane.f32.xlu0 %v4469
    %v4471 = vpop.xlane.xlu0 %4470
    %v4472 = vsel %vm3948, %v4454, 0.0
    %4473 = vadd.xlane.f32.xlu0 %v4472
    %v4474 = vpop.xlane.xlu0 %4473
    %v4475 = vsel %vm3948, %v4455, 0.0
    %4476 = vadd.xlane.f32.xlu0 %v4475
    %v4477 = vpop.xlane.xlu0 %4476
    %v4478 = vsel %vm3948, %v4456, 0.0
    %4479 = vadd.xlane.f32.xlu0 %v4478
    %v4480 = vpop.xlane.xlu0 %4479
    %v4481 = vsel %vm3948, %v4457, 0.0
    %4482 = vadd.xlane.f32.xlu0 %v4481
    %v4483 = vpop.xlane.xlu0 %4482
    %v4484 = vrcp.pop 32.0
    %v4485 = vmul.f32 %v4462, %v4484
    %v4486 = vmul.f32 %v4465, %v4484
    %v4487 = vmul.f32 %v4468, %v4484
    %v4488 = vmul.f32 %v4471, %v4484
    %v4489 = vmul.f32 %v4474, %v4484
    %v4490 = vmul.f32 %v4477, %v4484
    %v4491 = vmul.f32 %v4480, %v4484
    %v4492 = vmul.f32 %v4483, %v4484
    %v4493 = vsub.f32 %v4450, %v4485
    %v4494 = vsub.f32 %v4451, %v4486
    %v4495 = vsub.f32 %v4452, %v4487
    %v4496 = vsub.f32 %v4453, %v4488
    %v4497 = vsub.f32 %v4454, %v4489
    %v4498 = vsub.f32 %v4455, %v4490
    %v4499 = vsub.f32 %v4456, %v4491
    %v4500 = vsub.f32 %v4457, %v4492
    %v4501 = vmul.f32 %v4493, %v4493
    %v4502 = vmul.f32 %v4494, %v4494
    %v4503 = vmul.f32 %v4495, %v4495
    %v4504 = vmul.f32 %v4496, %v4496
    %v4505 = vmul.f32 %v4497, %v4497
    %v4506 = vmul.f32 %v4498, %v4498
    %v4507 = vmul.f32 %v4499, %v4499
    %v4508 = vmul.f32 %v4500, %v4500
    %v4509 = vsel %vm3948, %v4501, 0.0
    %4510 = vadd.xlane.f32.xlu0 %v4509
    %v4511 = vpop.xlane.xlu0 %4510
    %v4512 = vsel %vm3948, %v4502, 0.0
    %4513 = vadd.xlane.f32.xlu0 %v4512
    %v4514 = vpop.xlane.xlu0 %4513
    %v4515 = vsel %vm3948, %v4503, 0.0
    %4516 = vadd.xlane.f32.xlu0 %v4515
    %v4517 = vpop.xlane.xlu0 %4516
    %v4518 = vsel %vm3948, %v4504, 0.0
    %4519 = vadd.xlane.f32.xlu0 %v4518
    %v4520 = vpop.xlane.xlu0 %4519
    %v4521 = vsel %vm3948, %v4505, 0.0
    %4522 = vadd.xlane.f32.xlu0 %v4521
    %v4523 = vpop.xlane.xlu0 %4522
    %v4524 = vsel %vm3948, %v4506, 0.0
    %4525 = vadd.xlane.f32.xlu0 %v4524
    %v4526 = vpop.xlane.xlu0 %4525
    %v4527 = vsel %vm3948, %v4507, 0.0
    %4528 = vadd.xlane.f32.xlu0 %v4527
    %v4529 = vpop.xlane.xlu0 %4528
    %v4530 = vsel %vm3948, %v4508, 0.0
    %4531 = vadd.xlane.f32.xlu0 %v4530
    %v4532 = vpop.xlane.xlu0 %4531
    %v4533 = vmul.f32 %v4511, %v4484
    %v4534 = vmul.f32 %v4514, %v4484
    %v4535 = vmul.f32 %v4517, %v4484
    %v4536 = vmul.f32 %v4520, %v4484
    %v4537 = vmul.f32 %v4523, %v4484
    %v4538 = vmul.f32 %v4526, %v4484
    %v4539 = vmul.f32 %v4529, %v4484
    %v4540 = vmul.f32 %v4532, %v4484
    %v4541 = vadd.f32 %v4533, 1e-05
    %v4542 = vadd.f32 %v4534, 1e-05
    %v4543 = vadd.f32 %v4535, 1e-05
    %v4544 = vadd.f32 %v4536, 1e-05
    %v4545 = vadd.f32 %v4537, 1e-05
    %v4546 = vadd.f32 %v4538, 1e-05
    %v4547 = vadd.f32 %v4539, 1e-05
    %v4548 = vadd.f32 %v4540, 1e-05
    %v4549 = vrsqrt.pop %v4541
    %v4550 = vrsqrt.pop %v4542
    %v4551 = vrsqrt.pop %v4543
    %v4552 = vrsqrt.pop %v4544
    %v4553 = vrsqrt.pop %v4545
    %v4554 = vrsqrt.pop %v4546
    %v4555 = vrsqrt.pop %v4547
    %v4556 = vrsqrt.pop %v4548
    %v4557 = vmul.f32 %v4493, %v4549
    %v4558 = vmul.f32 %v4494, %v4550
    %v4559 = vmul.f32 %v4495, %v4551
    %v4560 = vmul.f32 %v4496, %v4552
    %v4561 = vmul.f32 %v4497, %v4553
    %v4562 = vmul.f32 %v4498, %v4554
    %v4563 = vmul.f32 %v4499, %v4555
    %v4564 = vmul.f32 %v4500, %v4556
    %v4566 = vlaneseq
    %v4567 = vshrl.u32 %v4566, 7
    %v4568 = vsub.s32 0, %v4567
    %v4569 = vrot.slane %v4458, %v4568
    %v4571 = vmul.f32 %v4557, %v4569
    %v4572 = vmul.f32 %v4558, %v4569
    %v4573 = vmul.f32 %v4559, %v4569
    %v4574 = vmul.f32 %v4560, %v4569
    %v4575 = vmul.f32 %v4561, %v4569
    %v4576 = vmul.f32 %v4562, %v4569
    %v4577 = vmul.f32 %v4563, %v4569
    %v4578 = vmul.f32 %v4564, %v4569
    %v4580 = vlaneseq
    %v4581 = vshrl.u32 %v4580, 7
    %v4582 = vsub.s32 0, %v4581
    %v4583 = vrot.slane %v4459, %v4582
    %v4585 = vadd.f32 %v4571, %v4583
    %v4586 = vadd.f32 %v4572, %v4583
    %v4587 = vadd.f32 %v4573, %v4583
    %v4588 = vadd.f32 %v4574, %v4583
    %v4589 = vadd.f32 %v4575, %v4583
    %v4590 = vadd.f32 %v4576, %v4583
    %v4591 = vadd.f32 %v4577, %v4583
    %v4592 = vadd.f32 %v4578, %v4583
    %v4593 = vld [vmem:[%s5 + $0x10] sm:$0xff]
    %v4594 = vld [vmem:[%s5 + $0x34] sm:$0xff]
    %v4595 = vld [vmem:[%s5 + $0x58] sm:$0xff]
    %v4596 = vld [vmem:[%s5 + $0x7c] sm:$0xff]
    %v4597 = vpack.c.bf16 %v4586, %v4585
    %v4598 = vpack.c.bf16 %v4588, %v4587
    %v4599 = vpack.c.bf16 %v4590, %v4589
    %v4600 = vpack.c.bf16 %v4592, %v4591
    %v4601 = vld [vmem:[%s9 + $0x13] sm:$0x3]
    %v4603 = vlaneseq
    %v4604 = vshrl.u32 %v4603, 7
    %v4605 = vsub.s32 0, %v4604
    %v4606 = vrot.slane %v4601, %v4605
    %v4607 = vlaneseq
    %v4608 = vshrl.u32 %v4607, 7
    %v4609 = vsub.s32 1, %v4608
    %v4610 = vrot.slane %v4601, %v4609
    %v4617 = vunpack.c.l.b16 %v4593
    %v4618 = vunpack.c.h.b16 %v4593
    %v4619 = vunpack.c.l.b16 %v4594
    %v4620 = vunpack.c.h.b16 %v4594
    %v4621 = vunpack.c.l.b16 %v4595
    %v4622 = vunpack.c.h.b16 %v4595
    %v4623 = vunpack.c.l.b16 %v4596
    %v4624 = vunpack.c.h.b16 %v4596
    %v4625 = vpack.c.b16 %v4619, %v4617
    %v4626 = vpack.c.b16 %v4620, %v4618
    %v4627 = vpack.c.b16 %v4623, %v4621
    %v4628 = vpack.c.b16 %v4624, %v4622
    %v4634 = vsel %vm3948, %v4597, 0
    %v4637 = vsel %vm3948, %v4598, 0
    %v4640 = vsel %vm3948, %v4599, 0
    %v4643 = vsel %vm3948, %v4600, 0
    %4645 = vmatprep.subr.bf16.mxu0 0
    %4646 = vmatpush1.bf16.msra.mxu0 0
    %4647 = vmatprep.subr.bf16.mxu0 0
    %4648 = vmatpush1.bf16.msra.mxu0 0
    %4649 = vmatprep.subr.bf16.mxu0 0
    %4650 = vmatpush1.bf16.msra.mxu0 0
    %4651 = vmatprep.subr.bf16.mxu0 0
    %4652 = vmatpush1.bf16.msra.mxu0 0
    %4653 = vmatprep.subr.bf16.mxu0 0
    %4654 = vmatpush1.bf16.msra.mxu0 0
    %4655 = vmatprep.subr.bf16.mxu0 0
    %4656 = vmatpush1.bf16.msra.mxu0 0
    %4657 = vmatprep.subr.bf16.mxu0 %v4628
    %4658 = vmatpush1.bf16.msra.mxu0 %v4627
    %4659 = vmatprep.subr.bf16.mxu0 %v4626
    %4660 = vmatpush1.bf16.msra.mxu0 %v4625
    %4661 = vmatprep.subr.bf16.mxu0 0
    %4662 = vmatpush2.bf16.msra.mxu0 0
    %4663 = vmatprep.subr.bf16.mxu0 0
    %4664 = vmatpush2.bf16.msra.mxu0 0
    %4665 = vmatprep.subr.bf16.mxu0 0
    %4666 = vmatpush2.bf16.msra.mxu0 0
    %4667 = vmatprep.subr.bf16.mxu0 0
    %4668 = vmatpush2.bf16.msra.mxu0 0
    %4669 = vmatprep.subr.bf16.mxu0 0
    %4670 = vmatpush2.bf16.msra.mxu0 0
    %4671 = vmatprep.subr.bf16.mxu0 0
    %4672 = vmatpush2.bf16.msra.mxu0 0
    %4673 = vmatprep.subr.bf16.mxu0 0
    %4674 = vmatpush2.bf16.msra.mxu0 0
    %4675 = vmatprep.subr.bf16.mxu0 0
    %4676 = vmatpush2.bf16.msra.mxu0 0
    %4677 = vmatprep.mubr.bf16.mxu0 0
    %4678 = vmatmul.mubr.bf16.gmra.mxu0 %v4634
    %v4679 = vpop.f32.mrf.mxu0
    %v4680 = vadd.f32 %v4606, %v4679
    %v4681 = vpop.f32.mrf.mxu0
    %v4682 = vadd.f32 %v4610, %v4681
    %v4683 = vpop.f32.mrf.mxu0
    %v4684 = vadd.f32 %v4606, %v4683
    %v4685 = vpop.f32.mrf.mxu0
    %v4686 = vadd.f32 %v4610, %v4685
    %4687 = vmatprep.mubr.bf16.mxu0 0
    %4688 = vmatmul.mubr.bf16.gmra.mxu0 %v4637
    %v4689 = vpop.f32.mrf.mxu0
    %v4690 = vadd.f32 %v4606, %v4689
    %v4691 = vpop.f32.mrf.mxu0
    %v4692 = vadd.f32 %v4610, %v4691
    %v4693 = vpop.f32.mrf.mxu0
    %v4694 = vadd.f32 %v4606, %v4693
    %v4695 = vpop.f32.mrf.mxu0
    %v4696 = vadd.f32 %v4610, %v4695
    %4697 = vmatprep.mubr.bf16.mxu0 0
    %4698 = vmatmul.mubr.bf16.gmra.mxu0 %v4640
    %v4699 = vpop.f32.mrf.mxu0
    %v4700 = vadd.f32 %v4606, %v4699
    %v4701 = vpop.f32.mrf.mxu0
    %v4702 = vadd.f32 %v4610, %v4701
    %v4703 = vpop.f32.mrf.mxu0
    %v4704 = vadd.f32 %v4606, %v4703
    %v4705 = vpop.f32.mrf.mxu0
    %v4706 = vadd.f32 %v4610, %v4705
    %4707 = vmatprep.mubr.bf16.mxu0 0
    %4708 = vmatmul.mubr.bf16.gmra.mxu0 %v4643
    %v4709 = vpop.f32.mrf.mxu0
    %v4710 = vadd.f32 %v4606, %v4709
    %v4711 = vpop.f32.mrf.mxu0
    %v4712 = vadd.f32 %v4610, %v4711
    %v4713 = vpop.f32.mrf.mxu0
    %v4714 = vadd.f32 %v4606, %v4713
    %v4715 = vpop.f32.mrf.mxu0
    %v4716 = vadd.f32 %v4610, %v4715
    %4717 = vdwg.mxu0
    %v4718 = vmax.f32 %v4680, 0.0
    %v4719 = vmax.f32 %v4682, 0.0
    %v4720 = vmax.f32 %v4684, 0.0
    %v4721 = vmax.f32 %v4686, 0.0
    %v4722 = vmax.f32 %v4690, 0.0
    %v4723 = vmax.f32 %v4692, 0.0
    %v4724 = vmax.f32 %v4694, 0.0
    %v4725 = vmax.f32 %v4696, 0.0
    %v4726 = vmax.f32 %v4700, 0.0
    %v4727 = vmax.f32 %v4702, 0.0
    %v4728 = vmax.f32 %v4704, 0.0
    %v4729 = vmax.f32 %v4706, 0.0
    %v4730 = vmax.f32 %v4710, 0.0
    %v4731 = vmax.f32 %v4712, 0.0
    %v4732 = vmax.f32 %v4714, 0.0
    %v4733 = vmax.f32 %v4716, 0.0
    %v4734 = vld [vmem:[%s6] sm:$0xf]
    %v4735 = vld [vmem:[%s6 + $0x4] sm:$0xf]
    %v4736 = vld [vmem:[%s6 + $0x8] sm:$0xf]
    %v4737 = vld [vmem:[%s6 + $0xc] sm:$0xf]
    %v4738 = vld [vmem:[%s6 + $0x10] sm:$0xf]
    %v4739 = vld [vmem:[%s6 + $0x14] sm:$0xf]
    %v4740 = vld [vmem:[%s6 + $0x18] sm:$0xf]
    %v4741 = vld [vmem:[%s6 + $0x1c] sm:$0xf]
    %v4742 = vld [vmem:[%s6 + $0x20] sm:$0xf]
    %v4743 = vld [vmem:[%s6 + $0x24] sm:$0xf]
    %v4744 = vld [vmem:[%s6 + $0x28] sm:$0xf]
    %v4745 = vld [vmem:[%s6 + $0x2c] sm:$0xf]
    %v4746 = vld [vmem:[%s6 + $0x30] sm:$0xf]
    %v4747 = vld [vmem:[%s6 + $0x34] sm:$0xf]
    %v4748 = vld [vmem:[%s6 + $0x38] sm:$0xf]
    %v4749 = vld [vmem:[%s6 + $0x3c] sm:$0xf]
    %v4750 = vld [vmem:[%s6 + $0x40] sm:$0xf]
    %v4751 = vld [vmem:[%s6 + $0x44] sm:$0xf]
    %v4752 = vld [vmem:[%s6 + $0x48] sm:$0xf]
    %v4753 = vld [vmem:[%s6 + $0x4c] sm:$0xf]
    %v4754 = vld [vmem:[%s6 + $0x50] sm:$0xf]
    %v4755 = vld [vmem:[%s6 + $0x54] sm:$0xf]
    %v4756 = vld [vmem:[%s6 + $0x58] sm:$0xf]
    %v4757 = vld [vmem:[%s6 + $0x5c] sm:$0xf]
    %v4758 = vld [vmem:[%s6 + $0x60] sm:$0xf]
    %v4759 = vld [vmem:[%s6 + $0x64] sm:$0xf]
    %v4760 = vld [vmem:[%s6 + $0x68] sm:$0xf]
    %v4761 = vld [vmem:[%s6 + $0x6c] sm:$0xf]
    %v4762 = vld [vmem:[%s6 + $0x70] sm:$0xf]
    %v4763 = vld [vmem:[%s6 + $0x74] sm:$0xf]
    %v4764 = vld [vmem:[%s6 + $0x78] sm:$0xf]
    %v4765 = vld [vmem:[%s6 + $0x7c] sm:$0xf]
    %v4766 = vpack.c.bf16 %v4720, %v4718
    %v4767 = vpack.c.bf16 %v4721, %v4719
    %v4768 = vpack.c.bf16 %v4724, %v4722
    %v4769 = vpack.c.bf16 %v4725, %v4723
    %v4770 = vpack.c.bf16 %v4728, %v4726
    %v4771 = vpack.c.bf16 %v4729, %v4727
    %v4772 = vpack.c.bf16 %v4732, %v4730
    %v4773 = vpack.c.bf16 %v4733, %v4731
    %v4774 = vld [vmem:[%s9 + $0x15] sm:$0x1]
    %v4776 = vlaneseq
    %v4777 = vshrl.u32 %v4776, 7
    %v4778 = vsub.s32 0, %v4777
    %v4779 = vrot.slane %v4774, %v4778
    %v4813 = vunpack.c.l.b16 %v4734
    %v4814 = vunpack.c.l.b16 %v4735
    %v4815 = vunpack.c.l.b16 %v4736
    %v4816 = vunpack.c.l.b16 %v4737
    %v4817 = vunpack.c.l.b16 %v4738
    %v4818 = vunpack.c.l.b16 %v4739
    %v4819 = vunpack.c.l.b16 %v4740
    %v4820 = vunpack.c.l.b16 %v4741
    %v4821 = vunpack.c.l.b16 %v4742
    %v4822 = vunpack.c.l.b16 %v4743
    %v4823 = vunpack.c.l.b16 %v4744
    %v4824 = vunpack.c.l.b16 %v4745
    %v4825 = vunpack.c.l.b16 %v4746
    %v4826 = vunpack.c.l.b16 %v4747
    %v4827 = vunpack.c.l.b16 %v4748
    %v4828 = vunpack.c.l.b16 %v4749
    %v4829 = vunpack.c.l.b16 %v4750
    %v4830 = vunpack.c.l.b16 %v4751
    %v4831 = vunpack.c.l.b16 %v4752
    %v4832 = vunpack.c.l.b16 %v4753
    %v4833 = vunpack.c.l.b16 %v4754
    %v4834 = vunpack.c.l.b16 %v4755
    %v4835 = vunpack.c.l.b16 %v4756
    %v4836 = vunpack.c.l.b16 %v4757
    %v4837 = vunpack.c.l.b16 %v4758
    %v4838 = vunpack.c.l.b16 %v4759
    %v4839 = vunpack.c.l.b16 %v4760
    %v4840 = vunpack.c.l.b16 %v4761
    %v4841 = vunpack.c.l.b16 %v4762
    %v4842 = vunpack.c.l.b16 %v4763
    %v4843 = vunpack.c.l.b16 %v4764
    %v4844 = vunpack.c.l.b16 %v4765
    %v4845 = vpack.c.b16 %v4814, %v4813
    %v4846 = vpack.c.b16 %v4816, %v4815
    %v4847 = vpack.c.b16 %v4818, %v4817
    %v4848 = vpack.c.b16 %v4820, %v4819
    %v4849 = vpack.c.b16 %v4822, %v4821
    %v4850 = vpack.c.b16 %v4824, %v4823
    %v4851 = vpack.c.b16 %v4826, %v4825
    %v4852 = vpack.c.b16 %v4828, %v4827
    %v4853 = vpack.c.b16 %v4830, %v4829
    %v4854 = vpack.c.b16 %v4832, %v4831
    %v4855 = vpack.c.b16 %v4834, %v4833
    %v4856 = vpack.c.b16 %v4836, %v4835
    %v4857 = vpack.c.b16 %v4838, %v4837
    %v4858 = vpack.c.b16 %v4840, %v4839
    %v4859 = vpack.c.b16 %v4842, %v4841
    %v4860 = vpack.c.b16 %v4844, %v4843
    %4877 = vmatprep.subr.bf16.mxu0 0
    %4878 = vmatpush1.bf16.msra.mxu0 %v4852
    %4879 = vmatprep.subr.bf16.mxu0 0
    %4880 = vmatpush1.bf16.msra.mxu0 %v4851
    %4881 = vmatprep.subr.bf16.mxu0 0
    %4882 = vmatpush1.bf16.msra.mxu0 %v4850
    %4883 = vmatprep.subr.bf16.mxu0 0
    %4884 = vmatpush1.bf16.msra.mxu0 %v4849
    %4885 = vmatprep.subr.bf16.mxu0 0
    %4886 = vmatpush1.bf16.msra.mxu0 %v4848
    %4887 = vmatprep.subr.bf16.mxu0 0
    %4888 = vmatpush1.bf16.msra.mxu0 %v4847
    %4889 = vmatprep.subr.bf16.mxu0 0
    %4890 = vmatpush1.bf16.msra.mxu0 %v4846
    %4891 = vmatprep.subr.bf16.mxu0 0
    %4892 = vmatpush1.bf16.msra.mxu0 %v4845
    %4893 = vmatprep.subr.bf16.mxu0 0
    %4894 = vmatpush2.bf16.msra.mxu0 %v4860
    %4895 = vmatprep.subr.bf16.mxu0 0
    %4896 = vmatpush2.bf16.msra.mxu0 %v4859
    %4897 = vmatprep.subr.bf16.mxu0 0
    %4898 = vmatpush2.bf16.msra.mxu0 %v4858
    %4899 = vmatprep.subr.bf16.mxu0 0
    %4900 = vmatpush2.bf16.msra.mxu0 %v4857
    %4901 = vmatprep.subr.bf16.mxu0 0
    %4902 = vmatpush2.bf16.msra.mxu0 %v4856
    %4903 = vmatprep.subr.bf16.mxu0 0
    %4904 = vmatpush2.bf16.msra.mxu0 %v4855
    %4905 = vmatprep.subr.bf16.mxu0 0
    %4906 = vmatpush2.bf16.msra.mxu0 %v4854
    %4907 = vmatprep.subr.bf16.mxu0 0
    %4908 = vmatpush2.bf16.msra.mxu0 %v4853
    %4909 = vmatprep.mubr.bf16.mxu0 %v4767
    %4910 = vmatmul.mubr.bf16.gmra.mxu0 %v4766
    %v4911 = vpop.f32.mrf.mxu0
    %v4912 = vadd.f32 %v4779, %v4911
    %v4913 = vpop.f32.mrf.mxu0
    %v4914 = vpop.f32.mrf.mxu0
    %v4915 = vadd.f32 %v4779, %v4914
    %v4916 = vpop.f32.mrf.mxu0
    %4917 = vmatprep.mubr.bf16.mxu0 %v4769
    %4918 = vmatmul.mubr.bf16.gmra.mxu0 %v4768
    %v4919 = vpop.f32.mrf.mxu0
    %v4920 = vadd.f32 %v4779, %v4919
    %v4921 = vpop.f32.mrf.mxu0
    %v4922 = vpop.f32.mrf.mxu0
    %v4923 = vadd.f32 %v4779, %v4922
    %v4924 = vpop.f32.mrf.mxu0
    %4925 = vmatprep.mubr.bf16.mxu0 %v4771
    %4926 = vmatmul.mubr.bf16.gmra.mxu0 %v4770
    %v4927 = vpop.f32.mrf.mxu0
    %v4928 = vadd.f32 %v4779, %v4927
    %v4929 = vpop.f32.mrf.mxu0
    %v4930 = vpop.f32.mrf.mxu0
    %v4931 = vadd.f32 %v4779, %v4930
    %v4932 = vpop.f32.mrf.mxu0
    %4933 = vmatprep.mubr.bf16.mxu0 %v4773
    %4934 = vmatmul.mubr.bf16.gmra.mxu0 %v4772
    %v4935 = vpop.f32.mrf.mxu0
    %v4936 = vadd.f32 %v4779, %v4935
    %v4937 = vpop.f32.mrf.mxu0
    %v4938 = vpop.f32.mrf.mxu0
    %v4939 = vadd.f32 %v4779, %v4938
    %v4940 = vpop.f32.mrf.mxu0
    %4941 = vdwg.mxu0
    %v4942 = vadd.f32 %v4585, %v4912
    %v4943 = vadd.f32 %v4586, %v4915
    %v4944 = vadd.f32 %v4587, %v4920
    %v4945 = vadd.f32 %v4588, %v4923
    %v4946 = vadd.f32 %v4589, %v4928
    %v4947 = vadd.f32 %v4590, %v4931
    %v4948 = vadd.f32 %v4591, %v4936
    %v4949 = vadd.f32 %v4592, %v4939
    %v4950 = vld [vmem:[%s9 + $0x18] sm:$0x1]
    %v4951 = vld [vmem:[%s9 + $0x19] sm:$0x1]
    %v4952 = vsel %vm3948, %v4942, 0.0
    %4953 = vadd.xlane.f32.xlu0 %v4952
    %v4954 = vpop.xlane.xlu0 %4953
    %v4955 = vsel %vm3948, %v4943, 0.0
    %4956 = vadd.xlane.f32.xlu0 %v4955
    %v4957 = vpop.xlane.xlu0 %4956
    %v4958 = vsel %vm3948, %v4944, 0.0
    %4959 = vadd.xlane.f32.xlu0 %v4958
    %v4960 = vpop.xlane.xlu0 %4959
    %v4961 = vsel %vm3948, %v4945, 0.0
    %4962 = vadd.xlane.f32.xlu0 %v4961
    %v4963 = vpop.xlane.xlu0 %4962
    %v4964 = vsel %vm3948, %v4946, 0.0
    %4965 = vadd.xlane.f32.xlu0 %v4964
    %v4966 = vpop.xlane.xlu0 %4965
    %v4967 = vsel %vm3948, %v4947, 0.0
    %4968 = vadd.xlane.f32.xlu0 %v4967
    %v4969 = vpop.xlane.xlu0 %4968
    %v4970 = vsel %vm3948, %v4948, 0.0
    %4971 = vadd.xlane.f32.xlu0 %v4970
    %v4972 = vpop.xlane.xlu0 %4971
    %v4973 = vsel %vm3948, %v4949, 0.0
    %4974 = vadd.xlane.f32.xlu0 %v4973
    %v4975 = vpop.xlane.xlu0 %4974
    %v4976 = vmul.f32 %v4954, %v4484
    %v4977 = vmul.f32 %v4957, %v4484
    %v4978 = vmul.f32 %v4960, %v4484
    %v4979 = vmul.f32 %v4963, %v4484
    %v4980 = vmul.f32 %v4966, %v4484
    %v4981 = vmul.f32 %v4969, %v4484
    %v4982 = vmul.f32 %v4972, %v4484
    %v4983 = vmul.f32 %v4975, %v4484
    %v4984 = vsub.f32 %v4942, %v4976
    %v4985 = vsub.f32 %v4943, %v4977
    %v4986 = vsub.f32 %v4944, %v4978
    %v4987 = vsub.f32 %v4945, %v4979
    %v4988 = vsub.f32 %v4946, %v4980
    %v4989 = vsub.f32 %v4947, %v4981
    %v4990 = vsub.f32 %v4948, %v4982
    %v4991 = vsub.f32 %v4949, %v4983
    %v4992 = vmul.f32 %v4984, %v4984
    %v4993 = vmul.f32 %v4985, %v4985
    %v4994 = vmul.f32 %v4986, %v4986
    %v4995 = vmul.f32 %v4987, %v4987
    %v4996 = vmul.f32 %v4988, %v4988
    %v4997 = vmul.f32 %v4989, %v4989
    %v4998 = vmul.f32 %v4990, %v4990
    %v4999 = vmul.f32 %v4991, %v4991
    %v5000 = vsel %vm3948, %v4992, 0.0
    %5001 = vadd.xlane.f32.xlu0 %v5000
    %v5002 = vpop.xlane.xlu0 %5001
    %v5003 = vsel %vm3948, %v4993, 0.0
    %5004 = vadd.xlane.f32.xlu0 %v5003
    %v5005 = vpop.xlane.xlu0 %5004
    %v5006 = vsel %vm3948, %v4994, 0.0
    %5007 = vadd.xlane.f32.xlu0 %v5006
    %v5008 = vpop.xlane.xlu0 %5007
    %v5009 = vsel %vm3948, %v4995, 0.0
    %5010 = vadd.xlane.f32.xlu0 %v5009
    %v5011 = vpop.xlane.xlu0 %5010
    %v5012 = vsel %vm3948, %v4996, 0.0
    %5013 = vadd.xlane.f32.xlu0 %v5012
    %v5014 = vpop.xlane.xlu0 %5013
    %v5015 = vsel %vm3948, %v4997, 0.0
    %5016 = vadd.xlane.f32.xlu0 %v5015
    %v5017 = vpop.xlane.xlu0 %5016
    %v5018 = vsel %vm3948, %v4998, 0.0
    %5019 = vadd.xlane.f32.xlu0 %v5018
    %v5020 = vpop.xlane.xlu0 %5019
    %v5021 = vsel %vm3948, %v4999, 0.0
    %5022 = vadd.xlane.f32.xlu0 %v5021
    %v5023 = vpop.xlane.xlu0 %5022
    %v5024 = vmul.f32 %v5002, %v4484
    %v5025 = vmul.f32 %v5005, %v4484
    %v5026 = vmul.f32 %v5008, %v4484
    %v5027 = vmul.f32 %v5011, %v4484
    %v5028 = vmul.f32 %v5014, %v4484
    %v5029 = vmul.f32 %v5017, %v4484
    %v5030 = vmul.f32 %v5020, %v4484
    %v5031 = vmul.f32 %v5023, %v4484
    %v5032 = vadd.f32 %v5024, 1e-05
    %v5033 = vadd.f32 %v5025, 1e-05
    %v5034 = vadd.f32 %v5026, 1e-05
    %v5035 = vadd.f32 %v5027, 1e-05
    %v5036 = vadd.f32 %v5028, 1e-05
    %v5037 = vadd.f32 %v5029, 1e-05
    %v5038 = vadd.f32 %v5030, 1e-05
    %v5039 = vadd.f32 %v5031, 1e-05
    %v5040 = vrsqrt.pop %v5032
    %v5041 = vrsqrt.pop %v5033
    %v5042 = vrsqrt.pop %v5034
    %v5043 = vrsqrt.pop %v5035
    %v5044 = vrsqrt.pop %v5036
    %v5045 = vrsqrt.pop %v5037
    %v5046 = vrsqrt.pop %v5038
    %v5047 = vrsqrt.pop %v5039
    %v5048 = vmul.f32 %v4984, %v5040
    %v5049 = vmul.f32 %v4985, %v5041
    %v5050 = vmul.f32 %v4986, %v5042
    %v5051 = vmul.f32 %v4987, %v5043
    %v5052 = vmul.f32 %v4988, %v5044
    %v5053 = vmul.f32 %v4989, %v5045
    %v5054 = vmul.f32 %v4990, %v5046
    %v5055 = vmul.f32 %v4991, %v5047
    %v5057 = vlaneseq
    %v5058 = vshrl.u32 %v5057, 7
    %v5059 = vsub.s32 0, %v5058
    %v5060 = vrot.slane %v4950, %v5059
    %v5062 = vmul.f32 %v5048, %v5060
    %v5063 = vmul.f32 %v5049, %v5060
    %v5064 = vmul.f32 %v5050, %v5060
    %v5065 = vmul.f32 %v5051, %v5060
    %v5066 = vmul.f32 %v5052, %v5060
    %v5067 = vmul.f32 %v5053, %v5060
    %v5068 = vmul.f32 %v5054, %v5060
    %v5069 = vmul.f32 %v5055, %v5060
    %v5071 = vlaneseq
    %v5072 = vshrl.u32 %v5071, 7
    %v5073 = vsub.s32 0, %v5072
    %v5074 = vrot.slane %v4951, %v5073
    %v5076 = vadd.f32 %v5062, %v5074
    %v5077 = vadd.f32 %v5063, %v5074
    %v5078 = vadd.f32 %v5064, %v5074
    %v5079 = vadd.f32 %v5065, %v5074
    %v5080 = vadd.f32 %v5066, %v5074
    %v5081 = vadd.f32 %v5067, %v5074
    %v5082 = vadd.f32 %v5068, %v5074
    %v5083 = vadd.f32 %v5069, %v5074
    %v5084 = vld [vmem:[%s5 + $0x18] sm:$0xff]
    %v5085 = vld [vmem:[%s5 + $0x20] sm:$0xf]
    %v5086 = vld [vmem:[%s5 + $0x3c] sm:$0xff]
    %v5087 = vld [vmem:[%s5 + $0x44] sm:$0xf]
    %v5088 = vld [vmem:[%s5 + $0x60] sm:$0xff]
    %v5089 = vld [vmem:[%s5 + $0x68] sm:$0xf]
    %v5090 = vld [vmem:[%s5 + $0x84] sm:$0xff]
    %v5091 = vld [vmem:[%s5 + $0x8c] sm:$0xf]
    %v5092 = vpack.c.bf16 %v5077, %v5076
    %v5093 = vpack.c.bf16 %v5079, %v5078
    %v5094 = vpack.c.bf16 %v5081, %v5080
    %v5095 = vpack.c.bf16 %v5083, %v5082
    %v5096 = vld [vmem:[%s9 + $0x1a] sm:$0x7]
    %v5098 = vlaneseq
    %v5099 = vshrl.u32 %v5098, 7
    %v5100 = vsub.s32 0, %v5099
    %v5101 = vrot.slane %v5096, %v5100
    %v5102 = vlaneseq
    %v5103 = vshrl.u32 %v5102, 7
    %v5104 = vsub.s32 1, %v5103
    %v5105 = vrot.slane %v5096, %v5104
    %v5106 = vlaneseq
    %v5107 = vshrl.u32 %v5106, 7
    %v5108 = vsub.s32 2, %v5107
    %v5109 = vrot.slane %v5096, %v5108
    %v5121 = vunpack.c.l.b16 %v5084
    %v5122 = vunpack.c.h.b16 %v5084
    %v5123 = vunpack.c.l.b16 %v5085
    %v5124 = vunpack.c.l.b16 %v5086
    %v5125 = vunpack.c.h.b16 %v5086
    %v5126 = vunpack.c.l.b16 %v5087
    %v5127 = vunpack.c.l.b16 %v5088
    %v5128 = vunpack.c.h.b16 %v5088
    %v5129 = vunpack.c.l.b16 %v5089
    %v5130 = vunpack.c.l.b16 %v5090
    %v5131 = vunpack.c.h.b16 %v5090
    %v5132 = vunpack.c.l.b16 %v5091
    %v5133 = vpack.c.b16 %v5124, %v5121
    %v5134 = vpack.c.b16 %v5125, %v5122
    %v5135 = vpack.c.b16 %v5126, %v5123
    %v5136 = vpack.c.b16 %v5130, %v5127
    %v5137 = vpack.c.b16 %v5131, %v5128
    %v5138 = vpack.c.b16 %v5132, %v5129
    %v5146 = vsel %vm3948, %v5092, 0
    %v5149 = vsel %vm3948, %v5093, 0
    %v5152 = vsel %vm3948, %v5094, 0
    %v5155 = vsel %vm3948, %v5095, 0
    %5157 = vmatprep.subr.bf16.mxu0 0
    %5158 = vmatpush1.bf16.msra.mxu0 0
    %5159 = vmatprep.subr.bf16.mxu0 0
    %5160 = vmatpush1.bf16.msra.mxu0 0
    %5161 = vmatprep.subr.bf16.mxu0 0
    %5162 = vmatpush1.bf16.msra.mxu0 0
    %5163 = vmatprep.subr.bf16.mxu0 0
    %5164 = vmatpush1.bf16.msra.mxu0 0
    %5165 = vmatprep.subr.bf16.mxu0 0
    %5166 = vmatpush1.bf16.msra.mxu0 0
    %5167 = vmatprep.subr.bf16.mxu0 0
    %5168 = vmatpush1.bf16.msra.mxu0 0
    %5169 = vmatprep.subr.bf16.mxu0 %v5137
    %5170 = vmatpush1.bf16.msra.mxu0 %v5136
    %5171 = vmatprep.subr.bf16.mxu0 %v5134
    %5172 = vmatpush1.bf16.msra.mxu0 %v5133
    %5173 = vmatprep.subr.bf16.mxu0 0
    %5174 = vmatpush2.bf16.msra.mxu0 0
    %5175 = vmatprep.subr.bf16.mxu0 0
    %5176 = vmatpush2.bf16.msra.mxu0 0
    %5177 = vmatprep.subr.bf16.mxu0 0
    %5178 = vmatpush2.bf16.msra.mxu0 0
    %5179 = vmatprep.subr.bf16.mxu0 0
    %5180 = vmatpush2.bf16.msra.mxu0 0
    %5181 = vmatprep.subr.bf16.mxu0 0
    %5182 = vmatpush2.bf16.msra.mxu0 0
    %5183 = vmatprep.subr.bf16.mxu0 0
    %5184 = vmatpush2.bf16.msra.mxu0 0
    %5185 = vmatprep.subr.bf16.mxu0 0
    %5186 = vmatpush2.bf16.msra.mxu0 0
    %5187 = vmatprep.subr.bf16.mxu0 0
    %5188 = vmatpush2.bf16.msra.mxu0 0
    %5189 = vmatprep.mubr.bf16.mxu0 0
    %5190 = vmatmul.mubr.bf16.gmra.mxu0 %v5146
    %v5191 = vpop.f32.mrf.mxu0
    %v5192 = vadd.f32 %v5101, %v5191
    %v5193 = vpop.f32.mrf.mxu0
    %v5194 = vadd.f32 %v5105, %v5193
    %v5195 = vpop.f32.mrf.mxu0
    %v5196 = vadd.f32 %v5101, %v5195
    %v5197 = vpop.f32.mrf.mxu0
    %v5198 = vadd.f32 %v5105, %v5197
    %5199 = vmatprep.mubr.bf16.mxu0 0
    %5200 = vmatmul.mubr.bf16.gmra.mxu0 %v5149
    %v5201 = vpop.f32.mrf.mxu0
    %v5202 = vadd.f32 %v5101, %v5201
    %v5203 = vpop.f32.mrf.mxu0
    %v5204 = vadd.f32 %v5105, %v5203
    %v5205 = vpop.f32.mrf.mxu0
    %v5206 = vadd.f32 %v5101, %v5205
    %v5207 = vpop.f32.mrf.mxu0
    %v5208 = vadd.f32 %v5105, %v5207
    %5209 = vmatprep.mubr.bf16.mxu0 0
    %5210 = vmatmul.mubr.bf16.gmra.mxu0 %v5152
    %v5211 = vpop.f32.mrf.mxu0
    %v5212 = vadd.f32 %v5101, %v5211
    %v5213 = vpop.f32.mrf.mxu0
    %v5214 = vadd.f32 %v5105, %v5213
    %v5215 = vpop.f32.mrf.mxu0
    %v5216 = vadd.f32 %v5101, %v5215
    %v5217 = vpop.f32.mrf.mxu0
    %v5218 = vadd.f32 %v5105, %v5217
    %5219 = vmatprep.mubr.bf16.mxu0 0
    %5220 = vmatmul.mubr.bf16.gmra.mxu0 %v5155
    %v5221 = vpop.f32.mrf.mxu0
    %v5222 = vadd.f32 %v5101, %v5221
    %v5223 = vpop.f32.mrf.mxu0
    %v5224 = vadd.f32 %v5105, %v5223
    %v5225 = vpop.f32.mrf.mxu0
    %v5226 = vadd.f32 %v5101, %v5225
    %v5227 = vpop.f32.mrf.mxu0
    %v5228 = vadd.f32 %v5105, %v5227
    %5229 = vdwg.mxu0
    %5230 = vmatprep.subr.bf16.mxu0 0
    %5231 = vmatpush1.bf16.msra.mxu0 0
    %5232 = vmatprep.subr.bf16.mxu0 0
    %5233 = vmatpush1.bf16.msra.mxu0 0
    %5234 = vmatprep.subr.bf16.mxu0 0
    %5235 = vmatpush1.bf16.msra.mxu0 0
    %5236 = vmatprep.subr.bf16.mxu0 0
    %5237 = vmatpush1.bf16.msra.mxu0 0
    %5238 = vmatprep.subr.bf16.mxu0 0
    %5239 = vmatpush1.bf16.msra.mxu0 0
    %5240 = vmatprep.subr.bf16.mxu0 0
    %5241 = vmatpush1.bf16.msra.mxu0 0
    %5242 = vmatprep.subr.bf16.mxu0 0
    %5243 = vmatpush1.bf16.msra.mxu0 %v5138
    %5244 = vmatprep.subr.bf16.mxu0 0
    %5245 = vmatpush1.bf16.msra.mxu0 %v5135
    %5246 = vmatprep.subr.bf16.mxu0 0
    %5247 = vmatpush2.bf16.msra.mxu0 0
    %5248 = vmatprep.subr.bf16.mxu0 0
    %5249 = vmatpush2.bf16.msra.mxu0 0
    %5250 = vmatprep.subr.bf16.mxu0 0
    %5251 = vmatpush2.bf16.msra.mxu0 0
    %5252 = vmatprep.subr.bf16.mxu0 0
    %5253 = vmatpush2.bf16.msra.mxu0 0
    %5254 = vmatprep.subr.bf16.mxu0 0
    %5255 = vmatpush2.bf16.msra.mxu0 0
    %5256 = vmatprep.subr.bf16.mxu0 0
    %5257 = vmatpush2.bf16.msra.mxu0 0
    %5258 = vmatprep.subr.bf16.mxu0 0
    %5259 = vmatpush2.bf16.msra.mxu0 0
    %5260 = vmatprep.subr.bf16.mxu0 0
    %5261 = vmatpush2.bf16.msra.mxu0 0
    %5262 = vmatprep.mubr.bf16.mxu0 0
    %5263 = vmatmul.mubr.bf16.gmra.mxu0 %v5146
    %v5264 = vpop.f32.mrf.mxu0
    %v5265 = vadd.f32 %v5109, %v5264
    %v5266 = vpop.f32.mrf.mxu0
    %v5267 = vpop.f32.mrf.mxu0
    %v5268 = vadd.f32 %v5109, %v5267
    %v5269 = vpop.f32.mrf.mxu0
    %5270 = vmatprep.mubr.bf16.mxu0 0
    %5271 = vmatmul.mubr.bf16.gmra.mxu0 %v5149
    %v5272 = vpop.f32.mrf.mxu0
    %v5273 = vadd.f32 %v5109, %v5272
    %v5274 = vpop.f32.mrf.mxu0
    %v5275 = vpop.f32.mrf.mxu0
    %v5276 = vadd.f32 %v5109, %v5275
    %v5277 = vpop.f32.mrf.mxu0
    %5278 = vmatprep.mubr.bf16.mxu0 0
    %5279 = vmatmul.mubr.bf16.gmra.mxu0 %v5152
    %v5280 = vpop.f32.mrf.mxu0
    %v5281 = vadd.f32 %v5109, %v5280
    %v5282 = vpop.f32.mrf.mxu0
    %v5283 = vpop.f32.mrf.mxu0
    %v5284 = vadd.f32 %v5109, %v5283
    %v5285 = vpop.f32.mrf.mxu0
    %5286 = vmatprep.mubr.bf16.mxu0 0
    %5287 = vmatmul.mubr.bf16.gmra.mxu0 %v5155
    %v5288 = vpop.f32.mrf.mxu0
    %v5289 = vadd.f32 %v5109, %v5288
    %v5290 = vpop.f32.mrf.mxu0
    %v5291 = vpop.f32.mrf.mxu0
    %v5292 = vadd.f32 %v5109, %v5291
    %v5293 = vpop.f32.mrf.mxu0
    %5294 = vdwg.mxu0
    %v5295 = vmax.f32 %v5192, 0.0
    %v5296 = vmax.f32 %v5194, 0.0
    %v5297 = vmax.f32 %v5265, 0.0
    %v5298 = vmax.f32 %v5196, 0.0
    %v5299 = vmax.f32 %v5198, 0.0
    %v5300 = vmax.f32 %v5268, 0.0
    %v5301 = vmax.f32 %v5202, 0.0
    %v5302 = vmax.f32 %v5204, 0.0
    %v5303 = vmax.f32 %v5273, 0.0
    %v5304 = vmax.f32 %v5206, 0.0
    %v5305 = vmax.f32 %v5208, 0.0
    %v5306 = vmax.f32 %v5276, 0.0
    %v5307 = vmax.f32 %v5212, 0.0
    %v5308 = vmax.f32 %v5214, 0.0
    %v5309 = vmax.f32 %v5281, 0.0
    %v5310 = vmax.f32 %v5216, 0.0
    %v5311 = vmax.f32 %v5218, 0.0
    %v5312 = vmax.f32 %v5284, 0.0
    %v5313 = vmax.f32 %v5222, 0.0
    %v5314 = vmax.f32 %v5224, 0.0
    %v5315 = vmax.f32 %v5289, 0.0
    %v5316 = vmax.f32 %v5226, 0.0
    %v5317 = vmax.f32 %v5228, 0.0
    %v5318 = vmax.f32 %v5292, 0.0
    %v5319 = vld [vmem:[#allocation6] sm:$0xff]
    %v5320 = vld [vmem:[#allocation6 + $0x8] sm:$0xff]
    %v5321 = vld [vmem:[#allocation6 + $0x10] sm:$0xf]
    %v5322 = vld [vmem:[#allocation6 + $0x14] sm:$0xff]
    %v5323 = vld [vmem:[#allocation6 + $0x1c] sm:$0xff]
    %v5324 = vld [vmem:[#allocation6 + $0x24] sm:$0xf]
    %v5325 = vld [vmem:[#allocation6 + $0x28] sm:$0xff]
    %v5326 = vld [vmem:[#allocation6 + $0x30] sm:$0xff]
    %v5327 = vld [vmem:[#allocation6 + $0x38] sm:$0xf]
    %v5328 = vld [vmem:[#allocation6 + $0x3c] sm:$0xff]
    %v5329 = vld [vmem:[#allocation6 + $0x44] sm:$0xff]
    %v5330 = vld [vmem:[#allocation6 + $0x4c] sm:$0xf]
    %v5331 = vld [vmem:[#allocation6 + $0x50] sm:$0xff]
    %v5332 = vld [vmem:[#allocation6 + $0x58] sm:$0xff]
    %v5333 = vld [vmem:[#allocation6 + $0x60] sm:$0xf]
    %v5334 = vld [vmem:[#allocation6 + $0x64] sm:$0xff]
    %v5335 = vld [vmem:[#allocation6 + $0x6c] sm:$0xff]
    %v5336 = vld [vmem:[#allocation6 + $0x74] sm:$0xf]
    %v5337 = vld [vmem:[#allocation6 + $0x78] sm:$0xff]
    %v5338 = vld [vmem:[#allocation6 + $0x80] sm:$0xff]
    %v5339 = vld [vmem:[#allocation6 + $0x88] sm:$0xf]
    %v5340 = vld [vmem:[#allocation6 + $0x8c] sm:$0xff]
    %v5341 = vld [vmem:[#allocation6 + $0x94] sm:$0xff]
    %v5342 = vld [vmem:[#allocation6 + $0x9c] sm:$0xf]
    %v5343 = vld [vmem:[#allocation6 + $0xa0] sm:$0xff]
    %v5344 = vld [vmem:[#allocation6 + $0xa8] sm:$0xff]
    %v5345 = vld [vmem:[#allocation6 + $0xb0] sm:$0xf]
    %v5346 = vld [vmem:[#allocation6 + $0xb4] sm:$0xff]
    %v5347 = vld [vmem:[#allocation6 + $0xbc] sm:$0xff]
    %v5348 = vld [vmem:[#allocation6 + $0xc4] sm:$0xf]
    %v5349 = vld [vmem:[#allocation6 + $0xc8] sm:$0xff]
    %v5350 = vld [vmem:[#allocation6 + $0xd0] sm:$0xff]
    %v5351 = vld [vmem:[#allocation6 + $0xd8] sm:$0xf]
    %v5352 = vld [vmem:[#allocation6 + $0xdc] sm:$0xff]
    %v5353 = vld [vmem:[#allocation6 + $0xe4] sm:$0xff]
    %v5354 = vld [vmem:[#allocation6 + $0xec] sm:$0xf]
    %v5355 = vld [vmem:[#allocation6 + $0xf0] sm:$0xff]
    %v5356 = vld [vmem:[#allocation6 + $0xf8] sm:$0xff]
    %v5357 = vld [vmem:[#allocation6 + $0x100] sm:$0xf]
    %v5358 = vld [vmem:[#allocation6 + $0x104] sm:$0xff]
    %v5359 = vld [vmem:[#allocation6 + $0x10c] sm:$0xff]
    %v5360 = vld [vmem:[#allocation6 + $0x114] sm:$0xf]
    %v5361 = vld [vmem:[#allocation6 + $0x118] sm:$0xff]
    %v5362 = vld [vmem:[#allocation6 + $0x120] sm:$0xff]
    %v5363 = vld [vmem:[#allocation6 + $0x128] sm:$0xf]
    %v5364 = vld [vmem:[#allocation6 + $0x12c] sm:$0xff]
    %v5365 = vld [vmem:[#allocation6 + $0x134] sm:$0xff]
    %v5366 = vld [vmem:[#allocation6 + $0x13c] sm:$0xf]
    %v5367 = vld [vmem:[#allocation6 + $0x140] sm:$0xff]
    %v5368 = vld [vmem:[#allocation6 + $0x148] sm:$0xff]
    %v5369 = vld [vmem:[#allocation6 + $0x150] sm:$0xf]
    %v5370 = vld [vmem:[#allocation6 + $0x154] sm:$0xff]
    %v5371 = vld [vmem:[#allocation6 + $0x15c] sm:$0xff]
    %v5372 = vld [vmem:[#allocation6 + $0x164] sm:$0xf]
    %v5373 = vld [vmem:[#allocation6 + $0x168] sm:$0xff]
    %v5374 = vld [vmem:[#allocation6 + $0x170] sm:$0xff]
    %v5375 = vld [vmem:[#allocation6 + $0x178] sm:$0xf]
    %v5376 = vld [vmem:[#allocation6 + $0x17c] sm:$0xff]
    %v5377 = vld [vmem:[#allocation6 + $0x184] sm:$0xff]
    %v5378 = vld [vmem:[#allocation6 + $0x18c] sm:$0xf]
    %v5379 = vld [vmem:[#allocation6 + $0x190] sm:$0xff]
    %v5380 = vld [vmem:[#allocation6 + $0x198] sm:$0xff]
    %v5381 = vld [vmem:[#allocation6 + $0x1a0] sm:$0xf]
    %v5382 = vld [vmem:[#allocation6 + $0x1a4] sm:$0xff]
    %v5383 = vld [vmem:[#allocation6 + $0x1ac] sm:$0xff]
    %v5384 = vld [vmem:[#allocation6 + $0x1b4] sm:$0xf]
    %v5385 = vld [vmem:[#allocation6 + $0x1b8] sm:$0xff]
    %v5386 = vld [vmem:[#allocation6 + $0x1c0] sm:$0xff]
    %v5387 = vld [vmem:[#allocation6 + $0x1c8] sm:$0xf]
    %v5388 = vld [vmem:[#allocation6 + $0x1cc] sm:$0xff]
    %v5389 = vld [vmem:[#allocation6 + $0x1d4] sm:$0xff]
    %v5390 = vld [vmem:[#allocation6 + $0x1dc] sm:$0xf]
    %v5391 = vld [vmem:[#allocation6 + $0x1e0] sm:$0xff]
    %v5392 = vld [vmem:[#allocation6 + $0x1e8] sm:$0xff]
    %v5393 = vld [vmem:[#allocation6 + $0x1f0] sm:$0xf]
    %v5394 = vld [vmem:[#allocation6 + $0x1f4] sm:$0xff]
    %v5395 = vld [vmem:[#allocation6 + $0x1fc] sm:$0xff]
    %v5396 = vld [vmem:[#allocation6 + $0x204] sm:$0xf]
    %v5397 = vld [vmem:[#allocation6 + $0x208] sm:$0xff]
    %v5398 = vld [vmem:[#allocation6 + $0x210] sm:$0xff]
    %v5399 = vld [vmem:[#allocation6 + $0x218] sm:$0xf]
    %v5400 = vld [vmem:[#allocation6 + $0x21c] sm:$0xff]
    %v5401 = vld [vmem:[#allocation6 + $0x224] sm:$0xff]
    %v5402 = vld [vmem:[#allocation6 + $0x22c] sm:$0xf]
    %v5403 = vld [vmem:[#allocation6 + $0x230] sm:$0xff]
    %v5404 = vld [vmem:[#allocation6 + $0x238] sm:$0xff]
    %v5405 = vld [vmem:[#allocation6 + $0x240] sm:$0xf]
    %v5406 = vld [vmem:[#allocation6 + $0x244] sm:$0xff]
    %v5407 = vld [vmem:[#allocation6 + $0x24c] sm:$0xff]
    %v5408 = vld [vmem:[#allocation6 + $0x254] sm:$0xf]
    %v5409 = vld [vmem:[#allocation6 + $0x258] sm:$0xff]
    %v5410 = vld [vmem:[#allocation6 + $0x260] sm:$0xff]
    %v5411 = vld [vmem:[#allocation6 + $0x268] sm:$0xf]
    %v5412 = vld [vmem:[#allocation6 + $0x26c] sm:$0xff]
    %v5413 = vld [vmem:[#allocation6 + $0x274] sm:$0xff]
    %v5414 = vld [vmem:[#allocation6 + $0x27c] sm:$0xf]
    %v5415 = vld [vmem:[#allocation6 + $0x280] sm:$0xff]
    %v5416 = vld [vmem:[#allocation6 + $0x288] sm:$0xff]
    %v5417 = vld [vmem:[#allocation6 + $0x290] sm:$0xf]
    %v5418 = vld [vmem:[#allocation6 + $0x294] sm:$0xff]
    %v5419 = vld [vmem:[#allocation6 + $0x29c] sm:$0xff]
    %v5420 = vld [vmem:[#allocation6 + $0x2a4] sm:$0xf]
    %v5421 = vld [vmem:[#allocation6 + $0x2a8] sm:$0xff]
    %v5422 = vld [vmem:[#allocation6 + $0x2b0] sm:$0xff]
    %v5423 = vld [vmem:[#allocation6 + $0x2b8] sm:$0xf]
    %v5424 = vld [vmem:[#allocation6 + $0x2bc] sm:$0xff]
    %v5425 = vld [vmem:[#allocation6 + $0x2c4] sm:$0xff]
    %v5426 = vld [vmem:[#allocation6 + $0x2cc] sm:$0xf]
    %v5427 = vld [vmem:[#allocation6 + $0x2d0] sm:$0xff]
    %v5428 = vld [vmem:[#allocation6 + $0x2d8] sm:$0xff]
    %v5429 = vld [vmem:[#allocation6 + $0x2e0] sm:$0xf]
    %v5430 = vld [vmem:[#allocation6 + $0x2e4] sm:$0x33]
    %v5431 = vld [vmem:[#allocation6 + $0x2ec] sm:$0x33]
    %v5432 = vld [vmem:[#allocation6 + $0x2f4] sm:$0x3]
    %v5433 = vpack.c.bf16 %v5298, %v5295
    %v5434 = vpack.c.bf16 %v5299, %v5296
    %v5435 = vpack.c.bf16 %v5300, %v5297
    %v5436 = vpack.c.bf16 %v5304, %v5301
    %v5437 = vpack.c.bf16 %v5305, %v5302
    %v5438 = vpack.c.bf16 %v5306, %v5303
    %v5439 = vpack.c.bf16 %v5310, %v5307
    %v5440 = vpack.c.bf16 %v5311, %v5308
    %v5441 = vpack.c.bf16 %v5312, %v5309
    %v5442 = vpack.c.bf16 %v5316, %v5313
    %v5443 = vpack.c.bf16 %v5317, %v5314
    %v5444 = vpack.c.bf16 %v5318, %v5315
    %v5445 = vld [vmem:[%s9 + $0x1d] sm:$0x1f]
    %v5447 = vlaneseq
    %v5448 = vshrl.u32 %v5447, 7
    %v5449 = vsub.s32 0, %v5448
    %v5450 = vrot.slane %v5445, %v5449
    %v5451 = vlaneseq
    %v5452 = vshrl.u32 %v5451, 7
    %v5453 = vsub.s32 1, %v5452
    %v5454 = vrot.slane %v5445, %v5453
    %v5455 = vlaneseq
    %v5456 = vshrl.u32 %v5455, 7
    %v5457 = vsub.s32 2, %v5456
    %v5458 = vrot.slane %v5445, %v5457
    %v5459 = vlaneseq
    %v5460 = vshrl.u32 %v5459, 7
    %v5461 = vsub.s32 3, %v5460
    %v5462 = vrot.slane %v5445, %v5461
    %v5463 = vlaneseq
    %v5464 = vshrl.u32 %v5463, 7
    %v5465 = vsub.s32 4, %v5464
    %v5466 = vrot.slane %v5445, %v5465
    %v5586 = vunpack.c.l.b16 %v5319
    %v5587 = vunpack.c.h.b16 %v5319
    %v5588 = vunpack.c.l.b16 %v5320
    %v5589 = vunpack.c.h.b16 %v5320
    %v5590 = vunpack.c.l.b16 %v5321
    %v5591 = vunpack.c.l.b16 %v5322
    %v5592 = vunpack.c.h.b16 %v5322
    %v5593 = vunpack.c.l.b16 %v5323
    %v5594 = vunpack.c.h.b16 %v5323
    %v5595 = vunpack.c.l.b16 %v5324
    %v5596 = vunpack.c.l.b16 %v5325
    %v5597 = vunpack.c.h.b16 %v5325
    %v5598 = vunpack.c.l.b16 %v5326
    %v5599 = vunpack.c.h.b16 %v5326
    %v5600 = vunpack.c.l.b16 %v5327
    %v5601 = vunpack.c.l.b16 %v5328
    %v5602 = vunpack.c.h.b16 %v5328
    %v5603 = vunpack.c.l.b16 %v5329
    %v5604 = vunpack.c.h.b16 %v5329
    %v5605 = vunpack.c.l.b16 %v5330
    %v5606 = vunpack.c.l.b16 %v5331
    %v5607 = vunpack.c.h.b16 %v5331
    %v5608 = vunpack.c.l.b16 %v5332
    %v5609 = vunpack.c.h.b16 %v5332
    %v5610 = vunpack.c.l.b16 %v5333
    %v5611 = vunpack.c.l.b16 %v5334
    %v5612 = vunpack.c.h.b16 %v5334
    %v5613 = vunpack.c.l.b16 %v5335
    %v5614 = vunpack.c.h.b16 %v5335
    %v5615 = vunpack.c.l.b16 %v5336
    %v5616 = vunpack.c.l.b16 %v5337
    %v5617 = vunpack.c.h.b16 %v5337
    %v5618 = vunpack.c.l.b16 %v5338
    %v5619 = vunpack.c.h.b16 %v5338
    %v5620 = vunpack.c.l.b16 %v5339
    %v5621 = vunpack.c.l.b16 %v5340
    %v5622 = vunpack.c.h.b16 %v5340
    %v5623 = vunpack.c.l.b16 %v5341
    %v5624 = vunpack.c.h.b16 %v5341
    %v5625 = vunpack.c.l.b16 %v5342
    %v5626 = vunpack.c.l.b16 %v5343
    %v5627 = vunpack.c.h.b16 %v5343
    %v5628 = vunpack.c.l.b16 %v5344
    %v5629 = vunpack.c.h.b16 %v5344
    %v5630 = vunpack.c.l.b16 %v5345
    %v5631 = vunpack.c.l.b16 %v5346
    %v5632 = vunpack.c.h.b16 %v5346
    %v5633 = vunpack.c.l.b16 %v5347
    %v5634 = vunpack.c.h.b16 %v5347
    %v5635 = vunpack.c.l.b16 %v5348
    %v5636 = vunpack.c.l.b16 %v5349
    %v5637 = vunpack.c.h.b16 %v5349
    %v5638 = vunpack.c.l.b16 %v5350
    %v5639 = vunpack.c.h.b16 %v5350
    %v5640 = vunpack.c.l.b16 %v5351
    %v5641 = vunpack.c.l.b16 %v5352
    %v5642 = vunpack.c.h.b16 %v5352
    %v5643 = vunpack.c.l.b16 %v5353
    %v5644 = vunpack.c.h.b16 %v5353
    %v5645 = vunpack.c.l.b16 %v5354
    %v5646 = vunpack.c.l.b16 %v5355
    %v5647 = vunpack.c.h.b16 %v5355
    %v5648 = vunpack.c.l.b16 %v5356
    %v5649 = vunpack.c.h.b16 %v5356
    %v5650 = vunpack.c.l.b16 %v5357
    %v5651 = vunpack.c.l.b16 %v5358
    %v5652 = vunpack.c.h.b16 %v5358
    %v5653 = vunpack.c.l.b16 %v5359
    %v5654 = vunpack.c.h.b16 %v5359
    %v5655 = vunpack.c.l.b16 %v5360
    %v5656 = vunpack.c.l.b16 %v5361
    %v5657 = vunpack.c.h.b16 %v5361
    %v5658 = vunpack.c.l.b16 %v5362
    %v5659 = vunpack.c.h.b16 %v5362
    %v5660 = vunpack.c.l.b16 %v5363
    %v5661 = vunpack.c.l.b16 %v5364
    %v5662 = vunpack.c.h.b16 %v5364
    %v5663 = vunpack.c.l.b16 %v5365
    %v5664 = vunpack.c.h.b16 %v5365
    %v5665 = vunpack.c.l.b16 %v5366
    %v5666 = vunpack.c.l.b16 %v5367
    %v5667 = vunpack.c.h.b16 %v5367
    %v5668 = vunpack.c.l.b16 %v5368
    %v5669 = vunpack.c.h.b16 %v5368
    %v5670 = vunpack.c.l.b16 %v5369
    %v5671 = vunpack.c.l.b16 %v5370
    %v5672 = vunpack.c.h.b16 %v5370
    %v5673 = vunpack.c.l.b16 %v5371
    %v5674 = vunpack.c.h.b16 %v5371
    %v5675 = vunpack.c.l.b16 %v5372
    %v5676 = vunpack.c.l.b16 %v5373
    %v5677 = vunpack.c.h.b16 %v5373
    %v5678 = vunpack.c.l.b16 %v5374
    %v5679 = vunpack.c.h.b16 %v5374
    %v5680 = vunpack.c.l.b16 %v5375
    %v5681 = vunpack.c.l.b16 %v5376
    %v5682 = vunpack.c.h.b16 %v5376
    %v5683 = vunpack.c.l.b16 %v5377
    %v5684 = vunpack.c.h.b16 %v5377
    %v5685 = vunpack.c.l.b16 %v5378
    %v5686 = vunpack.c.l.b16 %v5379
    %v5687 = vunpack.c.h.b16 %v5379
    %v5688 = vunpack.c.l.b16 %v5380
    %v5689 = vunpack.c.h.b16 %v5380
    %v5690 = vunpack.c.l.b16 %v5381
    %v5691 = vunpack.c.l.b16 %v5382
    %v5692 = vunpack.c.h.b16 %v5382
    %v5693 = vunpack.c.l.b16 %v5383
    %v5694 = vunpack.c.h.b16 %v5383
    %v5695 = vunpack.c.l.b16 %v5384
    %v5696 = vunpack.c.l.b16 %v5385
    %v5697 = vunpack.c.h.b16 %v5385
    %v5698 = vunpack.c.l.b16 %v5386
    %v5699 = vunpack.c.h.b16 %v5386
    %v5700 = vunpack.c.l.b16 %v5387
    %v5701 = vunpack.c.l.b16 %v5388
    %v5702 = vunpack.c.h.b16 %v5388
    %v5703 = vunpack.c.l.b16 %v5389
    %v5704 = vunpack.c.h.b16 %v5389
    %v5705 = vunpack.c.l.b16 %v5390
    %v5706 = vunpack.c.l.b16 %v5391
    %v5707 = vunpack.c.h.b16 %v5391
    %v5708 = vunpack.c.l.b16 %v5392
    %v5709 = vunpack.c.h.b16 %v5392
    %v5710 = vunpack.c.l.b16 %v5393
    %v5711 = vunpack.c.l.b16 %v5394
    %v5712 = vunpack.c.h.b16 %v5394
    %v5713 = vunpack.c.l.b16 %v5395
    %v5714 = vunpack.c.h.b16 %v5395
    %v5715 = vunpack.c.l.b16 %v5396
    %v5716 = vunpack.c.l.b16 %v5397
    %v5717 = vunpack.c.h.b16 %v5397
    %v5718 = vunpack.c.l.b16 %v5398
    %v5719 = vunpack.c.h.b16 %v5398
    %v5720 = vunpack.c.l.b16 %v5399
    %v5721 = vunpack.c.l.b16 %v5400
    %v5722 = vunpack.c.h.b16 %v5400
    %v5723 = vunpack.c.l.b16 %v5401
    %v5724 = vunpack.c.h.b16 %v5401
    %v5725 = vunpack.c.l.b16 %v5402
    %v5726 = vunpack.c.l.b16 %v5403
    %v5727 = vunpack.c.h.b16 %v5403
    %v5728 = vunpack.c.l.b16 %v5404
    %v5729 = vunpack.c.h.b16 %v5404
    %v5730 = vunpack.c.l.b16 %v5405
    %v5731 = vunpack.c.l.b16 %v5406
    %v5732 = vunpack.c.h.b16 %v5406
    %v5733 = vunpack.c.l.b16 %v5407
    %v5734 = vunpack.c.h.b16 %v5407
    %v5735 = vunpack.c.l.b16 %v5408
    %v5736 = vunpack.c.l.b16 %v5409
    %v5737 = vunpack.c.h.b16 %v5409
    %v5738 = vunpack.c.l.b16 %v5410
    %v5739 = vunpack.c.h.b16 %v5410
    %v5740 = vunpack.c.l.b16 %v5411
    %v5741 = vunpack.c.l.b16 %v5412
    %v5742 = vunpack.c.h.b16 %v5412
    %v5743 = vunpack.c.l.b16 %v5413
    %v5744 = vunpack.c.h.b16 %v5413
    %v5745 = vunpack.c.l.b16 %v5414
    %v5746 = vunpack.c.l.b16 %v5415
    %v5747 = vunpack.c.h.b16 %v5415
    %v5748 = vunpack.c.l.b16 %v5416
    %v5749 = vunpack.c.h.b16 %v5416
    %v5750 = vunpack.c.l.b16 %v5417
    %v5751 = vunpack.c.l.b16 %v5418
    %v5752 = vunpack.c.h.b16 %v5418
    %v5753 = vunpack.c.l.b16 %v5419
    %v5754 = vunpack.c.h.b16 %v5419
    %v5755 = vunpack.c.l.b16 %v5420
    %v5756 = vunpack.c.l.b16 %v5421
    %v5757 = vunpack.c.h.b16 %v5421
    %v5758 = vunpack.c.l.b16 %v5422
    %v5759 = vunpack.c.h.b16 %v5422
    %v5760 = vunpack.c.l.b16 %v5423
    %v5761 = vunpack.c.l.b16 %v5424
    %v5762 = vunpack.c.h.b16 %v5424
    %v5763 = vunpack.c.l.b16 %v5425
    %v5764 = vunpack.c.h.b16 %v5425
    %v5765 = vunpack.c.l.b16 %v5426
    %v5766 = vunpack.c.l.b16 %v5427
    %v5767 = vunpack.c.h.b16 %v5427
    %v5768 = vunpack.c.l.b16 %v5428
    %v5769 = vunpack.c.h.b16 %v5428
    %v5770 = vunpack.c.l.b16 %v5429
    %v5771 = vunpack.c.l.b16 %v5430
    %v5772 = vunpack.c.h.b16 %v5430
    %v5773 = vunpack.c.l.b16 %v5431
    %v5774 = vunpack.c.h.b16 %v5431
    %v5775 = vunpack.c.l.b16 %v5432
    %v5776 = vpack.c.b16 %v5591, %v5586
    %v5777 = vpack.c.b16 %v5592, %v5587
    %v5778 = vpack.c.b16 %v5593, %v5588
    %v5779 = vpack.c.b16 %v5594, %v5589
    %v5780 = vpack.c.b16 %v5595, %v5590
    %v5781 = vpack.c.b16 %v5601, %v5596
    %v5782 = vpack.c.b16 %v5602, %v5597
    %v5783 = vpack.c.b16 %v5603, %v5598
    %v5784 = vpack.c.b16 %v5604, %v5599
    %v5785 = vpack.c.b16 %v5605, %v5600
    %v5786 = vpack.c.b16 %v5611, %v5606
    %v5787 = vpack.c.b16 %v5612, %v5607
    %v5788 = vpack.c.b16 %v5613, %v5608
    %v5789 = vpack.c.b16 %v5614, %v5609
    %v5790 = vpack.c.b16 %v5615, %v5610
    %v5791 = vpack.c.b16 %v5621, %v5616
    %v5792 = vpack.c.b16 %v5622, %v5617
    %v5793 = vpack.c.b16 %v5623, %v5618
    %v5794 = vpack.c.b16 %v5624, %v5619
    %v5795 = vpack.c.b16 %v5625, %v5620
    %v5796 = vpack.c.b16 %v5631, %v5626
    %v5797 = vpack.c.b16 %v5632, %v5627
    %v5798 = vpack.c.b16 %v5633, %v5628
    %v5799 = vpack.c.b16 %v5634, %v5629
    %v5800 = vpack.c.b16 %v5635, %v5630
    %v5801 = vpack.c.b16 %v5641, %v5636
    %v5802 = vpack.c.b16 %v5642, %v5637
    %v5803 = vpack.c.b16 %v5643, %v5638
    %v5804 = vpack.c.b16 %v5644, %v5639
    %v5805 = vpack.c.b16 %v5645, %v5640
    %v5806 = vpack.c.b16 %v5651, %v5646
    %v5807 = vpack.c.b16 %v5652, %v5647
    %v5808 = vpack.c.b16 %v5653, %v5648
    %v5809 = vpack.c.b16 %v5654, %v5649
    %v5810 = vpack.c.b16 %v5655, %v5650
    %v5811 = vpack.c.b16 %v5661, %v5656
    %v5812 = vpack.c.b16 %v5662, %v5657
    %v5813 = vpack.c.b16 %v5663, %v5658
    %v5814 = vpack.c.b16 %v5664, %v5659
    %v5815 = vpack.c.b16 %v5665, %v5660
    %v5816 = vpack.c.b16 %v5671, %v5666
    %v5817 = vpack.c.b16 %v5672, %v5667
    %v5818 = vpack.c.b16 %v5673, %v5668
    %v5819 = vpack.c.b16 %v5674, %v5669
    %v5820 = vpack.c.b16 %v5675, %v5670
    %v5821 = vpack.c.b16 %v5681, %v5676
    %v5822 = vpack.c.b16 %v5682, %v5677
    %v5823 = vpack.c.b16 %v5683, %v5678
    %v5824 = vpack.c.b16 %v5684, %v5679
    %v5825 = vpack.c.b16 %v5685, %v5680
    %v5826 = vpack.c.b16 %v5691, %v5686
    %v5827 = vpack.c.b16 %v5692, %v5687
    %v5828 = vpack.c.b16 %v5693, %v5688
    %v5829 = vpack.c.b16 %v5694, %v5689
    %v5830 = vpack.c.b16 %v5695, %v5690
    %v5831 = vpack.c.b16 %v5701, %v5696
    %v5832 = vpack.c.b16 %v5702, %v5697
    %v5833 = vpack.c.b16 %v5703, %v5698
    %v5834 = vpack.c.b16 %v5704, %v5699
    %v5835 = vpack.c.b16 %v5705, %v5700
    %v5836 = vpack.c.b16 %v5711, %v5706
    %v5837 = vpack.c.b16 %v5712, %v5707
    %v5838 = vpack.c.b16 %v5713, %v5708
    %v5839 = vpack.c.b16 %v5714, %v5709
    %v5840 = vpack.c.b16 %v5715, %v5710
    %v5841 = vpack.c.b16 %v5721, %v5716
    %v5842 = vpack.c.b16 %v5722, %v5717
    %v5843 = vpack.c.b16 %v5723, %v5718
    %v5844 = vpack.c.b16 %v5724, %v5719
    %v5845 = vpack.c.b16 %v5725, %v5720
    %v5846 = vpack.c.b16 %v5731, %v5726
    %v5847 = vpack.c.b16 %v5732, %v5727
    %v5848 = vpack.c.b16 %v5733, %v5728
    %v5849 = vpack.c.b16 %v5734, %v5729
    %v5850 = vpack.c.b16 %v5735, %v5730
    %v5851 = vpack.c.b16 %v5741, %v5736
    %v5852 = vpack.c.b16 %v5742, %v5737
    %v5853 = vpack.c.b16 %v5743, %v5738
    %v5854 = vpack.c.b16 %v5744, %v5739
    %v5855 = vpack.c.b16 %v5745, %v5740
    %v5856 = vpack.c.b16 %v5751, %v5746
    %v5857 = vpack.c.b16 %v5752, %v5747
    %v5858 = vpack.c.b16 %v5753, %v5748
    %v5859 = vpack.c.b16 %v5754, %v5749
    %v5860 = vpack.c.b16 %v5755, %v5750
    %v5861 = vpack.c.b16 %v5761, %v5756
    %v5862 = vpack.c.b16 %v5762, %v5757
    %v5863 = vpack.c.b16 %v5763, %v5758
    %v5864 = vpack.c.b16 %v5764, %v5759
    %v5865 = vpack.c.b16 %v5765, %v5760
    %v5866 = vpack.c.b16 %v5771, %v5766
    %v5867 = vpack.c.b16 %v5772, %v5767
    %v5868 = vpack.c.b16 %v5773, %v5768
    %v5869 = vpack.c.b16 %v5774, %v5769
    %v5870 = vpack.c.b16 %v5775, %v5770
    %v5962 = vsel %vm281, %v5435, 0
    %v5965 = vsel %vm281, %v5438, 0
    %v5968 = vsel %vm281, %v5441, 0
    %v5971 = vsel %vm281, %v5444, 0
    %v5974 = vsel %vm294, %v5866, 0
    %v5977 = vsel %vm294, %v5867, 0
    %v5980 = vsel %vm294, %v5868, 0
    %v5983 = vsel %vm294, %v5869, 0
    %v5986 = vsel %vm294, %v5870, 0
    %5988 = vmatprep.subr.bf16.mxu0 %v5812
    %5989 = vmatpush1.bf16.msra.mxu0 %v5811
    %5990 = vmatprep.subr.bf16.mxu0 %v5807
    %5991 = vmatpush1.bf16.msra.mxu0 %v5806
    %5992 = vmatprep.subr.bf16.mxu0 %v5802
    %5993 = vmatpush1.bf16.msra.mxu0 %v5801
    %5994 = vmatprep.subr.bf16.mxu0 %v5797
    %5995 = vmatpush1.bf16.msra.mxu0 %v5796
    %5996 = vmatprep.subr.bf16.mxu0 %v5792
    %5997 = vmatpush1.bf16.msra.mxu0 %v5791
    %5998 = vmatprep.subr.bf16.mxu0 %v5787
    %5999 = vmatpush1.bf16.msra.mxu0 %v5786
    %6000 = vmatprep.subr.bf16.mxu0 %v5782
    %6001 = vmatpush1.bf16.msra.mxu0 %v5781
    %6002 = vmatprep.subr.bf16.mxu0 %v5777
    %6003 = vmatpush1.bf16.msra.mxu0 %v5776
    %6004 = vmatprep.subr.bf16.mxu0 %v5852
    %6005 = vmatpush2.bf16.msra.mxu0 %v5851
    %6006 = vmatprep.subr.bf16.mxu0 %v5847
    %6007 = vmatpush2.bf16.msra.mxu0 %v5846
    %6008 = vmatprep.subr.bf16.mxu0 %v5842
    %6009 = vmatpush2.bf16.msra.mxu0 %v5841
    %6010 = vmatprep.subr.bf16.mxu0 %v5837
    %6011 = vmatpush2.bf16.msra.mxu0 %v5836
    %6012 = vmatprep.subr.bf16.mxu0 %v5832
    %6013 = vmatpush2.bf16.msra.mxu0 %v5831
    %6014 = vmatprep.subr.bf16.mxu0 %v5827
    %6015 = vmatpush2.bf16.msra.mxu0 %v5826
    %6016 = vmatprep.subr.bf16.mxu0 %v5822
    %6017 = vmatpush2.bf16.msra.mxu0 %v5821
    %6018 = vmatprep.subr.bf16.mxu0 %v5817
    %6019 = vmatpush2.bf16.msra.mxu0 %v5816
    %6020 = vmatprep.mubr.bf16.mxu0 %v5434
    %6021 = vmatmul.mubr.bf16.gmra.mxu0 %v5433
    %v6022 = vpop.f32.mrf.mxu0
    %v6023 = vadd.f32 %v5450, %v6022
    %v6024 = vpop.f32.mrf.mxu0
    %v6025 = vadd.f32 %v5454, %v6024
    %v6026 = vpop.f32.mrf.mxu0
    %v6027 = vadd.f32 %v5450, %v6026
    %v6028 = vpop.f32.mrf.mxu0
    %v6029 = vadd.f32 %v5454, %v6028
    %6030 = vmatprep.mubr.bf16.mxu0 %v5437
    %6031 = vmatmul.mubr.bf16.gmra.mxu0 %v5436
    %v6032 = vpop.f32.mrf.mxu0
    %v6033 = vadd.f32 %v5450, %v6032
    %v6034 = vpop.f32.mrf.mxu0
    %v6035 = vadd.f32 %v5454, %v6034
    %v6036 = vpop.f32.mrf.mxu0
    %v6037 = vadd.f32 %v5450, %v6036
    %v6038 = vpop.f32.mrf.mxu0
    %v6039 = vadd.f32 %v5454, %v6038
    %6040 = vmatprep.mubr.bf16.mxu0 %v5440
    %6041 = vmatmul.mubr.bf16.gmra.mxu0 %v5439
    %v6042 = vpop.f32.mrf.mxu0
    %v6043 = vadd.f32 %v5450, %v6042
    %v6044 = vpop.f32.mrf.mxu0
    %v6045 = vadd.f32 %v5454, %v6044
    %v6046 = vpop.f32.mrf.mxu0
    %v6047 = vadd.f32 %v5450, %v6046
    %v6048 = vpop.f32.mrf.mxu0
    %v6049 = vadd.f32 %v5454, %v6048
    %6050 = vmatprep.mubr.bf16.mxu0 %v5443
    %6051 = vmatmul.mubr.bf16.gmra.mxu0 %v5442
    %v6052 = vpop.f32.mrf.mxu0
    %v6053 = vadd.f32 %v5450, %v6052
    %v6054 = vpop.f32.mrf.mxu0
    %v6055 = vadd.f32 %v5454, %v6054
    %v6056 = vpop.f32.mrf.mxu0
    %v6057 = vadd.f32 %v5450, %v6056
    %v6058 = vpop.f32.mrf.mxu0
    %v6059 = vadd.f32 %v5454, %v6058
    %6060 = vdwg.mxu0
    %6061 = vmatprep.subr.bf16.mxu0 0
    %6062 = vmatpush1.bf16.msra.mxu0 0
    %6063 = vmatprep.subr.bf16.mxu0 0
    %6064 = vmatpush1.bf16.msra.mxu0 0
    %6065 = vmatprep.subr.bf16.mxu0 0
    %6066 = vmatpush1.bf16.msra.mxu0 0
    %6067 = vmatprep.subr.bf16.mxu0 0
    %6068 = vmatpush1.bf16.msra.mxu0 0
    %6069 = vmatprep.subr.bf16.mxu0 0
    %6070 = vmatpush1.bf16.msra.mxu0 0
    %6071 = vmatprep.subr.bf16.mxu0 %v5977
    %6072 = vmatpush1.bf16.msra.mxu0 %v5974
    %6073 = vmatprep.subr.bf16.mxu0 %v5862
    %6074 = vmatpush1.bf16.msra.mxu0 %v5861
    %6075 = vmatprep.subr.bf16.mxu0 %v5857
    %6076 = vmatpush1.bf16.msra.mxu0 %v5856
    %6077 = vmatprep.subr.bf16.mxu0 0
    %6078 = vmatpush2.bf16.msra.mxu0 0
    %6079 = vmatprep.subr.bf16.mxu0 0
    %6080 = vmatpush2.bf16.msra.mxu0 0
    %6081 = vmatprep.subr.bf16.mxu0 0
    %6082 = vmatpush2.bf16.msra.mxu0 0
    %6083 = vmatprep.subr.bf16.mxu0 0
    %6084 = vmatpush2.bf16.msra.mxu0 0
    %6085 = vmatprep.subr.bf16.mxu0 0
    %6086 = vmatpush2.bf16.msra.mxu0 0
    %6087 = vmatprep.subr.bf16.mxu0 0
    %6088 = vmatpush2.bf16.msra.mxu0 0
    %6089 = vmatprep.subr.bf16.mxu0 0
    %6090 = vmatpush2.bf16.msra.mxu0 0
    %6091 = vmatprep.subr.bf16.mxu0 0
    %6092 = vmatpush2.bf16.msra.mxu0 0
    %6093 = vmatprep.mubr.bf16.mxu0 0
    %6094 = vmatmul.mubr.bf16.gmra.mxu0 %v5962
    %v6095 = vpop.f32.mrf.mxu0
    %v6096 = vadd.f32 %v6023, %v6095
    %v6097 = vpop.f32.mrf.mxu0
    %v6098 = vadd.f32 %v6025, %v6097
    %v6099 = vpop.f32.mrf.mxu0
    %v6100 = vadd.f32 %v6027, %v6099
    %v6101 = vpop.f32.mrf.mxu0
    %v6102 = vadd.f32 %v6029, %v6101
    %6103 = vmatprep.mubr.bf16.mxu0 0
    %6104 = vmatmul.mubr.bf16.gmra.mxu0 %v5965
    %v6105 = vpop.f32.mrf.mxu0
    %v6106 = vadd.f32 %v6033, %v6105
    %v6107 = vpop.f32.mrf.mxu0
    %v6108 = vadd.f32 %v6035, %v6107
    %v6109 = vpop.f32.mrf.mxu0
    %v6110 = vadd.f32 %v6037, %v6109
    %v6111 = vpop.f32.mrf.mxu0
    %v6112 = vadd.f32 %v6039, %v6111
    %6113 = vmatprep.mubr.bf16.mxu0 0
    %6114 = vmatmul.mubr.bf16.gmra.mxu0 %v5968
    %v6115 = vpop.f32.mrf.mxu0
    %v6116 = vadd.f32 %v6043, %v6115
    %v6117 = vpop.f32.mrf.mxu0
    %v6118 = vadd.f32 %v6045, %v6117
    %v6119 = vpop.f32.mrf.mxu0
    %v6120 = vadd.f32 %v6047, %v6119
    %v6121 = vpop.f32.mrf.mxu0
    %v6122 = vadd.f32 %v6049, %v6121
    %6123 = vmatprep.mubr.bf16.mxu0 0
    %6124 = vmatmul.mubr.bf16.gmra.mxu0 %v5971
    %v6125 = vpop.f32.mrf.mxu0
    %v6126 = vadd.f32 %v6053, %v6125
    %v6127 = vpop.f32.mrf.mxu0
    %v6128 = vadd.f32 %v6055, %v6127
    %v6129 = vpop.f32.mrf.mxu0
    %v6130 = vadd.f32 %v6057, %v6129
    %v6131 = vpop.f32.mrf.mxu0
    %v6132 = vadd.f32 %v6059, %v6131
    %6133 = vdwg.mxu0
    %6134 = vmatprep.subr.bf16.mxu0 %v5814
    %6135 = vmatpush1.bf16.msra.mxu0 %v5813
    %6136 = vmatprep.subr.bf16.mxu0 %v5809
    %6137 = vmatpush1.bf16.msra.mxu0 %v5808
    %6138 = vmatprep.subr.bf16.mxu0 %v5804
    %6139 = vmatpush1.bf16.msra.mxu0 %v5803
    %6140 = vmatprep.subr.bf16.mxu0 %v5799
    %6141 = vmatpush1.bf16.msra.mxu0 %v5798
    %6142 = vmatprep.subr.bf16.mxu0 %v5794
    %6143 = vmatpush1.bf16.msra.mxu0 %v5793
    %6144 = vmatprep.subr.bf16.mxu0 %v5789
    %6145 = vmatpush1.bf16.msra.mxu0 %v5788
    %6146 = vmatprep.subr.bf16.mxu0 %v5784
    %6147 = vmatpush1.bf16.msra.mxu0 %v5783
    %6148 = vmatprep.subr.bf16.mxu0 %v5779
    %6149 = vmatpush1.bf16.msra.mxu0 %v5778
    %6150 = vmatprep.subr.bf16.mxu0 %v5854
    %6151 = vmatpush2.bf16.msra.mxu0 %v5853
    %6152 = vmatprep.subr.bf16.mxu0 %v5849
    %6153 = vmatpush2.bf16.msra.mxu0 %v5848
    %6154 = vmatprep.subr.bf16.mxu0 %v5844
    %6155 = vmatpush2.bf16.msra.mxu0 %v5843
    %6156 = vmatprep.subr.bf16.mxu0 %v5839
    %6157 = vmatpush2.bf16.msra.mxu0 %v5838
    %6158 = vmatprep.subr.bf16.mxu0 %v5834
    %6159 = vmatpush2.bf16.msra.mxu0 %v5833
    %6160 = vmatprep.subr.bf16.mxu0 %v5829
    %6161 = vmatpush2.bf16.msra.mxu0 %v5828
    %6162 = vmatprep.subr.bf16.mxu0 %v5824
    %6163 = vmatpush2.bf16.msra.mxu0 %v5823
    %6164 = vmatprep.subr.bf16.mxu0 %v5819
    %6165 = vmatpush2.bf16.msra.mxu0 %v5818
    %6166 = vmatprep.mubr.bf16.mxu0 %v5434
    %6167 = vmatmul.mubr.bf16.gmra.mxu0 %v5433
    %v6168 = vpop.f32.mrf.mxu0
    %v6169 = vadd.f32 %v5458, %v6168
    %v6170 = vpop.f32.mrf.mxu0
    %v6171 = vadd.f32 %v5462, %v6170
    %v6172 = vpop.f32.mrf.mxu0
    %v6173 = vadd.f32 %v5458, %v6172
    %v6174 = vpop.f32.mrf.mxu0
    %v6175 = vadd.f32 %v5462, %v6174
    %6176 = vmatprep.mubr.bf16.mxu0 %v5437
    %6177 = vmatmul.mubr.bf16.gmra.mxu0 %v5436
    %v6178 = vpop.f32.mrf.mxu0
    %v6179 = vadd.f32 %v5458, %v6178
    %v6180 = vpop.f32.mrf.mxu0
    %v6181 = vadd.f32 %v5462, %v6180
    %v6182 = vpop.f32.mrf.mxu0
    %v6183 = vadd.f32 %v5458, %v6182
    %v6184 = vpop.f32.mrf.mxu0
    %v6185 = vadd.f32 %v5462, %v6184
    %6186 = vmatprep.mubr.bf16.mxu0 %v5440
    %6187 = vmatmul.mubr.bf16.gmra.mxu0 %v5439
    %v6188 = vpop.f32.mrf.mxu0
    %v6189 = vadd.f32 %v5458, %v6188
    %v6190 = vpop.f32.mrf.mxu0
    %v6191 = vadd.f32 %v5462, %v6190
    %v6192 = vpop.f32.mrf.mxu0
    %v6193 = vadd.f32 %v5458, %v6192
    %v6194 = vpop.f32.mrf.mxu0
    %v6195 = vadd.f32 %v5462, %v6194
    %6196 = vmatprep.mubr.bf16.mxu0 %v5443
    %6197 = vmatmul.mubr.bf16.gmra.mxu0 %v5442
    %v6198 = vpop.f32.mrf.mxu0
    %v6199 = vadd.f32 %v5458, %v6198
    %v6200 = vpop.f32.mrf.mxu0
    %v6201 = vadd.f32 %v5462, %v6200
    %v6202 = vpop.f32.mrf.mxu0
    %v6203 = vadd.f32 %v5458, %v6202
    %v6204 = vpop.f32.mrf.mxu0
    %v6205 = vadd.f32 %v5462, %v6204
    %6206 = vdwg.mxu0
    %6207 = vmatprep.subr.bf16.mxu0 0
    %6208 = vmatpush1.bf16.msra.mxu0 0
    %6209 = vmatprep.subr.bf16.mxu0 0
    %6210 = vmatpush1.bf16.msra.mxu0 0
    %6211 = vmatprep.subr.bf16.mxu0 0
    %6212 = vmatpush1.bf16.msra.mxu0 0
    %6213 = vmatprep.subr.bf16.mxu0 0
    %6214 = vmatpush1.bf16.msra.mxu0 0
    %6215 = vmatprep.subr.bf16.mxu0 0
    %6216 = vmatpush1.bf16.msra.mxu0 0
    %6217 = vmatprep.subr.bf16.mxu0 %v5983
    %6218 = vmatpush1.bf16.msra.mxu0 %v5980
    %6219 = vmatprep.subr.bf16.mxu0 %v5864
    %6220 = vmatpush1.bf16.msra.mxu0 %v5863
    %6221 = vmatprep.subr.bf16.mxu0 %v5859
    %6222 = vmatpush1.bf16.msra.mxu0 %v5858
    %6223 = vmatprep.subr.bf16.mxu0 0
    %6224 = vmatpush2.bf16.msra.mxu0 0
    %6225 = vmatprep.subr.bf16.mxu0 0
    %6226 = vmatpush2.bf16.msra.mxu0 0
    %6227 = vmatprep.subr.bf16.mxu0 0
    %6228 = vmatpush2.bf16.msra.mxu0 0
    %6229 = vmatprep.subr.bf16.mxu0 0
    %6230 = vmatpush2.bf16.msra.mxu0 0
    %6231 = vmatprep.subr.bf16.mxu0 0
    %6232 = vmatpush2.bf16.msra.mxu0 0
    %6233 = vmatprep.subr.bf16.mxu0 0
    %6234 = vmatpush2.bf16.msra.mxu0 0
    %6235 = vmatprep.subr.bf16.mxu0 0
    %6236 = vmatpush2.bf16.msra.mxu0 0
    %6237 = vmatprep.subr.bf16.mxu0 0
    %6238 = vmatpush2.bf16.msra.mxu0 0
    %6239 = vmatprep.mubr.bf16.mxu0 0
    %6240 = vmatmul.mubr.bf16.gmra.mxu0 %v5962
    %v6241 = vpop.f32.mrf.mxu0
    %v6242 = vadd.f32 %v6169, %v6241
    %v6243 = vpop.f32.mrf.mxu0
    %v6244 = vadd.f32 %v6171, %v6243
    %v6245 = vpop.f32.mrf.mxu0
    %v6246 = vadd.f32 %v6173, %v6245
    %v6247 = vpop.f32.mrf.mxu0
    %v6248 = vadd.f32 %v6175, %v6247
    %6249 = vmatprep.mubr.bf16.mxu0 0
    %6250 = vmatmul.mubr.bf16.gmra.mxu0 %v5965
    %v6251 = vpop.f32.mrf.mxu0
    %v6252 = vadd.f32 %v6179, %v6251
    %v6253 = vpop.f32.mrf.mxu0
    %v6254 = vadd.f32 %v6181, %v6253
    %v6255 = vpop.f32.mrf.mxu0
    %v6256 = vadd.f32 %v6183, %v6255
    %v6257 = vpop.f32.mrf.mxu0
    %v6258 = vadd.f32 %v6185, %v6257
    %6259 = vmatprep.mubr.bf16.mxu0 0
    %6260 = vmatmul.mubr.bf16.gmra.mxu0 %v5968
    %v6261 = vpop.f32.mrf.mxu0
    %v6262 = vadd.f32 %v6189, %v6261
    %v6263 = vpop.f32.mrf.mxu0
    %v6264 = vadd.f32 %v6191, %v6263
    %v6265 = vpop.f32.mrf.mxu0
    %v6266 = vadd.f32 %v6193, %v6265
    %v6267 = vpop.f32.mrf.mxu0
    %v6268 = vadd.f32 %v6195, %v6267
    %6269 = vmatprep.mubr.bf16.mxu0 0
    %6270 = vmatmul.mubr.bf16.gmra.mxu0 %v5971
    %v6271 = vpop.f32.mrf.mxu0
    %v6272 = vadd.f32 %v6199, %v6271
    %v6273 = vpop.f32.mrf.mxu0
    %v6274 = vadd.f32 %v6201, %v6273
    %v6275 = vpop.f32.mrf.mxu0
    %v6276 = vadd.f32 %v6203, %v6275
    %v6277 = vpop.f32.mrf.mxu0
    %v6278 = vadd.f32 %v6205, %v6277
    %6279 = vdwg.mxu0
    %6280 = vmatprep.subr.bf16.mxu0 0
    %6281 = vmatpush1.bf16.msra.mxu0 %v5815
    %6282 = vmatprep.subr.bf16.mxu0 0
    %6283 = vmatpush1.bf16.msra.mxu0 %v5810
    %6284 = vmatprep.subr.bf16.mxu0 0
    %6285 = vmatpush1.bf16.msra.mxu0 %v5805
    %6286 = vmatprep.subr.bf16.mxu0 0
    %6287 = vmatpush1.bf16.msra.mxu0 %v5800
    %6288 = vmatprep.subr.bf16.mxu0 0
    %6289 = vmatpush1.bf16.msra.mxu0 %v5795
    %6290 = vmatprep.subr.bf16.mxu0 0
    %6291 = vmatpush1.bf16.msra.mxu0 %v5790
    %6292 = vmatprep.subr.bf16.mxu0 0
    %6293 = vmatpush1.bf16.msra.mxu0 %v5785
    %6294 = vmatprep.subr.bf16.mxu0 0
    %6295 = vmatpush1.bf16.msra.mxu0 %v5780
    %6296 = vmatprep.subr.bf16.mxu0 0
    %6297 = vmatpush2.bf16.msra.mxu0 %v5855
    %6298 = vmatprep.subr.bf16.mxu0 0
    %6299 = vmatpush2.bf16.msra.mxu0 %v5850
    %6300 = vmatprep.subr.bf16.mxu0 0
    %6301 = vmatpush2.bf16.msra.mxu0 %v5845
    %6302 = vmatprep.subr.bf16.mxu0 0
    %6303 = vmatpush2.bf16.msra.mxu0 %v5840
    %6304 = vmatprep.subr.bf16.mxu0 0
    %6305 = vmatpush2.bf16.msra.mxu0 %v5835
    %6306 = vmatprep.subr.bf16.mxu0 0
    %6307 = vmatpush2.bf16.msra.mxu0 %v5830
    %6308 = vmatprep.subr.bf16.mxu0 0
    %6309 = vmatpush2.bf16.msra.mxu0 %v5825
    %6310 = vmatprep.subr.bf16.mxu0 0
    %6311 = vmatpush2.bf16.msra.mxu0 %v5820
    %6312 = vmatprep.mubr.bf16.mxu0 %v5434
    %6313 = vmatmul.mubr.bf16.gmra.mxu0 %v5433
    %v6314 = vpop.f32.mrf.mxu0
    %v6315 = vadd.f32 %v5466, %v6314
    %v6316 = vpop.f32.mrf.mxu0
    %v6317 = vpop.f32.mrf.mxu0
    %v6318 = vadd.f32 %v5466, %v6317
    %v6319 = vpop.f32.mrf.mxu0
    %6320 = vmatprep.mubr.bf16.mxu0 %v5437
    %6321 = vmatmul.mubr.bf16.gmra.mxu0 %v5436
    %v6322 = vpop.f32.mrf.mxu0
    %v6323 = vadd.f32 %v5466, %v6322
    %v6324 = vpop.f32.mrf.mxu0
    %v6325 = vpop.f32.mrf.mxu0
    %v6326 = vadd.f32 %v5466, %v6325
    %v6327 = vpop.f32.mrf.mxu0
    %6328 = vmatprep.mubr.bf16.mxu0 %v5440
    %6329 = vmatmul.mubr.bf16.gmra.mxu0 %v5439
    %v6330 = vpop.f32.mrf.mxu0
    %v6331 = vadd.f32 %v5466, %v6330
    %v6332 = vpop.f32.mrf.mxu0
    %v6333 = vpop.f32.mrf.mxu0
    %v6334 = vadd.f32 %v5466, %v6333
    %v6335 = vpop.f32.mrf.mxu0
    %6336 = vmatprep.mubr.bf16.mxu0 %v5443
    %6337 = vmatmul.mubr.bf16.gmra.mxu0 %v5442
    %v6338 = vpop.f32.mrf.mxu0
    %v6339 = vadd.f32 %v5466, %v6338
    %v6340 = vpop.f32.mrf.mxu0
    %v6341 = vpop.f32.mrf.mxu0
    %v6342 = vadd.f32 %v5466, %v6341
    %v6343 = vpop.f32.mrf.mxu0
    %6344 = vdwg.mxu0
    %6345 = vmatprep.subr.bf16.mxu0 0
    %6346 = vmatpush1.bf16.msra.mxu0 0
    %6347 = vmatprep.subr.bf16.mxu0 0
    %6348 = vmatpush1.bf16.msra.mxu0 0
    %6349 = vmatprep.subr.bf16.mxu0 0
    %6350 = vmatpush1.bf16.msra.mxu0 0
    %6351 = vmatprep.subr.bf16.mxu0 0
    %6352 = vmatpush1.bf16.msra.mxu0 0
    %6353 = vmatprep.subr.bf16.mxu0 0
    %6354 = vmatpush1.bf16.msra.mxu0 0
    %6355 = vmatprep.subr.bf16.mxu0 0
    %6356 = vmatpush1.bf16.msra.mxu0 %v5986
    %6357 = vmatprep.subr.bf16.mxu0 0
    %6358 = vmatpush1.bf16.msra.mxu0 %v5865
    %6359 = vmatprep.subr.bf16.mxu0 0
    %6360 = vmatpush1.bf16.msra.mxu0 %v5860
    %6361 = vmatprep.subr.bf16.mxu0 0
    %6362 = vmatpush2.bf16.msra.mxu0 0
    %6363 = vmatprep.subr.bf16.mxu0 0
    %6364 = vmatpush2.bf16.msra.mxu0 0
    %6365 = vmatprep.subr.bf16.mxu0 0
    %6366 = vmatpush2.bf16.msra.mxu0 0
    %6367 = vmatprep.subr.bf16.mxu0 0
    %6368 = vmatpush2.bf16.msra.mxu0 0
    %6369 = vmatprep.subr.bf16.mxu0 0
    %6370 = vmatpush2.bf16.msra.mxu0 0
    %6371 = vmatprep.subr.bf16.mxu0 0
    %6372 = vmatpush2.bf16.msra.mxu0 0
    %6373 = vmatprep.subr.bf16.mxu0 0
    %6374 = vmatpush2.bf16.msra.mxu0 0
    %6375 = vmatprep.subr.bf16.mxu0 0
    %6376 = vmatpush2.bf16.msra.mxu0 0
    %6377 = vmatprep.mubr.bf16.mxu0 0
    %6378 = vmatmul.mubr.bf16.gmra.mxu0 %v5962
    %v6379 = vpop.f32.mrf.mxu0
    %v6380 = vadd.f32 %v6315, %v6379
    %v6381 = vpop.f32.mrf.mxu0
    %v6382 = vpop.f32.mrf.mxu0
    %v6383 = vadd.f32 %v6318, %v6382
    %v6384 = vpop.f32.mrf.mxu0
    %6385 = vmatprep.mubr.bf16.mxu0 0
    %6386 = vmatmul.mubr.bf16.gmra.mxu0 %v5965
    %v6387 = vpop.f32.mrf.mxu0
    %v6388 = vadd.f32 %v6323, %v6387
    %v6389 = vpop.f32.mrf.mxu0
    %v6390 = vpop.f32.mrf.mxu0
    %v6391 = vadd.f32 %v6326, %v6390
    %v6392 = vpop.f32.mrf.mxu0
    %6393 = vmatprep.mubr.bf16.mxu0 0
    %6394 = vmatmul.mubr.bf16.gmra.mxu0 %v5968
    %v6395 = vpop.f32.mrf.mxu0
    %v6396 = vadd.f32 %v6331, %v6395
    %v6397 = vpop.f32.mrf.mxu0
    %v6398 = vpop.f32.mrf.mxu0
    %v6399 = vadd.f32 %v6334, %v6398
    %v6400 = vpop.f32.mrf.mxu0
    %6401 = vmatprep.mubr.bf16.mxu0 0
    %6402 = vmatmul.mubr.bf16.gmra.mxu0 %v5971
    %v6403 = vpop.f32.mrf.mxu0
    %v6404 = vadd.f32 %v6339, %v6403
    %v6405 = vpop.f32.mrf.mxu0
    %v6406 = vpop.f32.mrf.mxu0
    %v6407 = vadd.f32 %v6342, %v6406
    %v6408 = vpop.f32.mrf.mxu0
    %6409 = vdwg.mxu0
    %v6410 = vmax.f32 %v6096, 0.0
    %v6411 = vmax.f32 %v6098, 0.0
    %v6412 = vmax.f32 %v6242, 0.0
    %v6413 = vmax.f32 %v6244, 0.0
    %v6414 = vmax.f32 %v6100, 0.0
    %v6415 = vmax.f32 %v6102, 0.0
    %v6416 = vmax.f32 %v6246, 0.0
    %v6417 = vmax.f32 %v6248, 0.0
    %v6418 = vmax.f32 %v6106, 0.0
    %v6419 = vmax.f32 %v6108, 0.0
    %v6420 = vmax.f32 %v6252, 0.0
    %v6421 = vmax.f32 %v6254, 0.0
    %v6422 = vmax.f32 %v6110, 0.0
    %v6423 = vmax.f32 %v6112, 0.0
    %v6424 = vmax.f32 %v6256, 0.0
    %v6425 = vmax.f32 %v6258, 0.0
    %v6426 = vmax.f32 %v6116, 0.0
    %v6427 = vmax.f32 %v6118, 0.0
    %v6428 = vmax.f32 %v6262, 0.0
    %v6429 = vmax.f32 %v6264, 0.0
    %v6430 = vmax.f32 %v6120, 0.0
    %v6431 = vmax.f32 %v6122, 0.0
    %v6432 = vmax.f32 %v6266, 0.0
    %v6433 = vmax.f32 %v6268, 0.0
    %v6434 = vmax.f32 %v6126, 0.0
    %v6435 = vmax.f32 %v6128, 0.0
    %v6436 = vmax.f32 %v6272, 0.0
    %v6437 = vmax.f32 %v6274, 0.0
    %v6438 = vmax.f32 %v6130, 0.0
    %v6439 = vmax.f32 %v6132, 0.0
    %v6440 = vmax.f32 %v6276, 0.0
    %v6441 = vmax.f32 %v6278, 0.0
    %v6442 = vld [vmem:[#allocation7] sm:$0xf]
    %v6443 = vld [vmem:[#allocation7 + $0x4] sm:$0xf]
    %v6444 = vld [vmem:[#allocation7 + $0x8] sm:$0xf]
    %v6445 = vld [vmem:[#allocation7 + $0xc] sm:$0xf]
    %v6446 = vld [vmem:[#allocation7 + $0x10] sm:$0xf]
    %v6447 = vld [vmem:[#allocation7 + $0x14] sm:$0xf]
    %v6448 = vld [vmem:[#allocation7 + $0x18] sm:$0xf]
    %v6449 = vld [vmem:[#allocation7 + $0x1c] sm:$0xf]
    %v6450 = vld [vmem:[#allocation7 + $0x20] sm:$0xf]
    %v6451 = vld [vmem:[#allocation7 + $0x24] sm:$0xf]
    %v6452 = vld [vmem:[#allocation7 + $0x28] sm:$0xf]
    %v6453 = vld [vmem:[#allocation7 + $0x2c] sm:$0xf]
    %v6454 = vld [vmem:[#allocation7 + $0x30] sm:$0xf]
    %v6455 = vld [vmem:[#allocation7 + $0x34] sm:$0xf]
    %v6456 = vld [vmem:[#allocation7 + $0x38] sm:$0xf]
    %v6457 = vld [vmem:[#allocation7 + $0x3c] sm:$0xf]
    %v6458 = vld [vmem:[#allocation7 + $0x40] sm:$0xf]
    %v6459 = vld [vmem:[#allocation7 + $0x44] sm:$0xf]
    %v6460 = vld [vmem:[#allocation7 + $0x48] sm:$0xf]
    %v6461 = vld [vmem:[#allocation7 + $0x4c] sm:$0xf]
    %v6462 = vld [vmem:[#allocation7 + $0x50] sm:$0xf]
    %v6463 = vld [vmem:[#allocation7 + $0x54] sm:$0xf]
    %v6464 = vld [vmem:[#allocation7 + $0x58] sm:$0xf]
    %v6465 = vld [vmem:[#allocation7 + $0x5c] sm:$0xf]
    %v6466 = vld [vmem:[#allocation7 + $0x60] sm:$0xf]
    %v6467 = vld [vmem:[#allocation7 + $0x64] sm:$0xf]
    %v6468 = vld [vmem:[#allocation7 + $0x68] sm:$0xf]
    %v6469 = vld [vmem:[#allocation7 + $0x6c] sm:$0xf]
    %v6470 = vld [vmem:[#allocation7 + $0x70] sm:$0xf]
    %v6471 = vld [vmem:[#allocation7 + $0x74] sm:$0xf]
    %v6472 = vld [vmem:[#allocation7 + $0x78] sm:$0xf]
    %v6473 = vld [vmem:[#allocation7 + $0x7c] sm:$0xf]
    %v6474 = vld [vmem:[#allocation7 + $0x80] sm:$0xf]
    %v6475 = vld [vmem:[#allocation7 + $0x84] sm:$0xf]
    %v6476 = vld [vmem:[#allocation7 + $0x88] sm:$0xf]
    %v6477 = vld [vmem:[#allocation7 + $0x8c] sm:$0xf]
    %v6478 = vld [vmem:[#allocation7 + $0x90] sm:$0xf]
    %v6479 = vld [vmem:[#allocation7 + $0x94] sm:$0xf]
    %v6480 = vld [vmem:[#allocation7 + $0x98] sm:$0xf]
    %v6481 = vld [vmem:[#allocation7 + $0x9c] sm:$0xf]
    %v6482 = vld [vmem:[#allocation7 + $0xa0] sm:$0xf]
    %v6483 = vld [vmem:[#allocation7 + $0xa4] sm:$0xf]
    %v6484 = vld [vmem:[#allocation7 + $0xa8] sm:$0xf]
    %v6485 = vld [vmem:[#allocation7 + $0xac] sm:$0xf]
    %v6486 = vld [vmem:[#allocation7 + $0xb0] sm:$0xf]
    %v6487 = vld [vmem:[#allocation7 + $0xb4] sm:$0xf]
    %v6488 = vld [vmem:[#allocation7 + $0xb8] sm:$0xf]
    %v6489 = vld [vmem:[#allocation7 + $0xbc] sm:$0xf]
    %v6490 = vld [vmem:[#allocation7 + $0xc0] sm:$0xf]
    %v6491 = vld [vmem:[#allocation7 + $0xc4] sm:$0xf]
    %v6492 = vld [vmem:[#allocation7 + $0xc8] sm:$0xf]
    %v6493 = vld [vmem:[#allocation7 + $0xcc] sm:$0xf]
    %v6494 = vld [vmem:[#allocation7 + $0xd0] sm:$0xf]
    %v6495 = vld [vmem:[#allocation7 + $0xd4] sm:$0xf]
    %v6496 = vld [vmem:[#allocation7 + $0xd8] sm:$0xf]
    %v6497 = vld [vmem:[#allocation7 + $0xdc] sm:$0xf]
    %v6498 = vld [vmem:[#allocation7 + $0xe0] sm:$0xf]
    %v6499 = vld [vmem:[#allocation7 + $0xe4] sm:$0xf]
    %v6500 = vld [vmem:[#allocation7 + $0xe8] sm:$0xf]
    %v6501 = vld [vmem:[#allocation7 + $0xec] sm:$0xf]
    %v6502 = vld [vmem:[#allocation7 + $0xf0] sm:$0xf]
    %v6503 = vld [vmem:[#allocation7 + $0xf4] sm:$0xf]
    %v6504 = vld [vmem:[#allocation7 + $0xf8] sm:$0xf]
    %v6505 = vld [vmem:[#allocation7 + $0xfc] sm:$0xf]
    %v6506 = vpack.c.bf16 %v6414, %v6410
    %v6507 = vpack.c.bf16 %v6415, %v6411
    %v6508 = vpack.c.bf16 %v6416, %v6412
    %v6509 = vpack.c.bf16 %v6417, %v6413
    %v6510 = vpack.c.bf16 %v6422, %v6418
    %v6511 = vpack.c.bf16 %v6423, %v6419
    %v6512 = vpack.c.bf16 %v6424, %v6420
    %v6513 = vpack.c.bf16 %v6425, %v6421
    %v6514 = vpack.c.bf16 %v6430, %v6426
    %v6515 = vpack.c.bf16 %v6431, %v6427
    %v6516 = vpack.c.bf16 %v6432, %v6428
    %v6517 = vpack.c.bf16 %v6433, %v6429
    %v6518 = vpack.c.bf16 %v6438, %v6434
    %v6519 = vpack.c.bf16 %v6439, %v6435
    %v6520 = vpack.c.bf16 %v6440, %v6436
    %v6521 = vpack.c.bf16 %v6441, %v6437
    %v6522 = vld [vmem:[%s9 + $0x22] sm:$0x1]
    %v6524 = vlaneseq
    %v6525 = vshrl.u32 %v6524, 7
    %v6526 = vsub.s32 0, %v6525
    %v6527 = vrot.slane %v6522, %v6526
    %v6593 = vunpack.c.l.b16 %v6442
    %v6594 = vunpack.c.l.b16 %v6443
    %v6595 = vunpack.c.l.b16 %v6444
    %v6596 = vunpack.c.l.b16 %v6445
    %v6597 = vunpack.c.l.b16 %v6446
    %v6598 = vunpack.c.l.b16 %v6447
    %v6599 = vunpack.c.l.b16 %v6448
    %v6600 = vunpack.c.l.b16 %v6449
    %v6601 = vunpack.c.l.b16 %v6450
    %v6602 = vunpack.c.l.b16 %v6451
    %v6603 = vunpack.c.l.b16 %v6452
    %v6604 = vunpack.c.l.b16 %v6453
    %v6605 = vunpack.c.l.b16 %v6454
    %v6606 = vunpack.c.l.b16 %v6455
    %v6607 = vunpack.c.l.b16 %v6456
    %v6608 = vunpack.c.l.b16 %v6457
    %v6609 = vunpack.c.l.b16 %v6458
    %v6610 = vunpack.c.l.b16 %v6459
    %v6611 = vunpack.c.l.b16 %v6460
    %v6612 = vunpack.c.l.b16 %v6461
    %v6613 = vunpack.c.l.b16 %v6462
    %v6614 = vunpack.c.l.b16 %v6463
    %v6615 = vunpack.c.l.b16 %v6464
    %v6616 = vunpack.c.l.b16 %v6465
    %v6617 = vunpack.c.l.b16 %v6466
    %v6618 = vunpack.c.l.b16 %v6467
    %v6619 = vunpack.c.l.b16 %v6468
    %v6620 = vunpack.c.l.b16 %v6469
    %v6621 = vunpack.c.l.b16 %v6470
    %v6622 = vunpack.c.l.b16 %v6471
    %v6623 = vunpack.c.l.b16 %v6472
    %v6624 = vunpack.c.l.b16 %v6473
    %v6625 = vunpack.c.l.b16 %v6474
    %v6626 = vunpack.c.l.b16 %v6475
    %v6627 = vunpack.c.l.b16 %v6476
    %v6628 = vunpack.c.l.b16 %v6477
    %v6629 = vunpack.c.l.b16 %v6478
    %v6630 = vunpack.c.l.b16 %v6479
    %v6631 = vunpack.c.l.b16 %v6480
    %v6632 = vunpack.c.l.b16 %v6481
    %v6633 = vunpack.c.l.b16 %v6482
    %v6634 = vunpack.c.l.b16 %v6483
    %v6635 = vunpack.c.l.b16 %v6484
    %v6636 = vunpack.c.l.b16 %v6485
    %v6637 = vunpack.c.l.b16 %v6486
    %v6638 = vunpack.c.l.b16 %v6487
    %v6639 = vunpack.c.l.b16 %v6488
    %v6640 = vunpack.c.l.b16 %v6489
    %v6641 = vunpack.c.l.b16 %v6490
    %v6642 = vunpack.c.l.b16 %v6491
    %v6643 = vunpack.c.l.b16 %v6492
    %v6644 = vunpack.c.l.b16 %v6493
    %v6645 = vunpack.c.l.b16 %v6494
    %v6646 = vunpack.c.l.b16 %v6495
    %v6647 = vunpack.c.l.b16 %v6496
    %v6648 = vunpack.c.l.b16 %v6497
    %v6649 = vunpack.c.l.b16 %v6498
    %v6650 = vunpack.c.l.b16 %v6499
    %v6651 = vunpack.c.l.b16 %v6500
    %v6652 = vunpack.c.l.b16 %v6501
    %v6653 = vunpack.c.l.b16 %v6502
    %v6654 = vunpack.c.l.b16 %v6503
    %v6655 = vunpack.c.l.b16 %v6504
    %v6656 = vunpack.c.l.b16 %v6505
    %v6657 = vpack.c.b16 %v6594, %v6593
    %v6658 = vpack.c.b16 %v6596, %v6595
    %v6659 = vpack.c.b16 %v6598, %v6597
    %v6660 = vpack.c.b16 %v6600, %v6599
    %v6661 = vpack.c.b16 %v6602, %v6601
    %v6662 = vpack.c.b16 %v6604, %v6603
    %v6663 = vpack.c.b16 %v6606, %v6605
    %v6664 = vpack.c.b16 %v6608, %v6607
    %v6665 = vpack.c.b16 %v6610, %v6609
    %v6666 = vpack.c.b16 %v6612, %v6611
    %v6667 = vpack.c.b16 %v6614, %v6613
    %v6668 = vpack.c.b16 %v6616, %v6615
    %v6669 = vpack.c.b16 %v6618, %v6617
    %v6670 = vpack.c.b16 %v6620, %v6619
    %v6671 = vpack.c.b16 %v6622, %v6621
    %v6672 = vpack.c.b16 %v6624, %v6623
    %v6673 = vpack.c.b16 %v6626, %v6625
    %v6674 = vpack.c.b16 %v6628, %v6627
    %v6675 = vpack.c.b16 %v6630, %v6629
    %v6676 = vpack.c.b16 %v6632, %v6631
    %v6677 = vpack.c.b16 %v6634, %v6633
    %v6678 = vpack.c.b16 %v6636, %v6635
    %v6679 = vpack.c.b16 %v6638, %v6637
    %v6680 = vpack.c.b16 %v6640, %v6639
    %v6681 = vpack.c.b16 %v6642, %v6641
    %v6682 = vpack.c.b16 %v6644, %v6643
    %v6683 = vpack.c.b16 %v6646, %v6645
    %v6684 = vpack.c.b16 %v6648, %v6647
    %v6685 = vpack.c.b16 %v6650, %v6649
    %v6686 = vpack.c.b16 %v6652, %v6651
    %v6687 = vpack.c.b16 %v6654, %v6653
    %v6688 = vpack.c.b16 %v6656, %v6655
    %6721 = vmatprep.subr.bf16.mxu0 0
    %6722 = vmatpush1.bf16.msra.mxu0 %v6664
    %6723 = vmatprep.subr.bf16.mxu0 0
    %6724 = vmatpush1.bf16.msra.mxu0 %v6663
    %6725 = vmatprep.subr.bf16.mxu0 0
    %6726 = vmatpush1.bf16.msra.mxu0 %v6662
    %6727 = vmatprep.subr.bf16.mxu0 0
    %6728 = vmatpush1.bf16.msra.mxu0 %v6661
    %6729 = vmatprep.subr.bf16.mxu0 0
    %6730 = vmatpush1.bf16.msra.mxu0 %v6660
    %6731 = vmatprep.subr.bf16.mxu0 0
    %6732 = vmatpush1.bf16.msra.mxu0 %v6659
    %6733 = vmatprep.subr.bf16.mxu0 0
    %6734 = vmatpush1.bf16.msra.mxu0 %v6658
    %6735 = vmatprep.subr.bf16.mxu0 0
    %6736 = vmatpush1.bf16.msra.mxu0 %v6657
    %6737 = vmatprep.subr.bf16.mxu0 0
    %6738 = vmatpush2.bf16.msra.mxu0 %v6672
    %6739 = vmatprep.subr.bf16.mxu0 0
    %6740 = vmatpush2.bf16.msra.mxu0 %v6671
    %6741 = vmatprep.subr.bf16.mxu0 0
    %6742 = vmatpush2.bf16.msra.mxu0 %v6670
    %6743 = vmatprep.subr.bf16.mxu0 0
    %6744 = vmatpush2.bf16.msra.mxu0 %v6669
    %6745 = vmatprep.subr.bf16.mxu0 0
    %6746 = vmatpush2.bf16.msra.mxu0 %v6668
    %6747 = vmatprep.subr.bf16.mxu0 0
    %6748 = vmatpush2.bf16.msra.mxu0 %v6667
    %6749 = vmatprep.subr.bf16.mxu0 0
    %6750 = vmatpush2.bf16.msra.mxu0 %v6666
    %6751 = vmatprep.subr.bf16.mxu0 0
    %6752 = vmatpush2.bf16.msra.mxu0 %v6665
    %6753 = vmatprep.mubr.bf16.mxu0 %v6507
    %6754 = vmatmul.mubr.bf16.gmra.mxu0 %v6506
    %v6755 = vpop.f32.mrf.mxu0
    %v6756 = vadd.f32 %v6527, %v6755
    %v6757 = vpop.f32.mrf.mxu0
    %v6758 = vpop.f32.mrf.mxu0
    %v6759 = vadd.f32 %v6527, %v6758
    %v6760 = vpop.f32.mrf.mxu0
    %6761 = vmatprep.mubr.bf16.mxu0 %v6511
    %6762 = vmatmul.mubr.bf16.gmra.mxu0 %v6510
    %v6763 = vpop.f32.mrf.mxu0
    %v6764 = vadd.f32 %v6527, %v6763
    %v6765 = vpop.f32.mrf.mxu0
    %v6766 = vpop.f32.mrf.mxu0
    %v6767 = vadd.f32 %v6527, %v6766
    %v6768 = vpop.f32.mrf.mxu0
    %6769 = vmatprep.mubr.bf16.mxu0 %v6515
    %6770 = vmatmul.mubr.bf16.gmra.mxu0 %v6514
    %v6771 = vpop.f32.mrf.mxu0
    %v6772 = vadd.f32 %v6527, %v6771
    %v6773 = vpop.f32.mrf.mxu0
    %v6774 = vpop.f32.mrf.mxu0
    %v6775 = vadd.f32 %v6527, %v6774
    %v6776 = vpop.f32.mrf.mxu0
    %6777 = vmatprep.mubr.bf16.mxu0 %v6519
    %6778 = vmatmul.mubr.bf16.gmra.mxu0 %v6518
    %v6779 = vpop.f32.mrf.mxu0
    %v6780 = vadd.f32 %v6527, %v6779
    %v6781 = vpop.f32.mrf.mxu0
    %v6782 = vpop.f32.mrf.mxu0
    %v6783 = vadd.f32 %v6527, %v6782
    %v6784 = vpop.f32.mrf.mxu0
    %6785 = vdwg.mxu0
    %6786 = vmatprep.subr.bf16.mxu0 0
    %6787 = vmatpush1.bf16.msra.mxu0 %v6680
    %6788 = vmatprep.subr.bf16.mxu0 0
    %6789 = vmatpush1.bf16.msra.mxu0 %v6679
    %6790 = vmatprep.subr.bf16.mxu0 0
    %6791 = vmatpush1.bf16.msra.mxu0 %v6678
    %6792 = vmatprep.subr.bf16.mxu0 0
    %6793 = vmatpush1.bf16.msra.mxu0 %v6677
    %6794 = vmatprep.subr.bf16.mxu0 0
    %6795 = vmatpush1.bf16.msra.mxu0 %v6676
    %6796 = vmatprep.subr.bf16.mxu0 0
    %6797 = vmatpush1.bf16.msra.mxu0 %v6675
    %6798 = vmatprep.subr.bf16.mxu0 0
    %6799 = vmatpush1.bf16.msra.mxu0 %v6674
    %6800 = vmatprep.subr.bf16.mxu0 0
    %6801 = vmatpush1.bf16.msra.mxu0 %v6673
    %6802 = vmatprep.subr.bf16.mxu0 0
    %6803 = vmatpush2.bf16.msra.mxu0 %v6688
    %6804 = vmatprep.subr.bf16.mxu0 0
    %6805 = vmatpush2.bf16.msra.mxu0 %v6687
    %6806 = vmatprep.subr.bf16.mxu0 0
    %6807 = vmatpush2.bf16.msra.mxu0 %v6686
    %6808 = vmatprep.subr.bf16.mxu0 0
    %6809 = vmatpush2.bf16.msra.mxu0 %v6685
    %6810 = vmatprep.subr.bf16.mxu0 0
    %6811 = vmatpush2.bf16.msra.mxu0 %v6684
    %6812 = vmatprep.subr.bf16.mxu0 0
    %6813 = vmatpush2.bf16.msra.mxu0 %v6683
    %6814 = vmatprep.subr.bf16.mxu0 0
    %6815 = vmatpush2.bf16.msra.mxu0 %v6682
    %6816 = vmatprep.subr.bf16.mxu0 0
    %6817 = vmatpush2.bf16.msra.mxu0 %v6681
    %6818 = vmatprep.mubr.bf16.mxu0 %v6509
    %6819 = vmatmul.mubr.bf16.gmra.mxu0 %v6508
    %v6820 = vpop.f32.mrf.mxu0
    %v6821 = vadd.f32 %v6756, %v6820
    %v6822 = vpop.f32.mrf.mxu0
    %v6823 = vpop.f32.mrf.mxu0
    %v6824 = vadd.f32 %v6759, %v6823
    %v6825 = vpop.f32.mrf.mxu0
    %6826 = vmatprep.mubr.bf16.mxu0 %v6513
    %6827 = vmatmul.mubr.bf16.gmra.mxu0 %v6512
    %v6828 = vpop.f32.mrf.mxu0
    %v6829 = vadd.f32 %v6764, %v6828
    %v6830 = vpop.f32.mrf.mxu0
    %v6831 = vpop.f32.mrf.mxu0
    %v6832 = vadd.f32 %v6767, %v6831
    %v6833 = vpop.f32.mrf.mxu0
    %6834 = vmatprep.mubr.bf16.mxu0 %v6517
    %6835 = vmatmul.mubr.bf16.gmra.mxu0 %v6516
    %v6836 = vpop.f32.mrf.mxu0
    %v6837 = vadd.f32 %v6772, %v6836
    %v6838 = vpop.f32.mrf.mxu0
    %v6839 = vpop.f32.mrf.mxu0
    %v6840 = vadd.f32 %v6775, %v6839
    %v6841 = vpop.f32.mrf.mxu0
    %6842 = vmatprep.mubr.bf16.mxu0 %v6521
    %6843 = vmatmul.mubr.bf16.gmra.mxu0 %v6520
    %v6844 = vpop.f32.mrf.mxu0
    %v6845 = vadd.f32 %v6780, %v6844
    %v6846 = vpop.f32.mrf.mxu0
    %v6847 = vpop.f32.mrf.mxu0
    %v6848 = vadd.f32 %v6783, %v6847
    %v6849 = vpop.f32.mrf.mxu0
    %6850 = vdwg.mxu0
    %6851 = vst [vmem:[%s10] sm:$0xff] %v6821
    %6852 = vst [vmem:[%s10 + $0x10] sm:$0xff] %v6824
    %6853 = vst [vmem:[%s10 + $0x20] sm:$0xff] %v6829
    %6854 = vst [vmem:[%s10 + $0x30] sm:$0xff] %v6832
    %6855 = vst [vmem:[%s10 + $0x40] sm:$0xff] %v6837
    %6856 = vst [vmem:[%s10 + $0x50] sm:$0xff] %v6840
    %6857 = vst [vmem:[%s10 + $0x60] sm:$0xff] %v6845
    %6858 = vst [vmem:[%s10 + $0x70] sm:$0xff] %v6848
    %6859 = vst [vmem:[%s10 + $0x8] sm:$0xff] %v6380
    %6860 = vst [vmem:[%s10 + $0x18] sm:$0xff] %v6383
    %6861 = vst [vmem:[%s10 + $0x28] sm:$0xff] %v6388
    %6862 = vst [vmem:[%s10 + $0x38] sm:$0xff] %v6391
    %6863 = vst [vmem:[%s10 + $0x48] sm:$0xff] %v6396
    %6864 = vst [vmem:[%s10 + $0x58] sm:$0xff] %v6399
    %6865 = vst [vmem:[%s10 + $0x68] sm:$0xff] %v6404
    %6866 = vst [vmem:[%s10 + $0x78] sm:$0xff] %v6407
    // Predicated region
    $region58: #{forward.1} parent=1 // pred_check
      _
    $region59: #{forward.1} parent=1 // pred_check_branch
      %6868 = sbr.rel (0) target = $region61
    $region60: #{forward.1} parent=1 // pred_region
      _
    $region61: #{forward.1} parent=1 // pred_fallthru
      _
    // Predicated region
    $region62: #{forward.1} parent=1 // pred_check
      _
    $region63: #{forward.1} parent=1 // pred_check_branch
      %6870 = sbr.rel (0) target = $region65
    $region64: #{forward.1} parent=1 // pred_region
      _
    $region65: #{forward.1} parent=1 // pred_fallthru
      _
    %6871 = vsyncpa [#allocation3], 1
    %6872 = vsyncpa [#allocation5], 1
    %6873 = vsyncpa [#allocation8], 1

</llo_original>
